<compile_context>
chip_gen: v7x
topology: tpu7x:2x2x1
jax: 0.10.0
libtpu: 0.0.40
codegen_flags: <defaults>
</compile_context>

<pallas_src>
import functools

import numpy as np
import jax
import jax.numpy as jnp
from jax.experimental import pallas as pl
from jax.experimental.pallas import tpu as pltpu

BN_EPS = 1e-5   # torch BatchNorm2d default
KSIZE = 3
STRIDE = 2


def conv_out_size(s):   # k=3, s=2, p=0
    return (s - KSIZE) // STRIDE + 1


def _round8(n):
    return -(-n // 8) * 8


# ------------------------------ fused kernel ------------------------------- #

def _ld(ref, info):
    """Static slice of a packed constant slab: info = (row_off, rows, cols)."""
    off, rows, cols = info
    return ref[off:off + rows, 0:cols]


def _fused_actor_kernel(x_ref, c1_ref, c2_ref, c3_ref, fc_ref, o_ref, *, meta):
    f32 = jnp.float32

    def conv_bn_relu(act, cref, m):
        # One stacked stride-2 row-select matmul covering all 3 kernel-row taps.
        rows = jnp.dot(_ld(cref, m["S"]), act, preferred_element_type=f32)   # [3P, K]
        # Three accumulated banded weight matmuls (one per kernel-row tap di).
        p_rows = m["P"]
        t = None
        for di in range(KSIZE):
            part = jnp.dot(rows[di * p_rows:(di + 1) * p_rows, :],
                           _ld(cref, m["w"][di]),
                           preferred_element_type=f32)                       # [P, Wo*F]
            t = part if t is None else t + part
        # Training-mode BatchNorm2d (biased var, one pass E[x^2]-mean^2); the
        # per-channel reduce and the broadcast-back are one fused matmul each.
        # Zero-padded rows of t contribute 0 to the sums; inv_n counts real rows.
        stats = jnp.concatenate([jnp.sum(t, axis=0, keepdims=True),
                                 jnp.sum(t * t, axis=0, keepdims=True)],
                                axis=0)                                      # [2, Wo*F]
        pc = jnp.dot(stats, _ld(cref, m["r"]),
                     preferred_element_type=f32) * m["inv_n"]                # [2, F]
        mean = pc[0:1, :]
        var = jnp.maximum(pc[1:2, :] - mean * mean, 0.0)   # clamp (review note)
        gb = _ld(cref, m["gb"])                                              # [2, F]
        scale = gb[0:1, :] * jax.lax.rsqrt(var + BN_EPS)
        shift = gb[1:2, :] - mean * scale
        ss = jnp.dot(jnp.concatenate([scale, shift], axis=0),
                     _ld(cref, m["rt"]), preferred_element_type=f32)         # [2, Wo*F]
        return jnp.maximum(t * ss[0:1, :] + ss[1:2, :], 0.0)

    a = x_ref[...]                                   # [B*H, W*Cin]
    a = conv_bn_relu(a, c1_ref, meta["conv1"])       # rows b*H1+ho (pad rows at end)
    a = conv_bn_relu(a, c2_ref, meta["conv2"])       # rows b*H2+ho
    a = conv_bn_relu(a, c3_ref, meta["conv3"])       # rows ho*8+b  (fc-friendly order)

    # flatten (torch NCHW order folded into fc1 weight blocks) + fc stack.
    # conv3's row order makes each fc1 block a contiguous, aligned row slice,
    # so no select matmuls are needed here.
    fm = meta["fc"]
    bsz, g = fm["B"], fm["G"]
    h = None
    for hh in range(fm["h3"]):
        part = jnp.dot(a[hh * g:hh * g + bsz, :], _ld(fc_ref, fm["w1"][hh]),
                       preferred_element_type=f32)
        h = part if h is None else h + part
    h = jnp.maximum(h + _ld(fc_ref, fm["b1"]), 0.0)
    h = jnp.maximum(jnp.dot(h, _ld(fc_ref, fm["w2"]), preferred_element_type=f32)
                    + _ld(fc_ref, fm["b2"]), 0.0)
    o_ref[...] = jnp.tanh(jnp.dot(h, _ld(fc_ref, fm["w3"]), preferred_element_type=f32)
                          + _ld(fc_ref, fm["b3"]))
    # TODO(synk): BatchNorm2d running_mean/var buffer updates (a training-time
    # side effect) are not materialized; they do not affect this forward output.


# ---------------------- host-side constant construction -------------------- #

def _fold_conv_weight(w, w_in, w_out):
    """[kh,kw,cin,cout] -> list of kh banded [w_in*cin, w_out*cout] matrices.
    Wd[di][wi*cin + c, wo*cout + f] = w[di, dj, c, f] where wi = 2*wo + dj."""
    w = np.asarray(w, np.float32)
    kh, kw, cin, cout = w.shape
    out = []
    for di in range(kh):
        m = np.zeros((w_in * cin, w_out * cout), np.float32)
        for dj in range(kw):
            for wo in range(w_out):
                wi = STRIDE * wo + dj
                m[wi * cin:(wi + 1) * cin, wo * cout:(wo + 1) * cout] = w[di, dj]
        out.append(m)
    return out


def _stacked_row_select(batch, h_in, rows_in, h_out, fc_order=False):
    """Stacked 0/1 stride-2 row-select matrix for all 3 kernel-row taps.

    Block di, output row p picks input row b*h_in + 2*ho + di.  Output rows are
    b-major (p = b*h_out + ho, padded to P = round8(batch*h_out)) except for
    the last conv (fc_order=True), which emits an 8-aligned group per output
    height (p = ho*round8(batch) + b) so flatten+fc1 needs no select matmuls.
    Returns (S of shape [3*P, rows_in], P).  Padding rows are all-zero."""
    g = _round8(batch)
    p_rows = h_out * g if fc_order else _round8(batch * h_out)
    s = np.zeros((KSIZE * p_rows, rows_in), np.float32)
    for di in range(KSIZE):
        for b in range(batch):
            for ho in range(h_out):
                p = ho * g + b if fc_order else b * h_out + ho
                s[di * p_rows + p, b * h_in + STRIDE * ho + di] = 1.0
    return s, p_rows


def _chan_reduce(w_out, cout):
    """R:[w_out*cout, cout] sums the w positions per channel; RT broadcasts back."""
    r = np.tile(np.eye(cout, dtype=np.float32), (w_out, 1))
    return r, np.ascontiguousarray(r.T)


def _fold_fc1_blocks(fc1_w, h3, w3, cout):
    """fc1 rows are in torch NCHW flatten order (f*h3*w3 + hh*w3 + wo).  Return
    h3 blocks of [w3*cout, n] matching the kernel's conv3 output layout."""
    fw = np.asarray(fc1_w, np.float32)
    n = fw.shape[1]
    fw = fw.reshape(cout, h3, w3, n).transpose(1, 2, 0, 3).reshape(h3, w3 * cout, n)
    return [fw[hh] for hh in range(h3)]


def _pack_blocks(blocks):
    """Pack named 2-D f32 blocks row-wise into one lane-dense slab (one DMA).
    Every block starts at an 8-aligned row offset.
    Returns (slab, {name: (row_off, rows, cols)})."""
    width = max(b.shape[1] for _, b in blocks)
    chunks, info, off = [], {}, 0
    for name, blk in blocks:
        blk = np.asarray(blk, np.float32)
        rows8 = _round8(blk.shape[0])
        padded = np.zeros((rows8, width), np.float32)
        padded[:blk.shape[0], :blk.shape[1]] = blk
        chunks.append(padded)
        info[name] = (off, blk.shape[0], blk.shape[1])
        off += rows8
    return jnp.asarray(np.concatenate(chunks, axis=0)), info


def prepare_actor_params(params, batch, c_in, h, w):
    """One-time host-side folding + packing into 4 lane-dense constant slabs."""
    del c_in  # implied by conv1_w
    slabs, meta = [], {}
    hi, wi = h, w
    rows_in = batch * h
    for i in (1, 2, 3):
        cw = np.asarray(params[f"conv{i}_w"], np.float32)
        cout = cw.shape[-1]
        ho, wo = conv_out_size(hi), conv_out_size(wi)
        s_big, p_rows = _stacked_row_select(batch, hi, rows_in, ho, fc_order=(i == 3))
        w_blocks = _fold_conv_weight(cw, wi, wo)
        r, rt = _chan_reduce(wo, cout)
        gb = np.stack([np.asarray(params[f"bn{i}_g"], np.float32),
                       np.asarray(params[f"bn{i}_b"], np.float32)], axis=0)
        named = [("S", s_big)]
        named += [(f"w{di}", w_blocks[di]) for di in range(KSIZE)]
        named += [("r", r), ("rt", rt), ("gb", gb)]
        slab, info = _pack_blocks(named)
        slabs.append(slab)
        meta[f"conv{i}"] = {
            "S": info["S"],
            "w": [info[f"w{di}"] for di in range(KSIZE)],
            "r": info["r"], "rt": info["rt"], "gb": info["gb"],
            "P": p_rows,
            "inv_n": 1.0 / float(batch * ho * wo),
        }
        hi, wi, rows_in = ho, wo, p_rows
    h3, w3 = hi, wi
    c3 = np.asarray(params["conv3_w"], np.float32).shape[-1]
    f1_blocks = _fold_fc1_blocks(params["fc1_w"], h3, w3, c3)
    named = [(f"w1_{hh}", f1_blocks[hh]) for hh in range(h3)]
    named += [("b1", np.asarray(params["fc1_b"], np.float32).reshape(1, -1)),
              ("w2", np.asarray(params["fc2_w"], np.float32)),
              ("b2", np.asarray(params["fc2_b"], np.float32).reshape(1, -1)),
              ("w3", np.asarray(params["fc3_w"], np.float32)),
              ("b3", np.asarray(params["fc3_b"], np.float32).reshape(1, -1))]
    slab, info = _pack_blocks(named)
    slabs.append(slab)
    meta["fc"] = {
        "w1": [info[f"w1_{hh}"] for hh in range(h3)],
        "b1": info["b1"], "w2": info["w2"], "b2": info["b2"],
        "w3": info["w3"], "b3": info["b3"],
        "B": batch, "G": _round8(batch), "h3": h3,
    }
    return tuple(slabs), meta


# ------------------------------ forward wrapper ----------------------------- #

def actor_cnn_forward(x_nchw, slabs, meta):
    b, c_in, h, w = x_nchw.shape
    num_actions = meta["fc"]["w3"][2]

    # Only XLA-side data prep: [B,C,H,W] -> lane-dense 2-D layout [B*H, W*Cin].
    x2d = jnp.transpose(x_nchw, (0, 2, 3, 1)).reshape(b * h, w * c_in)

    # Advisory cost hint so XLA schedules surrounding ops around the call.
    flops = 0
    for i in (1, 2, 3):
        m = meta[f"conv{i}"]
        _, s_rows, s_cols = m["S"]
        _, kk, nn = m["w"][0]
        cc = m["r"][2]
        flops += 2 * s_rows * s_cols * kk             # stacked select matmul
        flops += 2 * KSIZE * m["P"] * kk * nn         # banded weight matmuls
        flops += 2 * 2 * nn * cc + 2 * 2 * cc * nn    # fused BN reduce + broadcast
    for info in meta["fc"]["w1"]:
        flops += 2 * b * info[1] * info[2]
    for name in ("w2", "w3"):
        flops += 2 * b * meta["fc"][name][1] * meta["fc"][name][2]
    bytes_accessed = (x2d.size * x2d.dtype.itemsize
                      + sum(int(np.prod(s.shape)) * s.dtype.itemsize for s in slabs)
                      + b * num_actions * 4)

    kernel = functools.partial(_fused_actor_kernel, meta=meta)
    vmem = lambda: pl.BlockSpec(memory_space=pltpu.MemorySpace.VMEM)
    return pl.pallas_call(
        kernel,
        out_shape=jax.ShapeDtypeStruct((b, num_actions), jnp.float32),
        in_specs=[vmem() for _ in range(1 + len(slabs))],
        out_specs=vmem(),
        cost_estimate=pl.CostEstimate(flops=int(flops),
                                      transcendentals=int(b * num_actions + 64),
                                      bytes_accessed=int(bytes_accessed)),
    )(x2d, *slabs)


# --------------------------- pure-JAX reference ----------------------------- #

def _reference_forward(x_nchw, params):
    hp = jax.lax.Precision.HIGHEST
    x = jnp.transpose(x_nchw, (0, 2, 3, 1)).astype(jnp.float32)
    for i in (1, 2, 3):
        y = jax.lax.conv_general_dilated(
            x, params[f"conv{i}_w"], window_strides=(STRIDE, STRIDE), padding="VALID",
            dimension_numbers=("NHWC", "HWIO", "NHWC"), precision=hp)
        mean = jnp.mean(y, axis=(0, 1, 2), keepdims=True)
        var = jnp.mean(jnp.square(y - mean), axis=(0, 1, 2), keepdims=True)
        y = (y - mean) * jax.lax.rsqrt(var + BN_EPS)
        y = y * params[f"bn{i}_g"] + params[f"bn{i}_b"]
        x = jnp.maximum(y, 0.0)
    feat = jnp.transpose(x, (0, 3, 1, 2)).reshape(x.shape[0], -1)
    h1 = jnp.maximum(jnp.dot(feat, params["fc1_w"], precision=hp) + params["fc1_b"], 0.0)
    h2 = jnp.maximum(jnp.dot(h1, params["fc2_w"], precision=hp) + params["fc2_b"], 0.0)
    return jnp.tanh(jnp.dot(h2, params["fc3_w"], precision=hp) + params["fc3_b"])


# ------------------------------ params / main ------------------------------- #

def xavier_uniform(key, fan_in, fan_out, shape):
    limit = (6.0 / (fan_in + fan_out)) ** 0.5
    return jax.random.uniform(key, shape, jnp.float32, -limit, limit)


def init_params(key, c_in, h, w, num_actions):
    conv_defs = [(c_in, 16), (16, 16), (16, 16)]     # k=3, s=2, p=0
    s_h, s_w = h, w
    for _ in range(3):
        s_h, s_w = conv_out_size(s_h), conv_out_size(s_w)
    flat = s_h * s_w * 16
    fc_defs = [(flat, 256), (256, 256), (256, num_actions)]

    params = {}
    keys = jax.random.split(key, 6)
    ki = 0
    for i, (cin, cout) in enumerate(conv_defs, start=1):
        params[f"conv{i}_w"] = xavier_uniform(keys[ki], cin * 9, cout * 9,
                                              (3, 3, cin, cout)); ki += 1
        # Conv bias omitted on purpose: cancelled exactly by training-mode BN.
        params[f"bn{i}_g"] = jnp.ones((cout,), jnp.float32)
        params[f"bn{i}_b"] = jnp.zeros((cout,), jnp.float32)
    for i, (fin, fout) in enumerate(fc_defs, start=1):
        params[f"fc{i}_w"] = xavier_uniform(keys[ki], fin, fout, (fin, fout)); ki += 1
        params[f"fc{i}_b"] = jnp.zeros((fout,), jnp.float32)   # constant_(bias, 0)
    return params


if __name__ == "__main__":
    key = jax.random.PRNGKey(0)
    k_x, k_p = jax.random.split(key)

    batch = 2
    num_channel, num_stack = 2, 2          # conv1 in-channels = 4
    h = w = 32                             # 32 -> 15 -> 7 -> 3  => flat = 3*3*16 = 144
    num_actions = 4
    c_in = num_channel * num_stack

    x = jax.random.normal(k_x, (batch, c_in, h, w), dtype=jnp.float32)
    params = init_params(k_p, c_in, h, w, num_actions)
    slabs, meta = prepare_actor_params(params, batch, c_in, h, w)   # one-time folding

    fwd = jax.jit(functools.partial(actor_cnn_forward, meta=meta))
    out = jax.block_until_ready(fwd(x, slabs))

    assert out.shape == (batch, num_actions)
    assert bool(jnp.all(jnp.isfinite(out)))

    ref = jax.block_until_ready(jax.jit(_reference_forward)(x, params))
    max_diff = float(jnp.max(jnp.abs(out - ref)))
    assert bool(jnp.allclose(out, ref, atol=5e-3, rtol=5e-3)), f"max abs diff {max_diff}"

    print("KERNEL_OK")
</pallas_src>

<mosaic_0001>
module attributes {stable_mosaic.version = 11 : i64} {
  func.func @_fused_actor_kernel(%arg0: memref<64x128xf32, #tpu.memory_space<vmem>>, %arg1: memref<744x240xf32, #tpu.memory_space<vmem>>, %arg2: memref<904x112xf32, #tpu.memory_space<vmem>>, %arg3: memref<480x48xf32, #tpu.memory_space<vmem>>, %arg4: memref<680x256xf32, #tpu.memory_space<vmem>>, %arg5: memref<2x4xf32, #tpu.memory_space<vmem>>) attributes {dimension_semantics = [], scalar_prefetch = 0 : i64, scratch_operands = 0 : i64, tpu.core_type = #tpu.core_type<tc>} {
    %c0 = arith.constant 0 : index
    %c0_0 = arith.constant 0 : index
    %0 = vector.load %arg0[%c0, %c0_0] : memref<64x128xf32, #tpu.memory_space<vmem>>, vector<64x128xf32>
    %c0_1 = arith.constant 0 : index
    %c0_2 = arith.constant 0 : index
    %1 = vector.load %arg1[%c0_1, %c0_2] : memref<744x240xf32, #tpu.memory_space<vmem>>, vector<96x64xf32>
    %cst = arith.constant dense<0.000000e+00> : vector<96x128xf32>
    %2 = tpu.matmul %1, %0, %cst {dimension_numbers = #tpu.dot_dimension_numbers<[1], [0], [0], [1], [0, 0, 1, 1], [], []>} : vector<96x64xf32>, vector<64x128xf32>, vector<96x128xf32> -> vector<96x128xf32>
    %3 = vector.extract_strided_slice %2 {offsets = [0, 0], sizes = [32, 128], strides = [1, 1]} : vector<96x128xf32> to vector<32x128xf32>
    %c96 = arith.constant 96 : index
    %c0_3 = arith.constant 0 : index
    %4 = vector.load %arg1[%c96, %c0_3] : memref<744x240xf32, #tpu.memory_space<vmem>>, vector<128x240xf32>
    %cst_4 = arith.constant dense<0.000000e+00> : vector<32x240xf32>
    %5 = tpu.matmul %3, %4, %cst_4 {dimension_numbers = #tpu.dot_dimension_numbers<[1], [0], [0], [1], [0, 0, 1, 1], [], []>} : vector<32x128xf32>, vector<128x240xf32>, vector<32x240xf32> -> vector<32x240xf32>
    %6 = vector.extract_strided_slice %2 {offsets = [32, 0], sizes = [32, 128], strides = [1, 1]} : vector<96x128xf32> to vector<32x128xf32>
    %c224 = arith.constant 224 : index
    %c0_5 = arith.constant 0 : index
    %7 = vector.load %arg1[%c224, %c0_5] : memref<744x240xf32, #tpu.memory_space<vmem>>, vector<128x240xf32>
    %cst_6 = arith.constant dense<0.000000e+00> : vector<32x240xf32>
    %8 = tpu.matmul %6, %7, %cst_6 {dimension_numbers = #tpu.dot_dimension_numbers<[1], [0], [0], [1], [0, 0, 1, 1], [], []>} : vector<32x128xf32>, vector<128x240xf32>, vector<32x240xf32> -> vector<32x240xf32>
    %9 = arith.addf %5, %8 : vector<32x240xf32>
    %10 = vector.extract_strided_slice %2 {offsets = [64, 0], sizes = [32, 128], strides = [1, 1]} : vector<96x128xf32> to vector<32x128xf32>
    %c352 = arith.constant 352 : index
    %c0_7 = arith.constant 0 : index
    %11 = vector.load %arg1[%c352, %c0_7] : memref<744x240xf32, #tpu.memory_space<vmem>>, vector<128x240xf32>
    %cst_8 = arith.constant dense<0.000000e+00> : vector<32x240xf32>
    %12 = tpu.matmul %10, %11, %cst_8 {dimension_numbers = #tpu.dot_dimension_numbers<[1], [0], [0], [1], [0, 0, 1, 1], [], []>} : vector<32x128xf32>, vector<128x240xf32>, vector<32x240xf32> -> vector<32x240xf32>
    %13 = arith.addf %9, %12 : vector<32x240xf32>
    %cst_9 = arith.constant dense<0.000000e+00> : vector<240xf32>
    %14 = vector.multi_reduction <add>, %13, %cst_9 [0] : vector<32x240xf32> to vector<240xf32>
    %15 = vector.shape_cast %14 : vector<240xf32> to vector<1x240xf32>
    %16 = arith.mulf %13, %13 : vector<32x240xf32>
    %cst_10 = arith.constant dense<0.000000e+00> : vector<240xf32>
    %17 = vector.multi_reduction <add>, %16, %cst_10 [0] : vector<32x240xf32> to vector<240xf32>
    %18 = vector.shape_cast %17 : vector<240xf32> to vector<1x240xf32>
    %19 = tpu.concatenate %15, %18 in 0 : vector<1x240xf32>, vector<1x240xf32> -> vector<2x240xf32>
    %c480 = arith.constant 480 : index
    %c0_11 = arith.constant 0 : index
    %20 = vector.load %arg1[%c480, %c0_11] : memref<744x240xf32, #tpu.memory_space<vmem>>, vector<240x16xf32>
    %cst_12 = arith.constant dense<0.000000e+00> : vector<2x16xf32>
    %21 = tpu.matmul %19, %20, %cst_12 {dimension_numbers = #tpu.dot_dimension_numbers<[1], [0], [0], [1], [0, 0, 1, 1], [], []>} : vector<2x240xf32>, vector<240x16xf32>, vector<2x16xf32> -> vector<2x16xf32>
    %cst_13 = arith.constant 0.00222222228 : f32
    %22 = vector.broadcast %cst_13 : f32 to vector<2x16xf32>
    %23 = arith.mulf %21, %22 : vector<2x16xf32>
    %24 = vector.extract_strided_slice %23 {offsets = [0, 0], sizes = [1, 16], strides = [1, 1]} : vector<2x16xf32> to vector<1x16xf32>
    %25 = vector.extract_strided_slice %23 {offsets = [1, 0], sizes = [1, 16], strides = [1, 1]} : vector<2x16xf32> to vector<1x16xf32>
    %26 = arith.mulf %24, %24 : vector<1x16xf32>
    %27 = arith.subf %25, %26 : vector<1x16xf32>
    %cst_14 = arith.constant 0.000000e+00 : f32
    %28 = vector.broadcast %cst_14 : f32 to vector<1x16xf32>
    %29 = arith.maximumf %27, %28 : vector<1x16xf32>
    %c736 = arith.constant 736 : index
    %c0_15 = arith.constant 0 : index
    %30 = vector.load %arg1[%c736, %c0_15] : memref<744x240xf32, #tpu.memory_space<vmem>>, vector<2x16xf32>
    %31 = vector.extract_strided_slice %30 {offsets = [0, 0], sizes = [1, 16], strides = [1, 1]} : vector<2x16xf32> to vector<1x16xf32>
    %cst_16 = arith.constant 9.99999974E-6 : f32
    %32 = vector.broadcast %cst_16 : f32 to vector<1x16xf32>
    %33 = arith.addf %29, %32 : vector<1x16xf32>
    %34 = math.rsqrt %33 : vector<1x16xf32>
    %35 = arith.mulf %31, %34 : vector<1x16xf32>
    %36 = vector.extract_strided_slice %30 {offsets = [1, 0], sizes = [1, 16], strides = [1, 1]} : vector<2x16xf32> to vector<1x16xf32>
    %37 = arith.mulf %24, %35 : vector<1x16xf32>
    %38 = arith.subf %36, %37 : vector<1x16xf32>
    %39 = tpu.concatenate %35, %38 in 0 : vector<1x16xf32>, vector<1x16xf32> -> vector<2x16xf32>
    %c720 = arith.constant 720 : index
    %c0_17 = arith.constant 0 : index
    %40 = vector.load %arg1[%c720, %c0_17] : memref<744x240xf32, #tpu.memory_space<vmem>>, vector<16x240xf32>
    %cst_18 = arith.constant dense<0.000000e+00> : vector<2x240xf32>
    %41 = tpu.matmul %39, %40, %cst_18 {dimension_numbers = #tpu.dot_dimension_numbers<[1], [0], [0], [1], [0, 0, 1, 1], [], []>} : vector<2x16xf32>, vector<16x240xf32>, vector<2x240xf32> -> vector<2x240xf32>
    %42 = vector.extract_strided_slice %41 {offsets = [0, 0], sizes = [1, 240], strides = [1, 1]} : vector<2x240xf32> to vector<1x240xf32>
    %43 = vector.broadcast %42 : vector<1x240xf32> to vector<32x240xf32>
    %44 = arith.mulf %13, %43 : vector<32x240xf32>
    %45 = vector.extract_strided_slice %41 {offsets = [1, 0], sizes = [1, 240], strides = [1, 1]} : vector<2x240xf32> to vector<1x240xf32>
    %46 = vector.broadcast %45 : vector<1x240xf32> to vector<32x240xf32>
    %47 = arith.addf %44, %46 : vector<32x240xf32>
    %cst_19 = arith.constant 0.000000e+00 : f32
    %48 = vector.broadcast %cst_19 : f32 to vector<32x240xf32>
    %49 = arith.maximumf %47, %48 : vector<32x240xf32>
    %c0_20 = arith.constant 0 : index
    %c0_21 = arith.constant 0 : index
    %50 = vector.load %arg2[%c0_20, %c0_21] : memref<904x112xf32, #tpu.memory_space<vmem>>, vector<48x32xf32>
    %cst_22 = arith.constant dense<0.000000e+00> : vector<48x240xf32>
    %51 = tpu.matmul %50, %49, %cst_22 {dimension_numbers = #tpu.dot_dimension_numbers<[1], [0], [0], [1], [0, 0, 1, 1], [], []>} : vector<48x32xf32>, vector<32x240xf32>, vector<48x240xf32> -> vector<48x240xf32>
    %52 = vector.extract_strided_slice %51 {offsets = [0, 0], sizes = [16, 240], strides = [1, 1]} : vector<48x240xf32> to vector<16x240xf32>
    %c48 = arith.constant 48 : index
    %c0_23 = arith.constant 0 : index
    %53 = vector.load %arg2[%c48, %c0_23] : memref<904x112xf32, #tpu.memory_space<vmem>>, vector<240x112xf32>
    %cst_24 = arith.constant dense<0.000000e+00> : vector<16x112xf32>
    %54 = tpu.matmul %52, %53, %cst_24 {dimension_numbers = #tpu.dot_dimension_numbers<[1], [0], [0], [1], [0, 0, 1, 1], [], []>} : vector<16x240xf32>, vector<240x112xf32>, vector<16x112xf32> -> vector<16x112xf32>
    %55 = vector.extract_strided_slice %51 {offsets = [16, 0], sizes = [16, 240], strides = [1, 1]} : vector<48x240xf32> to vector<16x240xf32>
    %c288 = arith.constant 288 : index
    %c0_25 = arith.constant 0 : index
    %56 = vector.load %arg2[%c288, %c0_25] : memref<904x112xf32, #tpu.memory_space<vmem>>, vector<240x112xf32>
    %cst_26 = arith.constant dense<0.000000e+00> : vector<16x112xf32>
    %57 = tpu.matmul %55, %56, %cst_26 {dimension_numbers = #tpu.dot_dimension_numbers<[1], [0], [0], [1], [0, 0, 1, 1], [], []>} : vector<16x240xf32>, vector<240x112xf32>, vector<16x112xf32> -> vector<16x112xf32>
    %58 = arith.addf %54, %57 : vector<16x112xf32>
    %59 = vector.extract_strided_slice %51 {offsets = [32, 0], sizes = [16, 240], strides = [1, 1]} : vector<48x240xf32> to vector<16x240xf32>
    %c528 = arith.constant 528 : index
    %c0_27 = arith.constant 0 : index
    %60 = vector.load %arg2[%c528, %c0_27] : memref<904x112xf32, #tpu.memory_space<vmem>>, vector<240x112xf32>
    %cst_28 = arith.constant dense<0.000000e+00> : vector<16x112xf32>
    %61 = tpu.matmul %59, %60, %cst_28 {dimension_numbers = #tpu.dot_dimension_numbers<[1], [0], [0], [1], [0, 0, 1, 1], [], []>} : vector<16x240xf32>, vector<240x112xf32>, vector<16x112xf32> -> vector<16x112xf32>
    %62 = arith.addf %58, %61 : vector<16x112xf32>
    %cst_29 = arith.constant dense<0.000000e+00> : vector<112xf32>
    %63 = vector.multi_reduction <add>, %62, %cst_29 [0] : vector<16x112xf32> to vector<112xf32>
    %64 = vector.shape_cast %63 : vector<112xf32> to vector<1x112xf32>
    %65 = arith.mulf %62, %62 : vector<16x112xf32>
    %cst_30 = arith.constant dense<0.000000e+00> : vector<112xf32>
    %66 = vector.multi_reduction <add>, %65, %cst_30 [0] : vector<16x112xf32> to vector<112xf32>
    %67 = vector.shape_cast %66 : vector<112xf32> to vector<1x112xf32>
    %68 = tpu.concatenate %64, %67 in 0 : vector<1x112xf32>, vector<1x112xf32> -> vector<2x112xf32>
    %c768 = arith.constant 768 : index
    %c0_31 = arith.constant 0 : index
    %69 = vector.load %arg2[%c768, %c0_31] : memref<904x112xf32, #tpu.memory_space<vmem>>, vector<112x16xf32>
    %cst_32 = arith.constant dense<0.000000e+00> : vector<2x16xf32>
    %70 = tpu.matmul %68, %69, %cst_32 {dimension_numbers = #tpu.dot_dimension_numbers<[1], [0], [0], [1], [0, 0, 1, 1], [], []>} : vector<2x112xf32>, vector<112x16xf32>, vector<2x16xf32> -> vector<2x16xf32>
    %cst_33 = arith.constant 0.0102040814 : f32
    %71 = vector.broadcast %cst_33 : f32 to vector<2x16xf32>
    %72 = arith.mulf %70, %71 : vector<2x16xf32>
    %73 = vector.extract_strided_slice %72 {offsets = [0, 0], sizes = [1, 16], strides = [1, 1]} : vector<2x16xf32> to vector<1x16xf32>
    %74 = vector.extract_strided_slice %72 {offsets = [1, 0], sizes = [1, 16], strides = [1, 1]} : vector<2x16xf32> to vector<1x16xf32>
    %75 = arith.mulf %73, %73 : vector<1x16xf32>
    %76 = arith.subf %74, %75 : vector<1x16xf32>
    %cst_34 = arith.constant 0.000000e+00 : f32
    %77 = vector.broadcast %cst_34 : f32 to vector<1x16xf32>
    %78 = arith.maximumf %76, %77 : vector<1x16xf32>
    %c896 = arith.constant 896 : index
    %c0_35 = arith.constant 0 : index
    %79 = vector.load %arg2[%c896, %c0_35] : memref<904x112xf32, #tpu.memory_space<vmem>>, vector<2x16xf32>
    %80 = vector.extract_strided_slice %79 {offsets = [0, 0], sizes = [1, 16], strides = [1, 1]} : vector<2x16xf32> to vector<1x16xf32>
    %cst_36 = arith.constant 9.99999974E-6 : f32
    %81 = vector.broadcast %cst_36 : f32 to vector<1x16xf32>
    %82 = arith.addf %78, %81 : vector<1x16xf32>
    %83 = math.rsqrt %82 : vector<1x16xf32>
    %84 = arith.mulf %80, %83 : vector<1x16xf32>
    %85 = vector.extract_strided_slice %79 {offsets = [1, 0], sizes = [1, 16], strides = [1, 1]} : vector<2x16xf32> to vector<1x16xf32>
    %86 = arith.mulf %73, %84 : vector<1x16xf32>
    %87 = arith.subf %85, %86 : vector<1x16xf32>
    %88 = tpu.concatenate %84, %87 in 0 : vector<1x16xf32>, vector<1x16xf32> -> vector<2x16xf32>
    %c880 = arith.constant 880 : index
    %c0_37 = arith.constant 0 : index
    %89 = vector.load %arg2[%c880, %c0_37] : memref<904x112xf32, #tpu.memory_space<vmem>>, vector<16x112xf32>
    %cst_38 = arith.constant dense<0.000000e+00> : vector<2x112xf32>
    %90 = tpu.matmul %88, %89, %cst_38 {dimension_numbers = #tpu.dot_dimension_numbers<[1], [0], [0], [1], [0, 0, 1, 1], [], []>} : vector<2x16xf32>, vector<16x112xf32>, vector<2x112xf32> -> vector<2x112xf32>
    %91 = vector.extract_strided_slice %90 {offsets = [0, 0], sizes = [1, 112], strides = [1, 1]} : vector<2x112xf32> to vector<1x112xf32>
    %92 = vector.broadcast %91 : vector<1x112xf32> to vector<16x112xf32>
    %93 = arith.mulf %62, %92 : vector<16x112xf32>
    %94 = vector.extract_strided_slice %90 {offsets = [1, 0], sizes = [1, 112], strides = [1, 1]} : vector<2x112xf32> to vector<1x112xf32>
    %95 = vector.broadcast %94 : vector<1x112xf32> to vector<16x112xf32>
    %96 = arith.addf %93, %95 : vector<16x112xf32>
    %cst_39 = arith.constant 0.000000e+00 : f32
    %97 = vector.broadcast %cst_39 : f32 to vector<16x112xf32>
    %98 = arith.maximumf %96, %97 : vector<16x112xf32>
    %c0_40 = arith.constant 0 : index
    %c0_41 = arith.constant 0 : index
    %99 = vector.load %arg3[%c0_40, %c0_41] : memref<480x48xf32, #tpu.memory_space<vmem>>, vector<72x16xf32>
    %cst_42 = arith.constant dense<0.000000e+00> : vector<72x112xf32>
    %100 = tpu.matmul %99, %98, %cst_42 {dimension_numbers = #tpu.dot_dimension_numbers<[1], [0], [0], [1], [0, 0, 1, 1], [], []>} : vector<72x16xf32>, vector<16x112xf32>, vector<72x112xf32> -> vector<72x112xf32>
    %101 = vector.extract_strided_slice %100 {offsets = [0, 0], sizes = [24, 112], strides = [1, 1]} : vector<72x112xf32> to vector<24x112xf32>
    %c72 = arith.constant 72 : index
    %c0_43 = arith.constant 0 : index
    %102 = vector.load %arg3[%c72, %c0_43] : memref<480x48xf32, #tpu.memory_space<vmem>>, vector<112x48xf32>
    %cst_44 = arith.constant dense<0.000000e+00> : vector<24x48xf32>
    %103 = tpu.matmul %101, %102, %cst_44 {dimension_numbers = #tpu.dot_dimension_numbers<[1], [0], [0], [1], [0, 0, 1, 1], [], []>} : vector<24x112xf32>, vector<112x48xf32>, vector<24x48xf32> -> vector<24x48xf32>
    %104 = vector.extract_strided_slice %100 {offsets = [24, 0], sizes = [24, 112], strides = [1, 1]} : vector<72x112xf32> to vector<24x112xf32>
    %c184 = arith.constant 184 : index
    %c0_45 = arith.constant 0 : index
    %105 = vector.load %arg3[%c184, %c0_45] : memref<480x48xf32, #tpu.memory_space<vmem>>, vector<112x48xf32>
    %cst_46 = arith.constant dense<0.000000e+00> : vector<24x48xf32>
    %106 = tpu.matmul %104, %105, %cst_46 {dimension_numbers = #tpu.dot_dimension_numbers<[1], [0], [0], [1], [0, 0, 1, 1], [], []>} : vector<24x112xf32>, vector<112x48xf32>, vector<24x48xf32> -> vector<24x48xf32>
    %107 = arith.addf %103, %106 : vector<24x48xf32>
    %108 = vector.extract_strided_slice %100 {offsets = [48, 0], sizes = [24, 112], strides = [1, 1]} : vector<72x112xf32> to vector<24x112xf32>
    %c296 = arith.constant 296 : index
    %c0_47 = arith.constant 0 : index
    %109 = vector.load %arg3[%c296, %c0_47] : memref<480x48xf32, #tpu.memory_space<vmem>>, vector<112x48xf32>
    %cst_48 = arith.constant dense<0.000000e+00> : vector<24x48xf32>
    %110 = tpu.matmul %108, %109, %cst_48 {dimension_numbers = #tpu.dot_dimension_numbers<[1], [0], [0], [1], [0, 0, 1, 1], [], []>} : vector<24x112xf32>, vector<112x48xf32>, vector<24x48xf32> -> vector<24x48xf32>
    %111 = arith.addf %107, %110 : vector<24x48xf32>
    %cst_49 = arith.constant dense<0.000000e+00> : vector<48xf32>
    %112 = vector.multi_reduction <add>, %111, %cst_49 [0] : vector<24x48xf32> to vector<48xf32>
    %113 = vector.shape_cast %112 : vector<48xf32> to vector<1x48xf32>
    %114 = arith.mulf %111, %111 : vector<24x48xf32>
    %cst_50 = arith.constant dense<0.000000e+00> : vector<48xf32>
    %115 = vector.multi_reduction <add>, %114, %cst_50 [0] : vector<24x48xf32> to vector<48xf32>
    %116 = vector.shape_cast %115 : vector<48xf32> to vector<1x48xf32>
    %117 = tpu.concatenate %113, %116 in 0 : vector<1x48xf32>, vector<1x48xf32> -> vector<2x48xf32>
    %c408 = arith.constant 408 : index
    %c0_51 = arith.constant 0 : index
    %118 = vector.load %arg3[%c408, %c0_51] : memref<480x48xf32, #tpu.memory_space<vmem>>, vector<48x16xf32>
    %cst_52 = arith.constant dense<0.000000e+00> : vector<2x16xf32>
    %119 = tpu.matmul %117, %118, %cst_52 {dimension_numbers = #tpu.dot_dimension_numbers<[1], [0], [0], [1], [0, 0, 1, 1], [], []>} : vector<2x48xf32>, vector<48x16xf32>, vector<2x16xf32> -> vector<2x16xf32>
    %cst_53 = arith.constant 0.055555556 : f32
    %120 = vector.broadcast %cst_53 : f32 to vector<2x16xf32>
    %121 = arith.mulf %119, %120 : vector<2x16xf32>
    %122 = vector.extract_strided_slice %121 {offsets = [0, 0], sizes = [1, 16], strides = [1, 1]} : vector<2x16xf32> to vector<1x16xf32>
    %123 = vector.extract_strided_slice %121 {offsets = [1, 0], sizes = [1, 16], strides = [1, 1]} : vector<2x16xf32> to vector<1x16xf32>
    %124 = arith.mulf %122, %122 : vector<1x16xf32>
    %125 = arith.subf %123, %124 : vector<1x16xf32>
    %cst_54 = arith.constant 0.000000e+00 : f32
    %126 = vector.broadcast %cst_54 : f32 to vector<1x16xf32>
    %127 = arith.maximumf %125, %126 : vector<1x16xf32>
    %c472 = arith.constant 472 : index
    %c0_55 = arith.constant 0 : index
    %128 = vector.load %arg3[%c472, %c0_55] : memref<480x48xf32, #tpu.memory_space<vmem>>, vector<2x16xf32>
    %129 = vector.extract_strided_slice %128 {offsets = [0, 0], sizes = [1, 16], strides = [1, 1]} : vector<2x16xf32> to vector<1x16xf32>
    %cst_56 = arith.constant 9.99999974E-6 : f32
    %130 = vector.broadcast %cst_56 : f32 to vector<1x16xf32>
    %131 = arith.addf %127, %130 : vector<1x16xf32>
    %132 = math.rsqrt %131 : vector<1x16xf32>
    %133 = arith.mulf %129, %132 : vector<1x16xf32>
    %134 = vector.extract_strided_slice %128 {offsets = [1, 0], sizes = [1, 16], strides = [1, 1]} : vector<2x16xf32> to vector<1x16xf32>
    %135 = arith.mulf %122, %133 : vector<1x16xf32>
    %136 = arith.subf %134, %135 : vector<1x16xf32>
    %137 = tpu.concatenate %133, %136 in 0 : vector<1x16xf32>, vector<1x16xf32> -> vector<2x16xf32>
    %c456 = arith.constant 456 : index
    %c0_57 = arith.constant 0 : index
    %138 = vector.load %arg3[%c456, %c0_57] : memref<480x48xf32, #tpu.memory_space<vmem>>, vector<16x48xf32>
    %cst_58 = arith.constant dense<0.000000e+00> : vector<2x48xf32>
    %139 = tpu.matmul %137, %138, %cst_58 {dimension_numbers = #tpu.dot_dimension_numbers<[1], [0], [0], [1], [0, 0, 1, 1], [], []>} : vector<2x16xf32>, vector<16x48xf32>, vector<2x48xf32> -> vector<2x48xf32>
    %140 = vector.extract_strided_slice %139 {offsets = [0, 0], sizes = [1, 48], strides = [1, 1]} : vector<2x48xf32> to vector<1x48xf32>
    %141 = vector.broadcast %140 : vector<1x48xf32> to vector<24x48xf32>
    %142 = arith.mulf %111, %141 : vector<24x48xf32>
    %143 = vector.extract_strided_slice %139 {offsets = [1, 0], sizes = [1, 48], strides = [1, 1]} : vector<2x48xf32> to vector<1x48xf32>
    %144 = vector.broadcast %143 : vector<1x48xf32> to vector<24x48xf32>
    %145 = arith.addf %142, %144 : vector<24x48xf32>
    %cst_59 = arith.constant 0.000000e+00 : f32
    %146 = vector.broadcast %cst_59 : f32 to vector<24x48xf32>
    %147 = arith.maximumf %145, %146 : vector<24x48xf32>
    %148 = vector.extract_strided_slice %147 {offsets = [0, 0], sizes = [2, 48], strides = [1, 1]} : vector<24x48xf32> to vector<2x48xf32>
    %c0_60 = arith.constant 0 : index
    %c0_61 = arith.constant 0 : index
    %149 = vector.load %arg4[%c0_60, %c0_61] : memref<680x256xf32, #tpu.memory_space<vmem>>, vector<48x256xf32>
    %cst_62 = arith.constant dense<0.000000e+00> : vector<2x256xf32>
    %150 = tpu.matmul %148, %149, %cst_62 {dimension_numbers = #tpu.dot_dimension_numbers<[1], [0], [0], [1], [0, 0, 1, 1], [], []>} : vector<2x48xf32>, vector<48x256xf32>, vector<2x256xf32> -> vector<2x256xf32>
    %151 = vector.extract_strided_slice %147 {offsets = [8, 0], sizes = [2, 48], strides = [1, 1]} : vector<24x48xf32> to vector<2x48xf32>
    %c48_63 = arith.constant 48 : index
    %c0_64 = arith.constant 0 : index
    %152 = vector.load %arg4[%c48_63, %c0_64] : memref<680x256xf32, #tpu.memory_space<vmem>>, vector<48x256xf32>
    %cst_65 = arith.constant dense<0.000000e+00> : vector<2x256xf32>
    %153 = tpu.matmul %151, %152, %cst_65 {dimension_numbers = #tpu.dot_dimension_numbers<[1], [0], [0], [1], [0, 0, 1, 1], [], []>} : vector<2x48xf32>, vector<48x256xf32>, vector<2x256xf32> -> vector<2x256xf32>
    %154 = arith.addf %150, %153 : vector<2x256xf32>
    %155 = vector.extract_strided_slice %147 {offsets = [16, 0], sizes = [2, 48], strides = [1, 1]} : vector<24x48xf32> to vector<2x48xf32>
    %c96_66 = arith.constant 96 : index
    %c0_67 = arith.constant 0 : index
    %156 = vector.load %arg4[%c96_66, %c0_67] : memref<680x256xf32, #tpu.memory_space<vmem>>, vector<48x256xf32>
    %cst_68 = arith.constant dense<0.000000e+00> : vector<2x256xf32>
    %157 = tpu.matmul %155, %156, %cst_68 {dimension_numbers = #tpu.dot_dimension_numbers<[1], [0], [0], [1], [0, 0, 1, 1], [], []>} : vector<2x48xf32>, vector<48x256xf32>, vector<2x256xf32> -> vector<2x256xf32>
    %158 = arith.addf %154, %157 : vector<2x256xf32>
    %c144 = arith.constant 144 : index
    %c0_69 = arith.constant 0 : index
    %159 = vector.load %arg4[%c144, %c0_69] : memref<680x256xf32, #tpu.memory_space<vmem>>, vector<1x256xf32>
    %160 = vector.broadcast %159 : vector<1x256xf32> to vector<2x256xf32>
    %161 = arith.addf %158, %160 : vector<2x256xf32>
    %cst_70 = arith.constant 0.000000e+00 : f32
    %162 = vector.broadcast %cst_70 : f32 to vector<2x256xf32>
    %163 = arith.maximumf %161, %162 : vector<2x256xf32>
    %c152 = arith.constant 152 : index
    %c0_71 = arith.constant 0 : index
    %164 = vector.load %arg4[%c152, %c0_71] : memref<680x256xf32, #tpu.memory_space<vmem>>, vector<256x256xf32>
    %cst_72 = arith.constant dense<0.000000e+00> : vector<2x256xf32>
    %165 = tpu.matmul %163, %164, %cst_72 {dimension_numbers = #tpu.dot_dimension_numbers<[1], [0], [0], [1], [0, 0, 1, 1], [], []>} : vector<2x256xf32>, vector<256x256xf32>, vector<2x256xf32> -> vector<2x256xf32>
    %c408_73 = arith.constant 408 : index
    %c0_74 = arith.constant 0 : index
    %166 = vector.load %arg4[%c408_73, %c0_74] : memref<680x256xf32, #tpu.memory_space<vmem>>, vector<1x256xf32>
    %167 = vector.broadcast %166 : vector<1x256xf32> to vector<2x256xf32>
    %168 = arith.addf %165, %167 : vector<2x256xf32>
    %cst_75 = arith.constant 0.000000e+00 : f32
    %169 = vector.broadcast %cst_75 : f32 to vector<2x256xf32>
    %170 = arith.maximumf %168, %169 : vector<2x256xf32>
    %c416 = arith.constant 416 : index
    %c0_76 = arith.constant 0 : index
    %171 = vector.load %arg4[%c416, %c0_76] : memref<680x256xf32, #tpu.memory_space<vmem>>, vector<256x4xf32>
    %cst_77 = arith.constant dense<0.000000e+00> : vector<2x4xf32>
    %172 = tpu.matmul %170, %171, %cst_77 {dimension_numbers = #tpu.dot_dimension_numbers<[1], [0], [0], [1], [0, 0, 1, 1], [], []>} : vector<2x256xf32>, vector<256x4xf32>, vector<2x4xf32> -> vector<2x4xf32>
    %c672 = arith.constant 672 : index
    %c0_78 = arith.constant 0 : index
    %173 = vector.load %arg4[%c672, %c0_78] : memref<680x256xf32, #tpu.memory_space<vmem>>, vector<1x4xf32>
    %174 = vector.broadcast %173 : vector<1x4xf32> to vector<2x4xf32>
    %175 = arith.addf %172, %174 : vector<2x4xf32>
    %176 = math.tanh %175 : vector<2x4xf32>
    %c0_79 = arith.constant 0 : index
    %c0_80 = arith.constant 0 : index
    %177 = vector.load %arg5[%c0_79, %c0_80] : memref<2x4xf32, #tpu.memory_space<vmem>>, vector<2x4xf32>
    tpu.vector_store %arg5[%c0_79, %c0_80], %176 {strides = array<i32>} : memref<2x4xf32, #tpu.memory_space<vmem>>, vector<2x4xf32>,
    return
  }
}

</mosaic_0001>

<llo_original>
// kernel: actor_cnn_forward.1
$region0: #{actor_cnn_forward.1}
  #allocation0 [shape = 'u32[]', space=smem, size = 0x4, offset = 0x4, fixed_abs, tag = 'smem constant byte address 0x4 - core index']
  #allocation1 [shape = 'u32[144,128]{1,0:T(1,128)}', space=vmem, size = 0x12000, scoped, tag = 'internal scratch']
  %s0 = inlined_call_operand.vmem [shape: f32[64,128], index: 0, kind: input, shape index: {}]
  %s1 = inlined_call_operand.vmem [shape: f32[744,240], index: 1, kind: input, shape index: {}]
  %s2 = inlined_call_operand.vmem [shape: f32[904,112], index: 2, kind: input, shape index: {}]
  %s3 = inlined_call_operand.vmem [shape: f32[480,48], index: 3, kind: input, shape index: {}]
  %s4 = inlined_call_operand.vmem [shape: f32[680,256], index: 4, kind: input, shape index: {}]
  %s5 = inlined_call_operand.hbm [shape: f32[2,4], index: 5, kind: output, shape index: {}]
  %s6 = sld [smem:[#allocation0]]
  $region30: #{actor_cnn_forward.1} parent=0
    _
  %s8 = ssub.s32 1, %s6
  %s9 = scalar_select 0, %s8, %s6
  $region1: #{actor_cnn_forward.1} parent=0
    #allocation2 [shape = 'u8[1024]{0}', space=vmem, size = 0x400, scoped, tag = 'output window, operand 0, single buffered']
    #allocation3 [shape = 's32[1]{0}', space=sflag, size = 0x4, scoped, tag = 'scoped memory for actor_cnn_forward.1']
    %10 = vsyncpa [#allocation3], 0
    // Predicated region
    $region2: #{actor_cnn_forward.1} parent=1 // pred_check
      _
    $region3: #{actor_cnn_forward.1} parent=1 // pred_check_branch
      %12 = sbr.rel (0) target = $region5
    $region4: #{actor_cnn_forward.1} parent=1 // pred_region
      _
    $region5: #{actor_cnn_forward.1} parent=1 // pred_fallthru
      _
    // Predicated region
    $region6: #{actor_cnn_forward.1} parent=1 // pred_check
      _
    $region7: #{actor_cnn_forward.1} parent=1 // pred_check_branch
      %14 = sbr.rel (0) target = $region9
    $region8: #{actor_cnn_forward.1} parent=1 // pred_region
      _
    $region9: #{actor_cnn_forward.1} parent=1 // pred_fallthru
      _
    // Predicated region
    $region10: #{actor_cnn_forward.1} parent=1 // pred_check
      _
    $region11: #{actor_cnn_forward.1} parent=1 // pred_check_branch
      %16 = sbr.rel (0) target = $region13
    $region12: #{actor_cnn_forward.1} parent=1 // pred_region
      _
    $region13: #{actor_cnn_forward.1} parent=1 // pred_fallthru
      _
    // Predicated region
    $region14: #{actor_cnn_forward.1} parent=1 // pred_check
      _
    $region15: #{actor_cnn_forward.1} parent=1 // pred_check_branch
      %18 = sbr.rel (0) target = $region17
    $region16: #{actor_cnn_forward.1} parent=1 // pred_region
      _
    $region17: #{actor_cnn_forward.1} parent=1 // pred_fallthru
      _
    // Predicated region
    $region18: #{actor_cnn_forward.1} parent=1 // pred_check
      _
    $region19: #{actor_cnn_forward.1} parent=1 // pred_check_branch
      %20 = sbr.rel (0) target = $region21
    $region20: #{actor_cnn_forward.1} parent=1 // pred_region
      _
    $region21: #{actor_cnn_forward.1} parent=1 // pred_fallthru
      _
    %v21 = vld [vmem:[%s0] sm:$0xff]
    %v22 = vld [vmem:[%s0 + $0x8] sm:$0xff]
    %v23 = vld [vmem:[%s0 + $0x10] sm:$0xff]
    %v24 = vld [vmem:[%s0 + $0x18] sm:$0xff]
    %v25 = vld [vmem:[%s0 + $0x20] sm:$0xff]
    %v26 = vld [vmem:[%s0 + $0x28] sm:$0xff]
    %v27 = vld [vmem:[%s0 + $0x30] sm:$0xff]
    %v28 = vld [vmem:[%s0 + $0x38] sm:$0xff]
    %v29 = vld [vmem:[%s1] sm:$0xff]
    %v30 = vld [vmem:[%s1 + $0x10] sm:$0xff]
    %v31 = vld [vmem:[%s1 + $0x20] sm:$0xff]
    %v32 = vld [vmem:[%s1 + $0x30] sm:$0xff]
    %v33 = vld [vmem:[%s1 + $0x40] sm:$0xff]
    %v34 = vld [vmem:[%s1 + $0x50] sm:$0xff]
    %v35 = vld [vmem:[%s1 + $0x60] sm:$0xff]
    %v36 = vld [vmem:[%s1 + $0x70] sm:$0xff]
    %v37 = vld [vmem:[%s1 + $0x80] sm:$0xff]
    %v38 = vld [vmem:[%s1 + $0x90] sm:$0xff]
    %v39 = vld [vmem:[%s1 + $0xa0] sm:$0xff]
    %v40 = vld [vmem:[%s1 + $0xb0] sm:$0xff]
    %vm41 = vcmask 523264
    %v43 = vsel %vm41, %v29, 0
    %v46 = vsel %vm41, %v30, 0
    %v49 = vsel %vm41, %v31, 0
    %v52 = vsel %vm41, %v32, 0
    %v55 = vsel %vm41, %v33, 0
    %v58 = vsel %vm41, %v34, 0
    %v61 = vsel %vm41, %v35, 0
    %v64 = vsel %vm41, %v36, 0
    %v67 = vsel %vm41, %v37, 0
    %v70 = vsel %vm41, %v38, 0
    %v73 = vsel %vm41, %v39, 0
    %v76 = vsel %vm41, %v40, 0
    %78 = vmatprep.subr.mxu0 0.0
    %79 = vmatpush1.msra.mxu0 %v21
    %80 = vmatprep.subr.mxu0 0.0
    %81 = vmatpush1.msra.mxu0 %v22
    %82 = vmatprep.subr.mxu0 0.0
    %83 = vmatpush1.msra.mxu0 %v23
    %84 = vmatprep.subr.mxu0 0.0
    %85 = vmatpush1.msra.mxu0 %v24
    %86 = vmatprep.subr.mxu0 0.0
    %87 = vmatpush1.msra.mxu0 %v25
    %88 = vmatprep.subr.mxu0 0.0
    %89 = vmatpush1.msra.mxu0 %v26
    %90 = vmatprep.subr.mxu0 0.0
    %91 = vmatpush1.msra.mxu0 %v27
    %92 = vmatprep.subr.mxu0 0.0
    %93 = vmatpush1.msra.mxu0 %v28
    %94 = vmatprep.subr.mxu0 0.0
    %95 = vmatpush1.msra.mxu0 0.0
    %96 = vmatprep.subr.mxu0 0.0
    %97 = vmatpush1.msra.mxu0 0.0
    %98 = vmatprep.subr.mxu0 0.0
    %99 = vmatpush1.msra.mxu0 0.0
    %100 = vmatprep.subr.mxu0 0.0
    %101 = vmatpush1.msra.mxu0 0.0
    %102 = vmatprep.subr.mxu0 0.0
    %103 = vmatpush1.msra.mxu0 0.0
    %104 = vmatprep.subr.mxu0 0.0
    %105 = vmatpush1.msra.mxu0 0.0
    %106 = vmatprep.subr.mxu0 0.0
    %107 = vmatpush1.msra.mxu0 0.0
    %108 = vmatprep.subr.mxu0 0.0
    %109 = vmatpush1.msra.mxu0 0.0
    %110 = vmatprep.subr.mxu0 0.0
    %111 = vmatpush1.msra.mxu0 0.0
    %112 = vmatprep.subr.mxu0 0.0
    %113 = vmatpush1.msra.mxu0 0.0
    %114 = vmatprep.subr.mxu0 0.0
    %115 = vmatpush1.msra.mxu0 0.0
    %116 = vmatprep.subr.mxu0 0.0
    %117 = vmatpush1.msra.mxu0 0.0
    %118 = vmatprep.subr.mxu0 0.0
    %119 = vmatpush1.msra.mxu0 0.0
    %120 = vmatprep.subr.mxu0 0.0
    %121 = vmatpush1.msra.mxu0 0.0
    %122 = vmatprep.subr.mxu0 0.0
    %123 = vmatpush1.msra.mxu0 0.0
    %124 = vmatprep.subr.mxu0 0.0
    %125 = vmatpush1.msra.mxu0 0.0
    %126 = vmatprep.subr.mxu0 0.0
    %127 = vmatpush1.msra.mxu0 0.0
    %128 = vmatprep.subr.mxu0 0.0
    %129 = vmatpush1.msra.mxu0 0.0
    %130 = vmatprep.subr.mxu0 0.0
    %131 = vmatpush1.msra.mxu0 0.0
    %132 = vmatprep.subr.mxu0 0.0
    %133 = vmatpush1.msra.mxu0 0.0
    %134 = vmatprep.subr.mxu0 0.0
    %135 = vmatpush1.msra.mxu0 0.0
    %136 = vmatprep.subr.mxu0 0.0
    %137 = vmatpush1.msra.mxu0 0.0
    %138 = vmatprep.subr.mxu0 0.0
    %139 = vmatpush1.msra.mxu0 0.0
    %140 = vmatprep.subr.mxu0 0.0
    %141 = vmatpush1.msra.mxu0 0.0
    %142 = vmatprep.mubr.f32.mxu0 0.0
    %143 = vmatmul.mubr.f32.gmra.mrb[0].mxu0 %v43
    %v144 = vpop.f32.mrb[0].mxu0
    %v145 = vadd.f32 0.0, %v144
    %v146 = vpop.f32.mrb[0].mxu0
    %147 = vmatprep.mubr.f32.mxu0 0.0
    %148 = vmatmul.mubr.f32.gmra.mrb[0].mxu0 %v46
    %v149 = vpop.f32.mrb[0].mxu0
    %v150 = vadd.f32 0.0, %v149
    %v151 = vpop.f32.mrb[0].mxu0
    %152 = vmatprep.mubr.f32.mxu0 0.0
    %153 = vmatmul.mubr.f32.gmra.mrb[0].mxu0 %v49
    %v154 = vpop.f32.mrb[0].mxu0
    %v155 = vadd.f32 0.0, %v154
    %v156 = vpop.f32.mrb[0].mxu0
    %157 = vmatprep.mubr.f32.mxu0 0.0
    %158 = vmatmul.mubr.f32.gmra.mrb[0].mxu0 %v52
    %v159 = vpop.f32.mrb[0].mxu0
    %v160 = vadd.f32 0.0, %v159
    %v161 = vpop.f32.mrb[0].mxu0
    %162 = vmatprep.mubr.f32.mxu0 0.0
    %163 = vmatmul.mubr.f32.gmra.mrb[0].mxu0 %v55
    %v164 = vpop.f32.mrb[0].mxu0
    %v165 = vadd.f32 0.0, %v164
    %v166 = vpop.f32.mrb[0].mxu0
    %167 = vmatprep.mubr.f32.mxu0 0.0
    %168 = vmatmul.mubr.f32.gmra.mrb[0].mxu0 %v58
    %v169 = vpop.f32.mrb[0].mxu0
    %v170 = vadd.f32 0.0, %v169
    %v171 = vpop.f32.mrb[0].mxu0
    %172 = vmatprep.mubr.f32.mxu0 0.0
    %173 = vmatmul.mubr.f32.gmra.mrb[0].mxu0 %v61
    %v174 = vpop.f32.mrb[0].mxu0
    %v175 = vadd.f32 0.0, %v174
    %v176 = vpop.f32.mrb[0].mxu0
    %177 = vmatprep.mubr.f32.mxu0 0.0
    %178 = vmatmul.mubr.f32.gmra.mrb[0].mxu0 %v64
    %v179 = vpop.f32.mrb[0].mxu0
    %v180 = vadd.f32 0.0, %v179
    %v181 = vpop.f32.mrb[0].mxu0
    %182 = vmatprep.mubr.f32.mxu0 0.0
    %183 = vmatmul.mubr.f32.gmra.mrb[0].mxu0 %v67
    %v184 = vpop.f32.mrb[0].mxu0
    %v185 = vadd.f32 0.0, %v184
    %v186 = vpop.f32.mrb[0].mxu0
    %187 = vmatprep.mubr.f32.mxu0 0.0
    %188 = vmatmul.mubr.f32.gmra.mrb[0].mxu0 %v70
    %v189 = vpop.f32.mrb[0].mxu0
    %v190 = vadd.f32 0.0, %v189
    %v191 = vpop.f32.mrb[0].mxu0
    %192 = vmatprep.mubr.f32.mxu0 0.0
    %193 = vmatmul.mubr.f32.gmra.mrb[0].mxu0 %v73
    %v194 = vpop.f32.mrb[0].mxu0
    %v195 = vadd.f32 0.0, %v194
    %v196 = vpop.f32.mrb[0].mxu0
    %197 = vmatprep.mubr.f32.mxu0 0.0
    %198 = vmatmul.mubr.f32.gmra.mrb[0].mxu0 %v76
    %v199 = vpop.f32.mrb[0].mxu0
    %v200 = vadd.f32 0.0, %v199
    %v201 = vpop.f32.mrb[0].mxu0
    %202 = vdwg.mxu0
    %v203 = vld [vmem:[%s1 + $0xc0] sm:$0xff]
    %v204 = vld [vmem:[%s1 + $0xc8] sm:$0xff]
    %v205 = vld [vmem:[%s1 + $0xd0] sm:$0xff]
    %v206 = vld [vmem:[%s1 + $0xd8] sm:$0xff]
    %v207 = vld [vmem:[%s1 + $0xe0] sm:$0xff]
    %v208 = vld [vmem:[%s1 + $0xe8] sm:$0xff]
    %v209 = vld [vmem:[%s1 + $0xf0] sm:$0xff]
    %v210 = vld [vmem:[%s1 + $0xf8] sm:$0xff]
    %v211 = vld [vmem:[%s1 + $0x100] sm:$0xff]
    %v212 = vld [vmem:[%s1 + $0x108] sm:$0xff]
    %v213 = vld [vmem:[%s1 + $0x110] sm:$0xff]
    %v214 = vld [vmem:[%s1 + $0x118] sm:$0xff]
    %v215 = vld [vmem:[%s1 + $0x120] sm:$0xff]
    %v216 = vld [vmem:[%s1 + $0x128] sm:$0xff]
    %v217 = vld [vmem:[%s1 + $0x130] sm:$0xff]
    %v218 = vld [vmem:[%s1 + $0x138] sm:$0xff]
    %v219 = vld [vmem:[%s1 + $0x140] sm:$0xff]
    %v220 = vld [vmem:[%s1 + $0x148] sm:$0xff]
    %v221 = vld [vmem:[%s1 + $0x150] sm:$0xff]
    %v222 = vld [vmem:[%s1 + $0x158] sm:$0xff]
    %v223 = vld [vmem:[%s1 + $0x160] sm:$0xff]
    %v224 = vld [vmem:[%s1 + $0x168] sm:$0xff]
    %v225 = vld [vmem:[%s1 + $0x170] sm:$0xff]
    %v226 = vld [vmem:[%s1 + $0x178] sm:$0xff]
    %v227 = vld [vmem:[%s1 + $0x180] sm:$0xff]
    %v228 = vld [vmem:[%s1 + $0x188] sm:$0xff]
    %v229 = vld [vmem:[%s1 + $0x190] sm:$0xff]
    %v230 = vld [vmem:[%s1 + $0x198] sm:$0xff]
    %v231 = vld [vmem:[%s1 + $0x1a0] sm:$0xff]
    %v232 = vld [vmem:[%s1 + $0x1a8] sm:$0xff]
    %v233 = vld [vmem:[%s1 + $0x1b0] sm:$0xff]
    %v234 = vld [vmem:[%s1 + $0x1b8] sm:$0xff]
    %v235 = vld [vmem:[%s1 + $0x1c0] sm:$0xff]
    %v236 = vld [vmem:[%s1 + $0x1c8] sm:$0xff]
    %v237 = vld [vmem:[%s1 + $0x1d0] sm:$0xff]
    %v238 = vld [vmem:[%s1 + $0x1d8] sm:$0xff]
    %v239 = vld [vmem:[%s1 + $0x1e0] sm:$0xff]
    %v240 = vld [vmem:[%s1 + $0x1e8] sm:$0xff]
    %v241 = vld [vmem:[%s1 + $0x1f0] sm:$0xff]
    %v242 = vld [vmem:[%s1 + $0x1f8] sm:$0xff]
    %v243 = vld [vmem:[%s1 + $0x200] sm:$0xff]
    %v244 = vld [vmem:[%s1 + $0x208] sm:$0xff]
    %v245 = vld [vmem:[%s1 + $0x210] sm:$0xff]
    %v246 = vld [vmem:[%s1 + $0x218] sm:$0xff]
    %v247 = vld [vmem:[%s1 + $0x220] sm:$0xff]
    %v248 = vld [vmem:[%s1 + $0x228] sm:$0xff]
    %v249 = vld [vmem:[%s1 + $0x230] sm:$0xff]
    %v250 = vld [vmem:[%s1 + $0x238] sm:$0xff]
    %v251 = vld [vmem:[%s1 + $0x240] sm:$0xff]
    %v252 = vld [vmem:[%s1 + $0x248] sm:$0xff]
    %v253 = vld [vmem:[%s1 + $0x250] sm:$0xff]
    %v254 = vld [vmem:[%s1 + $0x258] sm:$0xff]
    %v255 = vld [vmem:[%s1 + $0x260] sm:$0xff]
    %v256 = vld [vmem:[%s1 + $0x268] sm:$0xff]
    %v257 = vld [vmem:[%s1 + $0x270] sm:$0xff]
    %v258 = vld [vmem:[%s1 + $0x278] sm:$0xff]
    %v259 = vld [vmem:[%s1 + $0x280] sm:$0xff]
    %v260 = vld [vmem:[%s1 + $0x288] sm:$0xff]
    %v261 = vld [vmem:[%s1 + $0x290] sm:$0xff]
    %v262 = vld [vmem:[%s1 + $0x298] sm:$0xff]
    %v263 = vld [vmem:[%s1 + $0x2a0] sm:$0xff]
    %v264 = vld [vmem:[%s1 + $0x2a8] sm:$0xff]
    %v265 = vld [vmem:[%s1 + $0x2b0] sm:$0xff]
    %v266 = vld [vmem:[%s1 + $0x2b8] sm:$0xff]
    %267 = vmatprep.subr.mxu0 %v236
    %268 = vmatpush1.msra.mxu0 %v235
    %269 = vmatprep.subr.mxu0 %v238
    %270 = vmatpush1.msra.mxu0 %v237
    %271 = vmatprep.subr.mxu0 %v240
    %272 = vmatpush1.msra.mxu0 %v239
    %273 = vmatprep.subr.mxu0 %v242
    %274 = vmatpush1.msra.mxu0 %v241
    %275 = vmatprep.subr.mxu0 %v244
    %276 = vmatpush1.msra.mxu0 %v243
    %277 = vmatprep.subr.mxu0 %v246
    %278 = vmatpush1.msra.mxu0 %v245
    %279 = vmatprep.subr.mxu0 %v248
    %280 = vmatpush1.msra.mxu0 %v247
    %281 = vmatprep.subr.mxu0 %v250
    %282 = vmatpush1.msra.mxu0 %v249
    %283 = vmatprep.subr.mxu0 %v252
    %284 = vmatpush1.msra.mxu0 %v251
    %285 = vmatprep.subr.mxu0 %v254
    %286 = vmatpush1.msra.mxu0 %v253
    %287 = vmatprep.subr.mxu0 %v256
    %288 = vmatpush1.msra.mxu0 %v255
    %289 = vmatprep.subr.mxu0 %v258
    %290 = vmatpush1.msra.mxu0 %v257
    %291 = vmatprep.subr.mxu0 %v260
    %292 = vmatpush1.msra.mxu0 %v259
    %293 = vmatprep.subr.mxu0 %v262
    %294 = vmatpush1.msra.mxu0 %v261
    %295 = vmatprep.subr.mxu0 %v264
    %296 = vmatpush1.msra.mxu0 %v263
    %297 = vmatprep.subr.mxu0 %v266
    %298 = vmatpush1.msra.mxu0 %v265
    %299 = vmatprep.subr.mxu0 0.0
    %300 = vmatpush1.msra.mxu0 0.0
    %301 = vmatprep.subr.mxu0 0.0
    %302 = vmatpush1.msra.mxu0 0.0
    %303 = vmatprep.subr.mxu0 0.0
    %304 = vmatpush1.msra.mxu0 0.0
    %305 = vmatprep.subr.mxu0 0.0
    %306 = vmatpush1.msra.mxu0 0.0
    %307 = vmatprep.subr.mxu0 0.0
    %308 = vmatpush1.msra.mxu0 0.0
    %309 = vmatprep.subr.mxu0 0.0
    %310 = vmatpush1.msra.mxu0 0.0
    %311 = vmatprep.subr.mxu0 0.0
    %312 = vmatpush1.msra.mxu0 0.0
    %313 = vmatprep.subr.mxu0 0.0
    %314 = vmatpush1.msra.mxu0 0.0
    %315 = vmatprep.subr.mxu0 0.0
    %316 = vmatpush1.msra.mxu0 0.0
    %317 = vmatprep.subr.mxu0 0.0
    %318 = vmatpush1.msra.mxu0 0.0
    %319 = vmatprep.subr.mxu0 0.0
    %320 = vmatpush1.msra.mxu0 0.0
    %321 = vmatprep.subr.mxu0 0.0
    %322 = vmatpush1.msra.mxu0 0.0
    %323 = vmatprep.subr.mxu0 0.0
    %324 = vmatpush1.msra.mxu0 0.0
    %325 = vmatprep.subr.mxu0 0.0
    %326 = vmatpush1.msra.mxu0 0.0
    %327 = vmatprep.subr.mxu0 0.0
    %328 = vmatpush1.msra.mxu0 0.0
    %329 = vmatprep.subr.mxu0 0.0
    %330 = vmatpush1.msra.mxu0 0.0
    %331 = vmatprep.mubr.f32.mxu0 0.0
    %332 = vmatmul.mubr.f32.gmra.mrb[0].mxu0 %v165
    %v333 = vpop.f32.mrb[0].mxu0
    %v334 = vadd.f32 0.0, %v333
    %v335 = vpop.f32.mrb[0].mxu0
    %v336 = vadd.f32 0.0, %v335
    %337 = vmatprep.mubr.f32.mxu0 0.0
    %338 = vmatmul.mubr.f32.gmra.mrb[0].mxu0 %v170
    %v339 = vpop.f32.mrb[0].mxu0
    %v340 = vadd.f32 0.0, %v339
    %v341 = vpop.f32.mrb[0].mxu0
    %v342 = vadd.f32 0.0, %v341
    %343 = vmatprep.mubr.f32.mxu0 0.0
    %344 = vmatmul.mubr.f32.gmra.mrb[0].mxu0 %v175
    %v345 = vpop.f32.mrb[0].mxu0
    %v346 = vadd.f32 0.0, %v345
    %v347 = vpop.f32.mrb[0].mxu0
    %v348 = vadd.f32 0.0, %v347
    %349 = vmatprep.mubr.f32.mxu0 0.0
    %350 = vmatmul.mubr.f32.gmra.mrb[0].mxu0 %v180
    %v351 = vpop.f32.mrb[0].mxu0
    %v352 = vadd.f32 0.0, %v351
    %v353 = vpop.f32.mrb[0].mxu0
    %v354 = vadd.f32 0.0, %v353
    %355 = vdwg.mxu0
    %356 = vmatprep.subr.mxu0 %v204
    %357 = vmatpush1.msra.mxu0 %v203
    %358 = vmatprep.subr.mxu0 %v206
    %359 = vmatpush1.msra.mxu0 %v205
    %360 = vmatprep.subr.mxu0 %v208
    %361 = vmatpush1.msra.mxu0 %v207
    %362 = vmatprep.subr.mxu0 %v210
    %363 = vmatpush1.msra.mxu0 %v209
    %364 = vmatprep.subr.mxu0 %v212
    %365 = vmatpush1.msra.mxu0 %v211
    %366 = vmatprep.subr.mxu0 %v214
    %367 = vmatpush1.msra.mxu0 %v213
    %368 = vmatprep.subr.mxu0 %v216
    %369 = vmatpush1.msra.mxu0 %v215
    %370 = vmatprep.subr.mxu0 %v218
    %371 = vmatpush1.msra.mxu0 %v217
    %372 = vmatprep.subr.mxu0 %v220
    %373 = vmatpush1.msra.mxu0 %v219
    %374 = vmatprep.subr.mxu0 %v222
    %375 = vmatpush1.msra.mxu0 %v221
    %376 = vmatprep.subr.mxu0 %v224
    %377 = vmatpush1.msra.mxu0 %v223
    %378 = vmatprep.subr.mxu0 %v226
    %379 = vmatpush1.msra.mxu0 %v225
    %380 = vmatprep.subr.mxu0 %v228
    %381 = vmatpush1.msra.mxu0 %v227
    %382 = vmatprep.subr.mxu0 %v230
    %383 = vmatpush1.msra.mxu0 %v229
    %384 = vmatprep.subr.mxu0 %v232
    %385 = vmatpush1.msra.mxu0 %v231
    %386 = vmatprep.subr.mxu0 %v234
    %387 = vmatpush1.msra.mxu0 %v233
    %388 = vmatprep.subr.mxu0 0.0
    %389 = vmatpush1.msra.mxu0 0.0
    %390 = vmatprep.subr.mxu0 0.0
    %391 = vmatpush1.msra.mxu0 0.0
    %392 = vmatprep.subr.mxu0 0.0
    %393 = vmatpush1.msra.mxu0 0.0
    %394 = vmatprep.subr.mxu0 0.0
    %395 = vmatpush1.msra.mxu0 0.0
    %396 = vmatprep.subr.mxu0 0.0
    %397 = vmatpush1.msra.mxu0 0.0
    %398 = vmatprep.subr.mxu0 0.0
    %399 = vmatpush1.msra.mxu0 0.0
    %400 = vmatprep.subr.mxu0 0.0
    %401 = vmatpush1.msra.mxu0 0.0
    %402 = vmatprep.subr.mxu0 0.0
    %403 = vmatpush1.msra.mxu0 0.0
    %404 = vmatprep.subr.mxu0 0.0
    %405 = vmatpush1.msra.mxu0 0.0
    %406 = vmatprep.subr.mxu0 0.0
    %407 = vmatpush1.msra.mxu0 0.0
    %408 = vmatprep.subr.mxu0 0.0
    %409 = vmatpush1.msra.mxu0 0.0
    %410 = vmatprep.subr.mxu0 0.0
    %411 = vmatpush1.msra.mxu0 0.0
    %412 = vmatprep.subr.mxu0 0.0
    %413 = vmatpush1.msra.mxu0 0.0
    %414 = vmatprep.subr.mxu0 0.0
    %415 = vmatpush1.msra.mxu0 0.0
    %416 = vmatprep.subr.mxu0 0.0
    %417 = vmatpush1.msra.mxu0 0.0
    %418 = vmatprep.subr.mxu0 0.0
    %419 = vmatpush1.msra.mxu0 0.0
    %420 = vmatprep.mubr.f32.mxu0 0.0
    %421 = vmatmul.mubr.f32.gmra.mrb[0].mxu0 %v145
    %v422 = vpop.f32.mrb[0].mxu0
    %v423 = vadd.f32 %v334, %v422
    %v424 = vpop.f32.mrb[0].mxu0
    %v425 = vadd.f32 %v336, %v424
    %426 = vmatprep.mubr.f32.mxu0 0.0
    %427 = vmatmul.mubr.f32.gmra.mrb[0].mxu0 %v150
    %v428 = vpop.f32.mrb[0].mxu0
    %v429 = vadd.f32 %v340, %v428
    %v430 = vpop.f32.mrb[0].mxu0
    %v431 = vadd.f32 %v342, %v430
    %432 = vmatprep.mubr.f32.mxu0 0.0
    %433 = vmatmul.mubr.f32.gmra.mrb[0].mxu0 %v155
    %v434 = vpop.f32.mrb[0].mxu0
    %v435 = vadd.f32 %v346, %v434
    %v436 = vpop.f32.mrb[0].mxu0
    %v437 = vadd.f32 %v348, %v436
    %438 = vmatprep.mubr.f32.mxu0 0.0
    %439 = vmatmul.mubr.f32.gmra.mrb[0].mxu0 %v160
    %v440 = vpop.f32.mrb[0].mxu0
    %v441 = vadd.f32 %v352, %v440
    %v442 = vpop.f32.mrb[0].mxu0
    %v443 = vadd.f32 %v354, %v442
    %444 = vdwg.mxu0
    %v445 = vld [vmem:[%s1 + $0x2c0] sm:$0xff]
    %v446 = vld [vmem:[%s1 + $0x2c8] sm:$0xff]
    %v447 = vld [vmem:[%s1 + $0x2d0] sm:$0xff]
    %v448 = vld [vmem:[%s1 + $0x2d8] sm:$0xff]
    %v449 = vld [vmem:[%s1 + $0x2e0] sm:$0xff]
    %v450 = vld [vmem:[%s1 + $0x2e8] sm:$0xff]
    %v451 = vld [vmem:[%s1 + $0x2f0] sm:$0xff]
    %v452 = vld [vmem:[%s1 + $0x2f8] sm:$0xff]
    %v453 = vld [vmem:[%s1 + $0x300] sm:$0xff]
    %v454 = vld [vmem:[%s1 + $0x308] sm:$0xff]
    %v455 = vld [vmem:[%s1 + $0x310] sm:$0xff]
    %v456 = vld [vmem:[%s1 + $0x318] sm:$0xff]
    %v457 = vld [vmem:[%s1 + $0x320] sm:$0xff]
    %v458 = vld [vmem:[%s1 + $0x328] sm:$0xff]
    %v459 = vld [vmem:[%s1 + $0x330] sm:$0xff]
    %v460 = vld [vmem:[%s1 + $0x338] sm:$0xff]
    %v461 = vld [vmem:[%s1 + $0x340] sm:$0xff]
    %v462 = vld [vmem:[%s1 + $0x348] sm:$0xff]
    %v463 = vld [vmem:[%s1 + $0x350] sm:$0xff]
    %v464 = vld [vmem:[%s1 + $0x358] sm:$0xff]
    %v465 = vld [vmem:[%s1 + $0x360] sm:$0xff]
    %v466 = vld [vmem:[%s1 + $0x368] sm:$0xff]
    %v467 = vld [vmem:[%s1 + $0x370] sm:$0xff]
    %v468 = vld [vmem:[%s1 + $0x378] sm:$0xff]
    %v469 = vld [vmem:[%s1 + $0x380] sm:$0xff]
    %v470 = vld [vmem:[%s1 + $0x388] sm:$0xff]
    %v471 = vld [vmem:[%s1 + $0x390] sm:$0xff]
    %v472 = vld [vmem:[%s1 + $0x398] sm:$0xff]
    %v473 = vld [vmem:[%s1 + $0x3a0] sm:$0xff]
    %v474 = vld [vmem:[%s1 + $0x3a8] sm:$0xff]
    %v475 = vld [vmem:[%s1 + $0x3b0] sm:$0xff]
    %v476 = vld [vmem:[%s1 + $0x3b8] sm:$0xff]
    %477 = vmatprep.subr.mxu0 %v446
    %478 = vmatpush1.msra.mxu0 %v445
    %479 = vmatprep.subr.mxu0 %v448
    %480 = vmatpush1.msra.mxu0 %v447
    %481 = vmatprep.subr.mxu0 %v450
    %482 = vmatpush1.msra.mxu0 %v449
    %483 = vmatprep.subr.mxu0 %v452
    %484 = vmatpush1.msra.mxu0 %v451
    %485 = vmatprep.subr.mxu0 %v454
    %486 = vmatpush1.msra.mxu0 %v453
    %487 = vmatprep.subr.mxu0 %v456
    %488 = vmatpush1.msra.mxu0 %v455
    %489 = vmatprep.subr.mxu0 %v458
    %490 = vmatpush1.msra.mxu0 %v457
    %491 = vmatprep.subr.mxu0 %v460
    %492 = vmatpush1.msra.mxu0 %v459
    %493 = vmatprep.subr.mxu0 %v462
    %494 = vmatpush1.msra.mxu0 %v461
    %495 = vmatprep.subr.mxu0 %v464
    %496 = vmatpush1.msra.mxu0 %v463
    %497 = vmatprep.subr.mxu0 %v466
    %498 = vmatpush1.msra.mxu0 %v465
    %499 = vmatprep.subr.mxu0 %v468
    %500 = vmatpush1.msra.mxu0 %v467
    %501 = vmatprep.subr.mxu0 %v470
    %502 = vmatpush1.msra.mxu0 %v469
    %503 = vmatprep.subr.mxu0 %v472
    %504 = vmatpush1.msra.mxu0 %v471
    %505 = vmatprep.subr.mxu0 %v474
    %506 = vmatpush1.msra.mxu0 %v473
    %507 = vmatprep.subr.mxu0 %v476
    %508 = vmatpush1.msra.mxu0 %v475
    %509 = vmatprep.subr.mxu0 0.0
    %510 = vmatpush1.msra.mxu0 0.0
    %511 = vmatprep.subr.mxu0 0.0
    %512 = vmatpush1.msra.mxu0 0.0
    %513 = vmatprep.subr.mxu0 0.0
    %514 = vmatpush1.msra.mxu0 0.0
    %515 = vmatprep.subr.mxu0 0.0
    %516 = vmatpush1.msra.mxu0 0.0
    %517 = vmatprep.subr.mxu0 0.0
    %518 = vmatpush1.msra.mxu0 0.0
    %519 = vmatprep.subr.mxu0 0.0
    %520 = vmatpush1.msra.mxu0 0.0
    %521 = vmatprep.subr.mxu0 0.0
    %522 = vmatpush1.msra.mxu0 0.0
    %523 = vmatprep.subr.mxu0 0.0
    %524 = vmatpush1.msra.mxu0 0.0
    %525 = vmatprep.subr.mxu0 0.0
    %526 = vmatpush1.msra.mxu0 0.0
    %527 = vmatprep.subr.mxu0 0.0
    %528 = vmatpush1.msra.mxu0 0.0
    %529 = vmatprep.subr.mxu0 0.0
    %530 = vmatpush1.msra.mxu0 0.0
    %531 = vmatprep.subr.mxu0 0.0
    %532 = vmatpush1.msra.mxu0 0.0
    %533 = vmatprep.subr.mxu0 0.0
    %534 = vmatpush1.msra.mxu0 0.0
    %535 = vmatprep.subr.mxu0 0.0
    %536 = vmatpush1.msra.mxu0 0.0
    %537 = vmatprep.subr.mxu0 0.0
    %538 = vmatpush1.msra.mxu0 0.0
    %539 = vmatprep.subr.mxu0 0.0
    %540 = vmatpush1.msra.mxu0 0.0
    %541 = vmatprep.mubr.f32.mxu0 0.0
    %542 = vmatmul.mubr.f32.gmra.mrb[0].mxu0 %v185
    %v543 = vpop.f32.mrb[0].mxu0
    %v544 = vadd.f32 0.0, %v543
    %v545 = vpop.f32.mrb[0].mxu0
    %v546 = vadd.f32 0.0, %v545
    %547 = vmatprep.mubr.f32.mxu0 0.0
    %548 = vmatmul.mubr.f32.gmra.mrb[0].mxu0 %v190
    %v549 = vpop.f32.mrb[0].mxu0
    %v550 = vadd.f32 0.0, %v549
    %v551 = vpop.f32.mrb[0].mxu0
    %v552 = vadd.f32 0.0, %v551
    %553 = vmatprep.mubr.f32.mxu0 0.0
    %554 = vmatmul.mubr.f32.gmra.mrb[0].mxu0 %v195
    %v555 = vpop.f32.mrb[0].mxu0
    %v556 = vadd.f32 0.0, %v555
    %v557 = vpop.f32.mrb[0].mxu0
    %v558 = vadd.f32 0.0, %v557
    %559 = vmatprep.mubr.f32.mxu0 0.0
    %560 = vmatmul.mubr.f32.gmra.mrb[0].mxu0 %v200
    %v561 = vpop.f32.mrb[0].mxu0
    %v562 = vadd.f32 0.0, %v561
    %v563 = vpop.f32.mrb[0].mxu0
    %v564 = vadd.f32 0.0, %v563
    %565 = vdwg.mxu0
    %v566 = vadd.f32 %v423, %v544
    %v567 = vadd.f32 %v425, %v546
    %v568 = vadd.f32 %v429, %v550
    %v569 = vadd.f32 %v431, %v552
    %v570 = vadd.f32 %v435, %v556
    %v571 = vadd.f32 %v437, %v558
    %v572 = vadd.f32 %v441, %v562
    %v573 = vadd.f32 %v443, %v564
    %v574 = vadd.f32 %v566, %v568
    %v575 = vadd.f32 %v574, %v570
    %v576 = vadd.f32 %v575, %v572
    %v577 = vrot.slane %v576, 4
    %v578 = vadd.f32 %v576, %v577
    %v579 = vrot.slane %v578, 2
    %v580 = vadd.f32 %v578, %v579
    %v581 = vrot.slane %v580, 1
    %v582 = vadd.f32 %v580, %v581
    %vm583 = vcmask 916480
    %v584 = vsel %vm583, %v567, 0.0
    %v585 = vsel %vm583, %v569, 0.0
    %v586 = vadd.f32 %v584, %v585
    %v587 = vsel %vm583, %v571, 0.0
    %v588 = vadd.f32 %v586, %v587
    %v589 = vsel %vm583, %v573, 0.0
    %v590 = vadd.f32 %v588, %v589
    %v591 = vrot.slane %v590, 4
    %v592 = vadd.f32 %v590, %v591
    %v593 = vrot.slane %v592, 2
    %v594 = vadd.f32 %v592, %v593
    %v595 = vrot.slane %v594, 1
    %v596 = vadd.f32 %v594, %v595
    %v597 = vmul.f32 %v566, %v566
    %v598 = vmul.f32 %v567, %v567
    %v599 = vmul.f32 %v568, %v568
    %v600 = vmul.f32 %v569, %v569
    %v601 = vmul.f32 %v570, %v570
    %v602 = vmul.f32 %v571, %v571
    %v603 = vmul.f32 %v572, %v572
    %v604 = vmul.f32 %v573, %v573
    %v605 = vadd.f32 %v597, %v599
    %v606 = vadd.f32 %v605, %v601
    %v607 = vadd.f32 %v606, %v603
    %v608 = vrot.slane %v607, 4
    %v609 = vadd.f32 %v607, %v608
    %v610 = vrot.slane %v609, 2
    %v611 = vadd.f32 %v609, %v610
    %v612 = vrot.slane %v611, 1
    %v613 = vadd.f32 %v611, %v612
    %v614 = vsel %vm583, %v598, 0.0
    %v615 = vsel %vm583, %v600, 0.0
    %v616 = vadd.f32 %v614, %v615
    %v617 = vsel %vm583, %v602, 0.0
    %v618 = vadd.f32 %v616, %v617
    %v619 = vsel %vm583, %v604, 0.0
    %v620 = vadd.f32 %v618, %v619
    %v621 = vrot.slane %v620, 4
    %v622 = vadd.f32 %v620, %v621
    %v623 = vrot.slane %v622, 2
    %v624 = vadd.f32 %v622, %v623
    %v625 = vrot.slane %v624, 1
    %v626 = vadd.f32 %v624, %v625
    %vm627 = vcmask 1040384
    %v628 = vsel %vm627, %v582, %v613
    %v629 = vsel %vm627, %v596, %v626
    %v630 = vld [vmem:[%s1 + $0x3c0] sm:$0xff]
    %v631 = vld [vmem:[%s1 + $0x3d0] sm:$0xff]
    %v632 = vld [vmem:[%s1 + $0x3e0] sm:$0xff]
    %v633 = vld [vmem:[%s1 + $0x3f0] sm:$0xff]
    %v634 = vld [vmem:[%s1 + $0x400] sm:$0xff]
    %v635 = vld [vmem:[%s1 + $0x410] sm:$0xff]
    %v636 = vld [vmem:[%s1 + $0x420] sm:$0xff]
    %v637 = vld [vmem:[%s1 + $0x430] sm:$0xff]
    %v638 = vld [vmem:[%s1 + $0x440] sm:$0xff]
    %v639 = vld [vmem:[%s1 + $0x450] sm:$0xff]
    %v640 = vld [vmem:[%s1 + $0x460] sm:$0xff]
    %v641 = vld [vmem:[%s1 + $0x470] sm:$0xff]
    %v642 = vld [vmem:[%s1 + $0x480] sm:$0xff]
    %v643 = vld [vmem:[%s1 + $0x490] sm:$0xff]
    %v644 = vld [vmem:[%s1 + $0x4a0] sm:$0xff]
    %v645 = vld [vmem:[%s1 + $0x4b0] sm:$0xff]
    %v646 = vld [vmem:[%s1 + $0x4c0] sm:$0xff]
    %v647 = vld [vmem:[%s1 + $0x4d0] sm:$0xff]
    %v648 = vld [vmem:[%s1 + $0x4e0] sm:$0xff]
    %v649 = vld [vmem:[%s1 + $0x4f0] sm:$0xff]
    %v650 = vld [vmem:[%s1 + $0x500] sm:$0xff]
    %v651 = vld [vmem:[%s1 + $0x510] sm:$0xff]
    %v652 = vld [vmem:[%s1 + $0x520] sm:$0xff]
    %v653 = vld [vmem:[%s1 + $0x530] sm:$0xff]
    %v654 = vld [vmem:[%s1 + $0x540] sm:$0xff]
    %v655 = vld [vmem:[%s1 + $0x550] sm:$0xff]
    %v656 = vld [vmem:[%s1 + $0x560] sm:$0xff]
    %v657 = vld [vmem:[%s1 + $0x570] sm:$0xff]
    %v658 = vld [vmem:[%s1 + $0x580] sm:$0xff]
    %v659 = vld [vmem:[%s1 + $0x590] sm:$0xff]
    %v661 = vsel %vm583, %v629, 0
    %663 = vmatprep.subr.mxu0 0.0
    %664 = vmatpush1.msra.mxu0 %v630
    %665 = vmatprep.subr.mxu0 0.0
    %666 = vmatpush1.msra.mxu0 %v631
    %667 = vmatprep.subr.mxu0 0.0
    %668 = vmatpush1.msra.mxu0 %v632
    %669 = vmatprep.subr.mxu0 0.0
    %670 = vmatpush1.msra.mxu0 %v633
    %671 = vmatprep.subr.mxu0 0.0
    %672 = vmatpush1.msra.mxu0 %v634
    %673 = vmatprep.subr.mxu0 0.0
    %674 = vmatpush1.msra.mxu0 %v635
    %675 = vmatprep.subr.mxu0 0.0
    %676 = vmatpush1.msra.mxu0 %v636
    %677 = vmatprep.subr.mxu0 0.0
    %678 = vmatpush1.msra.mxu0 %v637
    %679 = vmatprep.subr.mxu0 0.0
    %680 = vmatpush1.msra.mxu0 %v638
    %681 = vmatprep.subr.mxu0 0.0
    %682 = vmatpush1.msra.mxu0 %v639
    %683 = vmatprep.subr.mxu0 0.0
    %684 = vmatpush1.msra.mxu0 %v640
    %685 = vmatprep.subr.mxu0 0.0
    %686 = vmatpush1.msra.mxu0 %v641
    %687 = vmatprep.subr.mxu0 0.0
    %688 = vmatpush1.msra.mxu0 %v642
    %689 = vmatprep.subr.mxu0 0.0
    %690 = vmatpush1.msra.mxu0 %v643
    %691 = vmatprep.subr.mxu0 0.0
    %692 = vmatpush1.msra.mxu0 %v644
    %693 = vmatprep.subr.mxu0 0.0
    %694 = vmatpush1.msra.mxu0 %v645
    %695 = vmatprep.subr.mxu0 0.0
    %696 = vmatpush1.msra.mxu0 %v646
    %697 = vmatprep.subr.mxu0 0.0
    %698 = vmatpush1.msra.mxu0 %v647
    %699 = vmatprep.subr.mxu0 0.0
    %700 = vmatpush1.msra.mxu0 %v648
    %701 = vmatprep.subr.mxu0 0.0
    %702 = vmatpush1.msra.mxu0 %v649
    %703 = vmatprep.subr.mxu0 0.0
    %704 = vmatpush1.msra.mxu0 %v650
    %705 = vmatprep.subr.mxu0 0.0
    %706 = vmatpush1.msra.mxu0 %v651
    %707 = vmatprep.subr.mxu0 0.0
    %708 = vmatpush1.msra.mxu0 %v652
    %709 = vmatprep.subr.mxu0 0.0
    %710 = vmatpush1.msra.mxu0 %v653
    %711 = vmatprep.subr.mxu0 0.0
    %712 = vmatpush1.msra.mxu0 %v654
    %713 = vmatprep.subr.mxu0 0.0
    %714 = vmatpush1.msra.mxu0 %v655
    %715 = vmatprep.subr.mxu0 0.0
    %716 = vmatpush1.msra.mxu0 %v656
    %717 = vmatprep.subr.mxu0 0.0
    %718 = vmatpush1.msra.mxu0 %v657
    %719 = vmatprep.subr.mxu0 0.0
    %720 = vmatpush1.msra.mxu0 %v658
    %721 = vmatprep.subr.mxu0 0.0
    %722 = vmatpush1.msra.mxu0 %v659
    %723 = vmatprep.subr.mxu0 0.0
    %724 = vmatpush1.msra.mxu0 0.0
    %725 = vmatprep.subr.mxu0 0.0
    %726 = vmatpush1.msra.mxu0 0.0
    %727 = vmatprep.mubr.f32.mxu0 %v661
    %728 = vmatmul.mubr.f32.gmra.mrb[0].mxu0 %v628
    %v729 = vpop.f32.mrb[0].mxu0
    %v730 = vadd.f32 0.0, %v729
    %v731 = vpop.f32.mrb[0].mxu0
    %732 = vdwg.mxu0
    %v733 = vmul.f32 %v730, 0.0022222223
    %v734 = vmul.f32 %v733, %v733
    %v736 = vrot.slane %v734, 7
    %v738 = vsub.f32 %v733, %v736
    %v739 = vmax.f32 %v738, 0.0
    %v740 = vld [vmem:[%s1 + $0x5c0] sm:$0x3]
    %v741 = vadd.f32 %v739, 1e-05
    %v742 = vrsqrt.pop %v741
    %v744 = vrot.slane %v742, 1
    %v746 = vmul.f32 %v740, %v744
    %v747 = vmul.f32 %v733, %v746
    %v749 = vrot.slane %v747, 7
    %v751 = vsub.f32 %v740, %v749
    %v752 = vsel %vm627, %v746, %v751
    %v753 = vld [vmem:[%s1 + $0x5a0] sm:$0xff]
    %v754 = vld [vmem:[%s1 + $0x5a8] sm:$0xff]
    %v755 = vld [vmem:[%s1 + $0x5b0] sm:$0xff]
    %v756 = vld [vmem:[%s1 + $0x5b8] sm:$0xff]
    %vm757 = vcmask 130048
    %v759 = vsel %vm757, %v752, 0
    %761 = vmatprep.subr.mxu0 %v754
    %762 = vmatpush1.msra.mxu0 %v753
    %763 = vmatprep.subr.mxu0 %v756
    %764 = vmatpush1.msra.mxu0 %v755
    %765 = vmatprep.subr.mxu0 0.0
    %766 = vmatpush1.msra.mxu0 0.0
    %767 = vmatprep.subr.mxu0 0.0
    %768 = vmatpush1.msra.mxu0 0.0
    %769 = vmatprep.subr.mxu0 0.0
    %770 = vmatpush1.msra.mxu0 0.0
    %771 = vmatprep.subr.mxu0 0.0
    %772 = vmatpush1.msra.mxu0 0.0
    %773 = vmatprep.subr.mxu0 0.0
    %774 = vmatpush1.msra.mxu0 0.0
    %775 = vmatprep.subr.mxu0 0.0
    %776 = vmatpush1.msra.mxu0 0.0
    %777 = vmatprep.subr.mxu0 0.0
    %778 = vmatpush1.msra.mxu0 0.0
    %779 = vmatprep.subr.mxu0 0.0
    %780 = vmatpush1.msra.mxu0 0.0
    %781 = vmatprep.subr.mxu0 0.0
    %782 = vmatpush1.msra.mxu0 0.0
    %783 = vmatprep.subr.mxu0 0.0
    %784 = vmatpush1.msra.mxu0 0.0
    %785 = vmatprep.subr.mxu0 0.0
    %786 = vmatpush1.msra.mxu0 0.0
    %787 = vmatprep.subr.mxu0 0.0
    %788 = vmatpush1.msra.mxu0 0.0
    %789 = vmatprep.subr.mxu0 0.0
    %790 = vmatpush1.msra.mxu0 0.0
    %791 = vmatprep.subr.mxu0 0.0
    %792 = vmatpush1.msra.mxu0 0.0
    %793 = vmatprep.subr.mxu0 0.0
    %794 = vmatpush1.msra.mxu0 0.0
    %795 = vmatprep.subr.mxu0 0.0
    %796 = vmatpush1.msra.mxu0 0.0
    %797 = vmatprep.subr.mxu0 0.0
    %798 = vmatpush1.msra.mxu0 0.0
    %799 = vmatprep.subr.mxu0 0.0
    %800 = vmatpush1.msra.mxu0 0.0
    %801 = vmatprep.subr.mxu0 0.0
    %802 = vmatpush1.msra.mxu0 0.0
    %803 = vmatprep.subr.mxu0 0.0
    %804 = vmatpush1.msra.mxu0 0.0
    %805 = vmatprep.subr.mxu0 0.0
    %806 = vmatpush1.msra.mxu0 0.0
    %807 = vmatprep.subr.mxu0 0.0
    %808 = vmatpush1.msra.mxu0 0.0
    %809 = vmatprep.subr.mxu0 0.0
    %810 = vmatpush1.msra.mxu0 0.0
    %811 = vmatprep.subr.mxu0 0.0
    %812 = vmatpush1.msra.mxu0 0.0
    %813 = vmatprep.subr.mxu0 0.0
    %814 = vmatpush1.msra.mxu0 0.0
    %815 = vmatprep.subr.mxu0 0.0
    %816 = vmatpush1.msra.mxu0 0.0
    %817 = vmatprep.subr.mxu0 0.0
    %818 = vmatpush1.msra.mxu0 0.0
    %819 = vmatprep.subr.mxu0 0.0
    %820 = vmatpush1.msra.mxu0 0.0
    %821 = vmatprep.subr.mxu0 0.0
    %822 = vmatpush1.msra.mxu0 0.0
    %823 = vmatprep.subr.mxu0 0.0
    %824 = vmatpush1.msra.mxu0 0.0
    %825 = vmatprep.mubr.f32.mxu0 0.0
    %826 = vmatmul.mubr.f32.gmra.mrb[0].mxu0 %v759
    %v827 = vpop.f32.mrb[0].mxu0
    %v828 = vadd.f32 0.0, %v827
    %v829 = vpop.f32.mrb[0].mxu0
    %v830 = vadd.f32 0.0, %v829
    %831 = vdwg.mxu0
    %v832 = vlaneseq
    %v833 = vshrl.u32 %v832, 7
    %v834 = vsub.s32 0, %v833
    %v835 = vrot.slane %v828, %v834
    %v836 = vlaneseq
    %v837 = vshrl.u32 %v836, 7
    %v838 = vsub.s32 0, %v837
    %v839 = vrot.slane %v830, %v838
    %v840 = vmul.f32 %v566, %v835
    %v841 = vmul.f32 %v567, %v839
    %v842 = vmul.f32 %v568, %v835
    %v843 = vmul.f32 %v569, %v839
    %v844 = vmul.f32 %v570, %v835
    %v845 = vmul.f32 %v571, %v839
    %v846 = vmul.f32 %v572, %v835
    %v847 = vmul.f32 %v573, %v839
    %v848 = vlaneseq
    %v849 = vshrl.u32 %v848, 7
    %v850 = vsub.s32 1, %v849
    %v851 = vrot.slane %v828, %v850
    %v852 = vlaneseq
    %v853 = vshrl.u32 %v852, 7
    %v854 = vsub.s32 1, %v853
    %v855 = vrot.slane %v830, %v854
    %v856 = vadd.f32 %v840, %v851
    %v857 = vadd.f32 %v841, %v855
    %v858 = vadd.f32 %v842, %v851
    %v859 = vadd.f32 %v843, %v855
    %v860 = vadd.f32 %v844, %v851
    %v861 = vadd.f32 %v845, %v855
    %v862 = vadd.f32 %v846, %v851
    %v863 = vadd.f32 %v847, %v855
    %v864 = vmax.f32 %v856, 0.0
    %v865 = vmax.f32 %v857, 0.0
    %v866 = vmax.f32 %v858, 0.0
    %v867 = vmax.f32 %v859, 0.0
    %v868 = vmax.f32 %v860, 0.0
    %v869 = vmax.f32 %v861, 0.0
    %v870 = vmax.f32 %v862, 0.0
    %v871 = vmax.f32 %v863, 0.0
    %v872 = vld [vmem:[%s2] sm:$0xff]
    %v873 = vld [vmem:[%s2 + $0x8] sm:$0xff]
    %v874 = vld [vmem:[%s2 + $0x10] sm:$0xff]
    %v875 = vld [vmem:[%s2 + $0x18] sm:$0xff]
    %v876 = vld [vmem:[%s2 + $0x20] sm:$0xff]
    %v877 = vld [vmem:[%s2 + $0x28] sm:$0xff]
    %vm878 = vcmask 261120
    %v880 = vsel %vm878, %v872, 0
    %v883 = vsel %vm878, %v873, 0
    %v886 = vsel %vm878, %v874, 0
    %v889 = vsel %vm878, %v875, 0
    %v892 = vsel %vm878, %v876, 0
    %v895 = vsel %vm878, %v877, 0
    %897 = vmatprep.subr.mxu0 %v865
    %898 = vmatpush1.msra.mxu0 %v864
    %899 = vmatprep.subr.mxu0 %v867
    %900 = vmatpush1.msra.mxu0 %v866
    %901 = vmatprep.subr.mxu0 %v869
    %902 = vmatpush1.msra.mxu0 %v868
    %903 = vmatprep.subr.mxu0 %v871
    %904 = vmatpush1.msra.mxu0 %v870
    %905 = vmatprep.subr.mxu0 0.0
    %906 = vmatpush1.msra.mxu0 0.0
    %907 = vmatprep.subr.mxu0 0.0
    %908 = vmatpush1.msra.mxu0 0.0
    %909 = vmatprep.subr.mxu0 0.0
    %910 = vmatpush1.msra.mxu0 0.0
    %911 = vmatprep.subr.mxu0 0.0
    %912 = vmatpush1.msra.mxu0 0.0
    %913 = vmatprep.subr.mxu0 0.0
    %914 = vmatpush1.msra.mxu0 0.0
    %915 = vmatprep.subr.mxu0 0.0
    %916 = vmatpush1.msra.mxu0 0.0
    %917 = vmatprep.subr.mxu0 0.0
    %918 = vmatpush1.msra.mxu0 0.0
    %919 = vmatprep.subr.mxu0 0.0
    %920 = vmatpush1.msra.mxu0 0.0
    %921 = vmatprep.subr.mxu0 0.0
    %922 = vmatpush1.msra.mxu0 0.0
    %923 = vmatprep.subr.mxu0 0.0
    %924 = vmatpush1.msra.mxu0 0.0
    %925 = vmatprep.subr.mxu0 0.0
    %926 = vmatpush1.msra.mxu0 0.0
    %927 = vmatprep.subr.mxu0 0.0
    %928 = vmatpush1.msra.mxu0 0.0
    %929 = vmatprep.subr.mxu0 0.0
    %930 = vmatpush1.msra.mxu0 0.0
    %931 = vmatprep.subr.mxu0 0.0
    %932 = vmatpush1.msra.mxu0 0.0
    %933 = vmatprep.subr.mxu0 0.0
    %934 = vmatpush1.msra.mxu0 0.0
    %935 = vmatprep.subr.mxu0 0.0
    %936 = vmatpush1.msra.mxu0 0.0
    %937 = vmatprep.subr.mxu0 0.0
    %938 = vmatpush1.msra.mxu0 0.0
    %939 = vmatprep.subr.mxu0 0.0
    %940 = vmatpush1.msra.mxu0 0.0
    %941 = vmatprep.subr.mxu0 0.0
    %942 = vmatpush1.msra.mxu0 0.0
    %943 = vmatprep.subr.mxu0 0.0
    %944 = vmatpush1.msra.mxu0 0.0
    %945 = vmatprep.subr.mxu0 0.0
    %946 = vmatpush1.msra.mxu0 0.0
    %947 = vmatprep.subr.mxu0 0.0
    %948 = vmatpush1.msra.mxu0 0.0
    %949 = vmatprep.subr.mxu0 0.0
    %950 = vmatpush1.msra.mxu0 0.0
    %951 = vmatprep.subr.mxu0 0.0
    %952 = vmatpush1.msra.mxu0 0.0
    %953 = vmatprep.subr.mxu0 0.0
    %954 = vmatpush1.msra.mxu0 0.0
    %955 = vmatprep.subr.mxu0 0.0
    %956 = vmatpush1.msra.mxu0 0.0
    %957 = vmatprep.subr.mxu0 0.0
    %958 = vmatpush1.msra.mxu0 0.0
    %959 = vmatprep.subr.mxu0 0.0
    %960 = vmatpush1.msra.mxu0 0.0
    %961 = vmatprep.mubr.f32.mxu0 0.0
    %962 = vmatmul.mubr.f32.gmra.mrb[0].mxu0 %v880
    %v963 = vpop.f32.mrb[0].mxu0
    %v964 = vadd.f32 0.0, %v963
    %v965 = vpop.f32.mrb[0].mxu0
    %v966 = vadd.f32 0.0, %v965
    %967 = vmatprep.mubr.f32.mxu0 0.0
    %968 = vmatmul.mubr.f32.gmra.mrb[0].mxu0 %v883
    %v969 = vpop.f32.mrb[0].mxu0
    %v970 = vadd.f32 0.0, %v969
    %v971 = vpop.f32.mrb[0].mxu0
    %v972 = vadd.f32 0.0, %v971
    %973 = vmatprep.mubr.f32.mxu0 0.0
    %974 = vmatmul.mubr.f32.gmra.mrb[0].mxu0 %v886
    %v975 = vpop.f32.mrb[0].mxu0
    %v976 = vadd.f32 0.0, %v975
    %v977 = vpop.f32.mrb[0].mxu0
    %v978 = vadd.f32 0.0, %v977
    %979 = vmatprep.mubr.f32.mxu0 0.0
    %980 = vmatmul.mubr.f32.gmra.mrb[0].mxu0 %v889
    %v981 = vpop.f32.mrb[0].mxu0
    %v982 = vadd.f32 0.0, %v981
    %v983 = vpop.f32.mrb[0].mxu0
    %v984 = vadd.f32 0.0, %v983
    %985 = vmatprep.mubr.f32.mxu0 0.0
    %986 = vmatmul.mubr.f32.gmra.mrb[0].mxu0 %v892
    %v987 = vpop.f32.mrb[0].mxu0
    %v988 = vadd.f32 0.0, %v987
    %v989 = vpop.f32.mrb[0].mxu0
    %v990 = vadd.f32 0.0, %v989
    %991 = vmatprep.mubr.f32.mxu0 0.0
    %992 = vmatmul.mubr.f32.gmra.mrb[0].mxu0 %v895
    %v993 = vpop.f32.mrb[0].mxu0
    %v994 = vadd.f32 0.0, %v993
    %v995 = vpop.f32.mrb[0].mxu0
    %v996 = vadd.f32 0.0, %v995
    %997 = vdwg.mxu0
    %v998 = vld [vmem:[%s2 + $0x30] sm:$0xff]
    %v999 = vld [vmem:[%s2 + $0x38] sm:$0xff]
    %v1000 = vld [vmem:[%s2 + $0x40] sm:$0xff]
    %v1001 = vld [vmem:[%s2 + $0x48] sm:$0xff]
    %v1002 = vld [vmem:[%s2 + $0x50] sm:$0xff]
    %v1003 = vld [vmem:[%s2 + $0x58] sm:$0xff]
    %v1004 = vld [vmem:[%s2 + $0x60] sm:$0xff]
    %v1005 = vld [vmem:[%s2 + $0x68] sm:$0xff]
    %v1006 = vld [vmem:[%s2 + $0x70] sm:$0xff]
    %v1007 = vld [vmem:[%s2 + $0x78] sm:$0xff]
    %v1008 = vld [vmem:[%s2 + $0x80] sm:$0xff]
    %v1009 = vld [vmem:[%s2 + $0x88] sm:$0xff]
    %v1010 = vld [vmem:[%s2 + $0x90] sm:$0xff]
    %v1011 = vld [vmem:[%s2 + $0x98] sm:$0xff]
    %v1012 = vld [vmem:[%s2 + $0xa0] sm:$0xff]
    %v1013 = vld [vmem:[%s2 + $0xa8] sm:$0xff]
    %v1014 = vld [vmem:[%s2 + $0xb0] sm:$0xff]
    %v1015 = vld [vmem:[%s2 + $0xb8] sm:$0xff]
    %v1016 = vld [vmem:[%s2 + $0xc0] sm:$0xff]
    %v1017 = vld [vmem:[%s2 + $0xc8] sm:$0xff]
    %v1018 = vld [vmem:[%s2 + $0xd0] sm:$0xff]
    %v1019 = vld [vmem:[%s2 + $0xd8] sm:$0xff]
    %v1020 = vld [vmem:[%s2 + $0xe0] sm:$0xff]
    %v1021 = vld [vmem:[%s2 + $0xe8] sm:$0xff]
    %v1022 = vld [vmem:[%s2 + $0xf0] sm:$0xff]
    %v1023 = vld [vmem:[%s2 + $0xf8] sm:$0xff]
    %v1024 = vld [vmem:[%s2 + $0x100] sm:$0xff]
    %v1025 = vld [vmem:[%s2 + $0x108] sm:$0xff]
    %v1026 = vld [vmem:[%s2 + $0x110] sm:$0xff]
    %v1027 = vld [vmem:[%s2 + $0x118] sm:$0xff]
    %v1028 = vld [vmem:[%s2 + $0x120] sm:$0xff]
    %v1029 = vld [vmem:[%s2 + $0x128] sm:$0xff]
    %v1030 = vld [vmem:[%s2 + $0x130] sm:$0xff]
    %v1031 = vld [vmem:[%s2 + $0x138] sm:$0xff]
    %v1032 = vld [vmem:[%s2 + $0x140] sm:$0xff]
    %v1033 = vld [vmem:[%s2 + $0x148] sm:$0xff]
    %v1034 = vld [vmem:[%s2 + $0x150] sm:$0xff]
    %v1035 = vld [vmem:[%s2 + $0x158] sm:$0xff]
    %v1036 = vld [vmem:[%s2 + $0x160] sm:$0xff]
    %v1037 = vld [vmem:[%s2 + $0x168] sm:$0xff]
    %v1038 = vld [vmem:[%s2 + $0x170] sm:$0xff]
    %v1039 = vld [vmem:[%s2 + $0x178] sm:$0xff]
    %v1040 = vld [vmem:[%s2 + $0x180] sm:$0xff]
    %v1041 = vld [vmem:[%s2 + $0x188] sm:$0xff]
    %v1042 = vld [vmem:[%s2 + $0x190] sm:$0xff]
    %v1043 = vld [vmem:[%s2 + $0x198] sm:$0xff]
    %v1044 = vld [vmem:[%s2 + $0x1a0] sm:$0xff]
    %v1045 = vld [vmem:[%s2 + $0x1a8] sm:$0xff]
    %v1046 = vld [vmem:[%s2 + $0x1b0] sm:$0xff]
    %v1047 = vld [vmem:[%s2 + $0x1b8] sm:$0xff]
    %v1048 = vld [vmem:[%s2 + $0x1c0] sm:$0xff]
    %v1049 = vld [vmem:[%s2 + $0x1c8] sm:$0xff]
    %v1050 = vld [vmem:[%s2 + $0x1d0] sm:$0xff]
    %v1051 = vld [vmem:[%s2 + $0x1d8] sm:$0xff]
    %v1052 = vld [vmem:[%s2 + $0x1e0] sm:$0xff]
    %v1053 = vld [vmem:[%s2 + $0x1e8] sm:$0xff]
    %v1054 = vld [vmem:[%s2 + $0x1f0] sm:$0xff]
    %v1055 = vld [vmem:[%s2 + $0x1f8] sm:$0xff]
    %v1056 = vld [vmem:[%s2 + $0x200] sm:$0xff]
    %v1057 = vld [vmem:[%s2 + $0x208] sm:$0xff]
    %v1059 = vsel %vm583, %v978, 0
    %v1062 = vsel %vm583, %v984, 0
    %1064 = vmatprep.subr.mxu0 0.0
    %1065 = vmatpush1.msra.mxu0 %v1028
    %1066 = vmatprep.subr.mxu0 0.0
    %1067 = vmatpush1.msra.mxu0 %v1029
    %1068 = vmatprep.subr.mxu0 0.0
    %1069 = vmatpush1.msra.mxu0 %v1030
    %1070 = vmatprep.subr.mxu0 0.0
    %1071 = vmatpush1.msra.mxu0 %v1031
    %1072 = vmatprep.subr.mxu0 0.0
    %1073 = vmatpush1.msra.mxu0 %v1032
    %1074 = vmatprep.subr.mxu0 0.0
    %1075 = vmatpush1.msra.mxu0 %v1033
    %1076 = vmatprep.subr.mxu0 0.0
    %1077 = vmatpush1.msra.mxu0 %v1034
    %1078 = vmatprep.subr.mxu0 0.0
    %1079 = vmatpush1.msra.mxu0 %v1035
    %1080 = vmatprep.subr.mxu0 0.0
    %1081 = vmatpush1.msra.mxu0 %v1036
    %1082 = vmatprep.subr.mxu0 0.0
    %1083 = vmatpush1.msra.mxu0 %v1037
    %1084 = vmatprep.subr.mxu0 0.0
    %1085 = vmatpush1.msra.mxu0 %v1038
    %1086 = vmatprep.subr.mxu0 0.0
    %1087 = vmatpush1.msra.mxu0 %v1039
    %1088 = vmatprep.subr.mxu0 0.0
    %1089 = vmatpush1.msra.mxu0 %v1040
    %1090 = vmatprep.subr.mxu0 0.0
    %1091 = vmatpush1.msra.mxu0 %v1041
    %1092 = vmatprep.subr.mxu0 0.0
    %1093 = vmatpush1.msra.mxu0 %v1042
    %1094 = vmatprep.subr.mxu0 0.0
    %1095 = vmatpush1.msra.mxu0 %v1043
    %1096 = vmatprep.subr.mxu0 0.0
    %1097 = vmatpush1.msra.mxu0 %v1044
    %1098 = vmatprep.subr.mxu0 0.0
    %1099 = vmatpush1.msra.mxu0 %v1045
    %1100 = vmatprep.subr.mxu0 0.0
    %1101 = vmatpush1.msra.mxu0 %v1046
    %1102 = vmatprep.subr.mxu0 0.0
    %1103 = vmatpush1.msra.mxu0 %v1047
    %1104 = vmatprep.subr.mxu0 0.0
    %1105 = vmatpush1.msra.mxu0 %v1048
    %1106 = vmatprep.subr.mxu0 0.0
    %1107 = vmatpush1.msra.mxu0 %v1049
    %1108 = vmatprep.subr.mxu0 0.0
    %1109 = vmatpush1.msra.mxu0 %v1050
    %1110 = vmatprep.subr.mxu0 0.0
    %1111 = vmatpush1.msra.mxu0 %v1051
    %1112 = vmatprep.subr.mxu0 0.0
    %1113 = vmatpush1.msra.mxu0 %v1052
    %1114 = vmatprep.subr.mxu0 0.0
    %1115 = vmatpush1.msra.mxu0 %v1053
    %1116 = vmatprep.subr.mxu0 0.0
    %1117 = vmatpush1.msra.mxu0 %v1054
    %1118 = vmatprep.subr.mxu0 0.0
    %1119 = vmatpush1.msra.mxu0 %v1055
    %1120 = vmatprep.subr.mxu0 0.0
    %1121 = vmatpush1.msra.mxu0 %v1056
    %1122 = vmatprep.subr.mxu0 0.0
    %1123 = vmatpush1.msra.mxu0 %v1057
    %1124 = vmatprep.subr.mxu0 0.0
    %1125 = vmatpush1.msra.mxu0 0.0
    %1126 = vmatprep.subr.mxu0 0.0
    %1127 = vmatpush1.msra.mxu0 0.0
    %1128 = vmatprep.mubr.f32.mxu0 %v1059
    %1129 = vmatmul.mubr.f32.gmra.mrb[0].mxu0 %v976
    %v1130 = vpop.f32.mrb[0].mxu0
    %v1131 = vadd.f32 0.0, %v1130
    %v1132 = vpop.f32.mrb[0].mxu0
    %1133 = vmatprep.mubr.f32.mxu0 %v1062
    %1134 = vmatmul.mubr.f32.gmra.mrb[0].mxu0 %v982
    %v1135 = vpop.f32.mrb[0].mxu0
    %v1136 = vadd.f32 0.0, %v1135
    %v1137 = vpop.f32.mrb[0].mxu0
    %1138 = vdwg.mxu0
    %v1140 = vsel %vm583, %v966, 0
    %v1143 = vsel %vm583, %v972, 0
    %1145 = vmatprep.subr.mxu0 0.0
    %1146 = vmatpush1.msra.mxu0 %v998
    %1147 = vmatprep.subr.mxu0 0.0
    %1148 = vmatpush1.msra.mxu0 %v999
    %1149 = vmatprep.subr.mxu0 0.0
    %1150 = vmatpush1.msra.mxu0 %v1000
    %1151 = vmatprep.subr.mxu0 0.0
    %1152 = vmatpush1.msra.mxu0 %v1001
    %1153 = vmatprep.subr.mxu0 0.0
    %1154 = vmatpush1.msra.mxu0 %v1002
    %1155 = vmatprep.subr.mxu0 0.0
    %1156 = vmatpush1.msra.mxu0 %v1003
    %1157 = vmatprep.subr.mxu0 0.0
    %1158 = vmatpush1.msra.mxu0 %v1004
    %1159 = vmatprep.subr.mxu0 0.0
    %1160 = vmatpush1.msra.mxu0 %v1005
    %1161 = vmatprep.subr.mxu0 0.0
    %1162 = vmatpush1.msra.mxu0 %v1006
    %1163 = vmatprep.subr.mxu0 0.0
    %1164 = vmatpush1.msra.mxu0 %v1007
    %1165 = vmatprep.subr.mxu0 0.0
    %1166 = vmatpush1.msra.mxu0 %v1008
    %1167 = vmatprep.subr.mxu0 0.0
    %1168 = vmatpush1.msra.mxu0 %v1009
    %1169 = vmatprep.subr.mxu0 0.0
    %1170 = vmatpush1.msra.mxu0 %v1010
    %1171 = vmatprep.subr.mxu0 0.0
    %1172 = vmatpush1.msra.mxu0 %v1011
    %1173 = vmatprep.subr.mxu0 0.0
    %1174 = vmatpush1.msra.mxu0 %v1012
    %1175 = vmatprep.subr.mxu0 0.0
    %1176 = vmatpush1.msra.mxu0 %v1013
    %1177 = vmatprep.subr.mxu0 0.0
    %1178 = vmatpush1.msra.mxu0 %v1014
    %1179 = vmatprep.subr.mxu0 0.0
    %1180 = vmatpush1.msra.mxu0 %v1015
    %1181 = vmatprep.subr.mxu0 0.0
    %1182 = vmatpush1.msra.mxu0 %v1016
    %1183 = vmatprep.subr.mxu0 0.0
    %1184 = vmatpush1.msra.mxu0 %v1017
    %1185 = vmatprep.subr.mxu0 0.0
    %1186 = vmatpush1.msra.mxu0 %v1018
    %1187 = vmatprep.subr.mxu0 0.0
    %1188 = vmatpush1.msra.mxu0 %v1019
    %1189 = vmatprep.subr.mxu0 0.0
    %1190 = vmatpush1.msra.mxu0 %v1020
    %1191 = vmatprep.subr.mxu0 0.0
    %1192 = vmatpush1.msra.mxu0 %v1021
    %1193 = vmatprep.subr.mxu0 0.0
    %1194 = vmatpush1.msra.mxu0 %v1022
    %1195 = vmatprep.subr.mxu0 0.0
    %1196 = vmatpush1.msra.mxu0 %v1023
    %1197 = vmatprep.subr.mxu0 0.0
    %1198 = vmatpush1.msra.mxu0 %v1024
    %1199 = vmatprep.subr.mxu0 0.0
    %1200 = vmatpush1.msra.mxu0 %v1025
    %1201 = vmatprep.subr.mxu0 0.0
    %1202 = vmatpush1.msra.mxu0 %v1026
    %1203 = vmatprep.subr.mxu0 0.0
    %1204 = vmatpush1.msra.mxu0 %v1027
    %1205 = vmatprep.subr.mxu0 0.0
    %1206 = vmatpush1.msra.mxu0 0.0
    %1207 = vmatprep.subr.mxu0 0.0
    %1208 = vmatpush1.msra.mxu0 0.0
    %1209 = vmatprep.mubr.f32.mxu0 %v1140
    %1210 = vmatmul.mubr.f32.gmra.mrb[0].mxu0 %v964
    %v1211 = vpop.f32.mrb[0].mxu0
    %v1212 = vadd.f32 %v1131, %v1211
    %v1213 = vpop.f32.mrb[0].mxu0
    %1214 = vmatprep.mubr.f32.mxu0 %v1143
    %1215 = vmatmul.mubr.f32.gmra.mrb[0].mxu0 %v970
    %v1216 = vpop.f32.mrb[0].mxu0
    %v1217 = vadd.f32 %v1136, %v1216
    %v1218 = vpop.f32.mrb[0].mxu0
    %1219 = vdwg.mxu0
    %v1220 = vld [vmem:[%s2 + $0x210] sm:$0xff]
    %v1221 = vld [vmem:[%s2 + $0x218] sm:$0xff]
    %v1222 = vld [vmem:[%s2 + $0x220] sm:$0xff]
    %v1223 = vld [vmem:[%s2 + $0x228] sm:$0xff]
    %v1224 = vld [vmem:[%s2 + $0x230] sm:$0xff]
    %v1225 = vld [vmem:[%s2 + $0x238] sm:$0xff]
    %v1226 = vld [vmem:[%s2 + $0x240] sm:$0xff]
    %v1227 = vld [vmem:[%s2 + $0x248] sm:$0xff]
    %v1228 = vld [vmem:[%s2 + $0x250] sm:$0xff]
    %v1229 = vld [vmem:[%s2 + $0x258] sm:$0xff]
    %v1230 = vld [vmem:[%s2 + $0x260] sm:$0xff]
    %v1231 = vld [vmem:[%s2 + $0x268] sm:$0xff]
    %v1232 = vld [vmem:[%s2 + $0x270] sm:$0xff]
    %v1233 = vld [vmem:[%s2 + $0x278] sm:$0xff]
    %v1234 = vld [vmem:[%s2 + $0x280] sm:$0xff]
    %v1235 = vld [vmem:[%s2 + $0x288] sm:$0xff]
    %v1236 = vld [vmem:[%s2 + $0x290] sm:$0xff]
    %v1237 = vld [vmem:[%s2 + $0x298] sm:$0xff]
    %v1238 = vld [vmem:[%s2 + $0x2a0] sm:$0xff]
    %v1239 = vld [vmem:[%s2 + $0x2a8] sm:$0xff]
    %v1240 = vld [vmem:[%s2 + $0x2b0] sm:$0xff]
    %v1241 = vld [vmem:[%s2 + $0x2b8] sm:$0xff]
    %v1242 = vld [vmem:[%s2 + $0x2c0] sm:$0xff]
    %v1243 = vld [vmem:[%s2 + $0x2c8] sm:$0xff]
    %v1244 = vld [vmem:[%s2 + $0x2d0] sm:$0xff]
    %v1245 = vld [vmem:[%s2 + $0x2d8] sm:$0xff]
    %v1246 = vld [vmem:[%s2 + $0x2e0] sm:$0xff]
    %v1247 = vld [vmem:[%s2 + $0x2e8] sm:$0xff]
    %v1248 = vld [vmem:[%s2 + $0x2f0] sm:$0xff]
    %v1249 = vld [vmem:[%s2 + $0x2f8] sm:$0xff]
    %v1251 = vsel %vm583, %v990, 0
    %v1254 = vsel %vm583, %v996, 0
    %1256 = vmatprep.subr.mxu0 0.0
    %1257 = vmatpush1.msra.mxu0 %v1220
    %1258 = vmatprep.subr.mxu0 0.0
    %1259 = vmatpush1.msra.mxu0 %v1221
    %1260 = vmatprep.subr.mxu0 0.0
    %1261 = vmatpush1.msra.mxu0 %v1222
    %1262 = vmatprep.subr.mxu0 0.0
    %1263 = vmatpush1.msra.mxu0 %v1223
    %1264 = vmatprep.subr.mxu0 0.0
    %1265 = vmatpush1.msra.mxu0 %v1224
    %1266 = vmatprep.subr.mxu0 0.0
    %1267 = vmatpush1.msra.mxu0 %v1225
    %1268 = vmatprep.subr.mxu0 0.0
    %1269 = vmatpush1.msra.mxu0 %v1226
    %1270 = vmatprep.subr.mxu0 0.0
    %1271 = vmatpush1.msra.mxu0 %v1227
    %1272 = vmatprep.subr.mxu0 0.0
    %1273 = vmatpush1.msra.mxu0 %v1228
    %1274 = vmatprep.subr.mxu0 0.0
    %1275 = vmatpush1.msra.mxu0 %v1229
    %1276 = vmatprep.subr.mxu0 0.0
    %1277 = vmatpush1.msra.mxu0 %v1230
    %1278 = vmatprep.subr.mxu0 0.0
    %1279 = vmatpush1.msra.mxu0 %v1231
    %1280 = vmatprep.subr.mxu0 0.0
    %1281 = vmatpush1.msra.mxu0 %v1232
    %1282 = vmatprep.subr.mxu0 0.0
    %1283 = vmatpush1.msra.mxu0 %v1233
    %1284 = vmatprep.subr.mxu0 0.0
    %1285 = vmatpush1.msra.mxu0 %v1234
    %1286 = vmatprep.subr.mxu0 0.0
    %1287 = vmatpush1.msra.mxu0 %v1235
    %1288 = vmatprep.subr.mxu0 0.0
    %1289 = vmatpush1.msra.mxu0 %v1236
    %1290 = vmatprep.subr.mxu0 0.0
    %1291 = vmatpush1.msra.mxu0 %v1237
    %1292 = vmatprep.subr.mxu0 0.0
    %1293 = vmatpush1.msra.mxu0 %v1238
    %1294 = vmatprep.subr.mxu0 0.0
    %1295 = vmatpush1.msra.mxu0 %v1239
    %1296 = vmatprep.subr.mxu0 0.0
    %1297 = vmatpush1.msra.mxu0 %v1240
    %1298 = vmatprep.subr.mxu0 0.0
    %1299 = vmatpush1.msra.mxu0 %v1241
    %1300 = vmatprep.subr.mxu0 0.0
    %1301 = vmatpush1.msra.mxu0 %v1242
    %1302 = vmatprep.subr.mxu0 0.0
    %1303 = vmatpush1.msra.mxu0 %v1243
    %1304 = vmatprep.subr.mxu0 0.0
    %1305 = vmatpush1.msra.mxu0 %v1244
    %1306 = vmatprep.subr.mxu0 0.0
    %1307 = vmatpush1.msra.mxu0 %v1245
    %1308 = vmatprep.subr.mxu0 0.0
    %1309 = vmatpush1.msra.mxu0 %v1246
    %1310 = vmatprep.subr.mxu0 0.0
    %1311 = vmatpush1.msra.mxu0 %v1247
    %1312 = vmatprep.subr.mxu0 0.0
    %1313 = vmatpush1.msra.mxu0 %v1248
    %1314 = vmatprep.subr.mxu0 0.0
    %1315 = vmatpush1.msra.mxu0 %v1249
    %1316 = vmatprep.subr.mxu0 0.0
    %1317 = vmatpush1.msra.mxu0 0.0
    %1318 = vmatprep.subr.mxu0 0.0
    %1319 = vmatpush1.msra.mxu0 0.0
    %1320 = vmatprep.mubr.f32.mxu0 %v1251
    %1321 = vmatmul.mubr.f32.gmra.mrb[0].mxu0 %v988
    %v1322 = vpop.f32.mrb[0].mxu0
    %v1323 = vadd.f32 0.0, %v1322
    %v1324 = vpop.f32.mrb[0].mxu0
    %1325 = vmatprep.mubr.f32.mxu0 %v1254
    %1326 = vmatmul.mubr.f32.gmra.mrb[0].mxu0 %v994
    %v1327 = vpop.f32.mrb[0].mxu0
    %v1328 = vadd.f32 0.0, %v1327
    %v1329 = vpop.f32.mrb[0].mxu0
    %1330 = vdwg.mxu0
    %v1331 = vadd.f32 %v1212, %v1323
    %v1332 = vadd.f32 %v1217, %v1328
    %v1333 = vsel %vm583, %v1331, 0.0
    %v1334 = vsel %vm583, %v1332, 0.0
    %v1335 = vadd.f32 %v1333, %v1334
    %v1336 = vrot.slane %v1335, 4
    %v1337 = vadd.f32 %v1335, %v1336
    %v1338 = vrot.slane %v1337, 2
    %v1339 = vadd.f32 %v1337, %v1338
    %v1340 = vrot.slane %v1339, 1
    %v1341 = vadd.f32 %v1339, %v1340
    %v1342 = vmul.f32 %v1331, %v1331
    %v1343 = vmul.f32 %v1332, %v1332
    %v1344 = vsel %vm583, %v1342, 0.0
    %v1345 = vsel %vm583, %v1343, 0.0
    %v1346 = vadd.f32 %v1344, %v1345
    %v1347 = vrot.slane %v1346, 4
    %v1348 = vadd.f32 %v1346, %v1347
    %v1349 = vrot.slane %v1348, 2
    %v1350 = vadd.f32 %v1348, %v1349
    %v1351 = vrot.slane %v1350, 1
    %v1352 = vadd.f32 %v1350, %v1351
    %v1353 = vsel %vm627, %v1341, %v1352
    %v1354 = vld [vmem:[%s2 + $0x300] sm:$0xff]
    %v1355 = vld [vmem:[%s2 + $0x308] sm:$0xff]
    %v1356 = vld [vmem:[%s2 + $0x310] sm:$0xff]
    %v1357 = vld [vmem:[%s2 + $0x318] sm:$0xff]
    %v1358 = vld [vmem:[%s2 + $0x320] sm:$0xff]
    %v1359 = vld [vmem:[%s2 + $0x328] sm:$0xff]
    %v1360 = vld [vmem:[%s2 + $0x330] sm:$0xff]
    %v1361 = vld [vmem:[%s2 + $0x338] sm:$0xff]
    %v1362 = vld [vmem:[%s2 + $0x340] sm:$0xff]
    %v1363 = vld [vmem:[%s2 + $0x348] sm:$0xff]
    %v1364 = vld [vmem:[%s2 + $0x350] sm:$0xff]
    %v1365 = vld [vmem:[%s2 + $0x358] sm:$0xff]
    %v1366 = vld [vmem:[%s2 + $0x360] sm:$0xff]
    %v1367 = vld [vmem:[%s2 + $0x368] sm:$0xff]
    %v1369 = vsel %vm583, %v1353, 0
    %1371 = vmatprep.subr.mxu0 0.0
    %1372 = vmatpush1.msra.mxu0 %v1354
    %1373 = vmatprep.subr.mxu0 0.0
    %1374 = vmatpush1.msra.mxu0 %v1355
    %1375 = vmatprep.subr.mxu0 0.0
    %1376 = vmatpush1.msra.mxu0 %v1356
    %1377 = vmatprep.subr.mxu0 0.0
    %1378 = vmatpush1.msra.mxu0 %v1357
    %1379 = vmatprep.subr.mxu0 0.0
    %1380 = vmatpush1.msra.mxu0 %v1358
    %1381 = vmatprep.subr.mxu0 0.0
    %1382 = vmatpush1.msra.mxu0 %v1359
    %1383 = vmatprep.subr.mxu0 0.0
    %1384 = vmatpush1.msra.mxu0 %v1360
    %1385 = vmatprep.subr.mxu0 0.0
    %1386 = vmatpush1.msra.mxu0 %v1361
    %1387 = vmatprep.subr.mxu0 0.0
    %1388 = vmatpush1.msra.mxu0 %v1362
    %1389 = vmatprep.subr.mxu0 0.0
    %1390 = vmatpush1.msra.mxu0 %v1363
    %1391 = vmatprep.subr.mxu0 0.0
    %1392 = vmatpush1.msra.mxu0 %v1364
    %1393 = vmatprep.subr.mxu0 0.0
    %1394 = vmatpush1.msra.mxu0 %v1365
    %1395 = vmatprep.subr.mxu0 0.0
    %1396 = vmatpush1.msra.mxu0 %v1366
    %1397 = vmatprep.subr.mxu0 0.0
    %1398 = vmatpush1.msra.mxu0 %v1367
    %1399 = vmatprep.subr.mxu0 0.0
    %1400 = vmatpush1.msra.mxu0 0.0
    %1401 = vmatprep.subr.mxu0 0.0
    %1402 = vmatpush1.msra.mxu0 0.0
    %1403 = vmatprep.subr.mxu0 0.0
    %1404 = vmatpush1.msra.mxu0 0.0
    %1405 = vmatprep.subr.mxu0 0.0
    %1406 = vmatpush1.msra.mxu0 0.0
    %1407 = vmatprep.subr.mxu0 0.0
    %1408 = vmatpush1.msra.mxu0 0.0
    %1409 = vmatprep.subr.mxu0 0.0
    %1410 = vmatpush1.msra.mxu0 0.0
    %1411 = vmatprep.subr.mxu0 0.0
    %1412 = vmatpush1.msra.mxu0 0.0
    %1413 = vmatprep.subr.mxu0 0.0
    %1414 = vmatpush1.msra.mxu0 0.0
    %1415 = vmatprep.subr.mxu0 0.0
    %1416 = vmatpush1.msra.mxu0 0.0
    %1417 = vmatprep.subr.mxu0 0.0
    %1418 = vmatpush1.msra.mxu0 0.0
    %1419 = vmatprep.subr.mxu0 0.0
    %1420 = vmatpush1.msra.mxu0 0.0
    %1421 = vmatprep.subr.mxu0 0.0
    %1422 = vmatpush1.msra.mxu0 0.0
    %1423 = vmatprep.subr.mxu0 0.0
    %1424 = vmatpush1.msra.mxu0 0.0
    %1425 = vmatprep.subr.mxu0 0.0
    %1426 = vmatpush1.msra.mxu0 0.0
    %1427 = vmatprep.subr.mxu0 0.0
    %1428 = vmatpush1.msra.mxu0 0.0
    %1429 = vmatprep.subr.mxu0 0.0
    %1430 = vmatpush1.msra.mxu0 0.0
    %1431 = vmatprep.subr.mxu0 0.0
    %1432 = vmatpush1.msra.mxu0 0.0
    %1433 = vmatprep.subr.mxu0 0.0
    %1434 = vmatpush1.msra.mxu0 0.0
    %1435 = vmatprep.mubr.f32.mxu0 0.0
    %1436 = vmatmul.mubr.f32.gmra.mrb[0].mxu0 %v1369
    %v1437 = vpop.f32.mrb[0].mxu0
    %v1438 = vadd.f32 0.0, %v1437
    %v1439 = vpop.f32.mrb[0].mxu0
    %1440 = vdwg.mxu0
    %v1441 = vmul.f32 %v1438, 0.010204081
    %v1442 = vmul.f32 %v1441, %v1441
    %v1444 = vrot.slane %v1442, 7
    %v1446 = vsub.f32 %v1441, %v1444
    %v1447 = vmax.f32 %v1446, 0.0
    %v1448 = vld [vmem:[%s2 + $0x380] sm:$0x3]
    %v1449 = vadd.f32 %v1447, 1e-05
    %v1450 = vrsqrt.pop %v1449
    %v1452 = vrot.slane %v1450, 1
    %v1454 = vmul.f32 %v1448, %v1452
    %v1455 = vmul.f32 %v1441, %v1454
    %v1457 = vrot.slane %v1455, 7
    %v1459 = vsub.f32 %v1448, %v1457
    %v1460 = vsel %vm627, %v1454, %v1459
    %v1461 = vld [vmem:[%s2 + $0x370] sm:$0xff]
    %v1462 = vld [vmem:[%s2 + $0x378] sm:$0xff]
    %v1464 = vsel %vm757, %v1460, 0
    %1466 = vmatprep.subr.mxu0 0.0
    %1467 = vmatpush1.msra.mxu0 %v1461
    %1468 = vmatprep.subr.mxu0 0.0
    %1469 = vmatpush1.msra.mxu0 %v1462
    %1470 = vmatprep.subr.mxu0 0.0
    %1471 = vmatpush1.msra.mxu0 0.0
    %1472 = vmatprep.subr.mxu0 0.0
    %1473 = vmatpush1.msra.mxu0 0.0
    %1474 = vmatprep.subr.mxu0 0.0
    %1475 = vmatpush1.msra.mxu0 0.0
    %1476 = vmatprep.subr.mxu0 0.0
    %1477 = vmatpush1.msra.mxu0 0.0
    %1478 = vmatprep.subr.mxu0 0.0
    %1479 = vmatpush1.msra.mxu0 0.0
    %1480 = vmatprep.subr.mxu0 0.0
    %1481 = vmatpush1.msra.mxu0 0.0
    %1482 = vmatprep.subr.mxu0 0.0
    %1483 = vmatpush1.msra.mxu0 0.0
    %1484 = vmatprep.subr.mxu0 0.0
    %1485 = vmatpush1.msra.mxu0 0.0
    %1486 = vmatprep.subr.mxu0 0.0
    %1487 = vmatpush1.msra.mxu0 0.0
    %1488 = vmatprep.subr.mxu0 0.0
    %1489 = vmatpush1.msra.mxu0 0.0
    %1490 = vmatprep.subr.mxu0 0.0
    %1491 = vmatpush1.msra.mxu0 0.0
    %1492 = vmatprep.subr.mxu0 0.0
    %1493 = vmatpush1.msra.mxu0 0.0
    %1494 = vmatprep.subr.mxu0 0.0
    %1495 = vmatpush1.msra.mxu0 0.0
    %1496 = vmatprep.subr.mxu0 0.0
    %1497 = vmatpush1.msra.mxu0 0.0
    %1498 = vmatprep.subr.mxu0 0.0
    %1499 = vmatpush1.msra.mxu0 0.0
    %1500 = vmatprep.subr.mxu0 0.0
    %1501 = vmatpush1.msra.mxu0 0.0
    %1502 = vmatprep.subr.mxu0 0.0
    %1503 = vmatpush1.msra.mxu0 0.0
    %1504 = vmatprep.subr.mxu0 0.0
    %1505 = vmatpush1.msra.mxu0 0.0
    %1506 = vmatprep.subr.mxu0 0.0
    %1507 = vmatpush1.msra.mxu0 0.0
    %1508 = vmatprep.subr.mxu0 0.0
    %1509 = vmatpush1.msra.mxu0 0.0
    %1510 = vmatprep.subr.mxu0 0.0
    %1511 = vmatpush1.msra.mxu0 0.0
    %1512 = vmatprep.subr.mxu0 0.0
    %1513 = vmatpush1.msra.mxu0 0.0
    %1514 = vmatprep.subr.mxu0 0.0
    %1515 = vmatpush1.msra.mxu0 0.0
    %1516 = vmatprep.subr.mxu0 0.0
    %1517 = vmatpush1.msra.mxu0 0.0
    %1518 = vmatprep.subr.mxu0 0.0
    %1519 = vmatpush1.msra.mxu0 0.0
    %1520 = vmatprep.subr.mxu0 0.0
    %1521 = vmatpush1.msra.mxu0 0.0
    %1522 = vmatprep.subr.mxu0 0.0
    %1523 = vmatpush1.msra.mxu0 0.0
    %1524 = vmatprep.subr.mxu0 0.0
    %1525 = vmatpush1.msra.mxu0 0.0
    %1526 = vmatprep.subr.mxu0 0.0
    %1527 = vmatpush1.msra.mxu0 0.0
    %1528 = vmatprep.subr.mxu0 0.0
    %1529 = vmatpush1.msra.mxu0 0.0
    %1530 = vmatprep.mubr.f32.mxu0 0.0
    %1531 = vmatmul.mubr.f32.gmra.mrb[0].mxu0 %v1464
    %v1532 = vpop.f32.mrb[0].mxu0
    %v1533 = vadd.f32 0.0, %v1532
    %v1534 = vpop.f32.mrb[0].mxu0
    %1535 = vdwg.mxu0
    %v1536 = vlaneseq
    %v1537 = vshrl.u32 %v1536, 7
    %v1538 = vsub.s32 0, %v1537
    %v1539 = vrot.slane %v1533, %v1538
    %v1540 = vmul.f32 %v1331, %v1539
    %v1541 = vmul.f32 %v1332, %v1539
    %v1542 = vlaneseq
    %v1543 = vshrl.u32 %v1542, 7
    %v1544 = vsub.s32 1, %v1543
    %v1545 = vrot.slane %v1533, %v1544
    %v1546 = vadd.f32 %v1540, %v1545
    %v1547 = vadd.f32 %v1541, %v1545
    %v1548 = vmax.f32 %v1546, 0.0
    %v1549 = vmax.f32 %v1547, 0.0
    %v1550 = vld [vmem:[%s3] sm:$0xff]
    %v1551 = vld [vmem:[%s3 + $0x8] sm:$0xff]
    %v1552 = vld [vmem:[%s3 + $0x10] sm:$0xff]
    %v1553 = vld [vmem:[%s3 + $0x18] sm:$0xff]
    %v1554 = vld [vmem:[%s3 + $0x20] sm:$0xff]
    %v1555 = vld [vmem:[%s3 + $0x28] sm:$0xff]
    %v1556 = vld [vmem:[%s3 + $0x30] sm:$0xff]
    %v1557 = vld [vmem:[%s3 + $0x38] sm:$0xff]
    %v1558 = vld [vmem:[%s3 + $0x40] sm:$0xff]
    %v1560 = vsel %vm757, %v1550, 0
    %v1563 = vsel %vm757, %v1551, 0
    %v1566 = vsel %vm757, %v1552, 0
    %v1569 = vsel %vm757, %v1553, 0
    %v1572 = vsel %vm757, %v1554, 0
    %v1575 = vsel %vm757, %v1555, 0
    %v1578 = vsel %vm757, %v1556, 0
    %v1581 = vsel %vm757, %v1557, 0
    %v1584 = vsel %vm757, %v1558, 0
    %1586 = vmatprep.subr.mxu0 0.0
    %1587 = vmatpush1.msra.mxu0 %v1548
    %1588 = vmatprep.subr.mxu0 0.0
    %1589 = vmatpush1.msra.mxu0 %v1549
    %1590 = vmatprep.subr.mxu0 0.0
    %1591 = vmatpush1.msra.mxu0 0.0
    %1592 = vmatprep.subr.mxu0 0.0
    %1593 = vmatpush1.msra.mxu0 0.0
    %1594 = vmatprep.subr.mxu0 0.0
    %1595 = vmatpush1.msra.mxu0 0.0
    %1596 = vmatprep.subr.mxu0 0.0
    %1597 = vmatpush1.msra.mxu0 0.0
    %1598 = vmatprep.subr.mxu0 0.0
    %1599 = vmatpush1.msra.mxu0 0.0
    %1600 = vmatprep.subr.mxu0 0.0
    %1601 = vmatpush1.msra.mxu0 0.0
    %1602 = vmatprep.subr.mxu0 0.0
    %1603 = vmatpush1.msra.mxu0 0.0
    %1604 = vmatprep.subr.mxu0 0.0
    %1605 = vmatpush1.msra.mxu0 0.0
    %1606 = vmatprep.subr.mxu0 0.0
    %1607 = vmatpush1.msra.mxu0 0.0
    %1608 = vmatprep.subr.mxu0 0.0
    %1609 = vmatpush1.msra.mxu0 0.0
    %1610 = vmatprep.subr.mxu0 0.0
    %1611 = vmatpush1.msra.mxu0 0.0
    %1612 = vmatprep.subr.mxu0 0.0
    %1613 = vmatpush1.msra.mxu0 0.0
    %1614 = vmatprep.subr.mxu0 0.0
    %1615 = vmatpush1.msra.mxu0 0.0
    %1616 = vmatprep.subr.mxu0 0.0
    %1617 = vmatpush1.msra.mxu0 0.0
    %1618 = vmatprep.subr.mxu0 0.0
    %1619 = vmatpush1.msra.mxu0 0.0
    %1620 = vmatprep.subr.mxu0 0.0
    %1621 = vmatpush1.msra.mxu0 0.0
    %1622 = vmatprep.subr.mxu0 0.0
    %1623 = vmatpush1.msra.mxu0 0.0
    %1624 = vmatprep.subr.mxu0 0.0
    %1625 = vmatpush1.msra.mxu0 0.0
    %1626 = vmatprep.subr.mxu0 0.0
    %1627 = vmatpush1.msra.mxu0 0.0
    %1628 = vmatprep.subr.mxu0 0.0
    %1629 = vmatpush1.msra.mxu0 0.0
    %1630 = vmatprep.subr.mxu0 0.0
    %1631 = vmatpush1.msra.mxu0 0.0
    %1632 = vmatprep.subr.mxu0 0.0
    %1633 = vmatpush1.msra.mxu0 0.0
    %1634 = vmatprep.subr.mxu0 0.0
    %1635 = vmatpush1.msra.mxu0 0.0
    %1636 = vmatprep.subr.mxu0 0.0
    %1637 = vmatpush1.msra.mxu0 0.0
    %1638 = vmatprep.subr.mxu0 0.0
    %1639 = vmatpush1.msra.mxu0 0.0
    %1640 = vmatprep.subr.mxu0 0.0
    %1641 = vmatpush1.msra.mxu0 0.0
    %1642 = vmatprep.subr.mxu0 0.0
    %1643 = vmatpush1.msra.mxu0 0.0
    %1644 = vmatprep.subr.mxu0 0.0
    %1645 = vmatpush1.msra.mxu0 0.0
    %1646 = vmatprep.subr.mxu0 0.0
    %1647 = vmatpush1.msra.mxu0 0.0
    %1648 = vmatprep.subr.mxu0 0.0
    %1649 = vmatpush1.msra.mxu0 0.0
    %1650 = vmatprep.mubr.f32.mxu0 0.0
    %1651 = vmatmul.mubr.f32.gmra.mrb[0].mxu0 %v1560
    %v1652 = vpop.f32.mrb[0].mxu0
    %v1653 = vadd.f32 0.0, %v1652
    %v1654 = vpop.f32.mrb[0].mxu0
    %1655 = vmatprep.mubr.f32.mxu0 0.0
    %1656 = vmatmul.mubr.f32.gmra.mrb[0].mxu0 %v1563
    %v1657 = vpop.f32.mrb[0].mxu0
    %v1658 = vadd.f32 0.0, %v1657
    %v1659 = vpop.f32.mrb[0].mxu0
    %1660 = vmatprep.mubr.f32.mxu0 0.0
    %1661 = vmatmul.mubr.f32.gmra.mrb[0].mxu0 %v1566
    %v1662 = vpop.f32.mrb[0].mxu0
    %v1663 = vadd.f32 0.0, %v1662
    %v1664 = vpop.f32.mrb[0].mxu0
    %1665 = vmatprep.mubr.f32.mxu0 0.0
    %1666 = vmatmul.mubr.f32.gmra.mrb[0].mxu0 %v1569
    %v1667 = vpop.f32.mrb[0].mxu0
    %v1668 = vadd.f32 0.0, %v1667
    %v1669 = vpop.f32.mrb[0].mxu0
    %1670 = vmatprep.mubr.f32.mxu0 0.0
    %1671 = vmatmul.mubr.f32.gmra.mrb[0].mxu0 %v1572
    %v1672 = vpop.f32.mrb[0].mxu0
    %v1673 = vadd.f32 0.0, %v1672
    %v1674 = vpop.f32.mrb[0].mxu0
    %1675 = vmatprep.mubr.f32.mxu0 0.0
    %1676 = vmatmul.mubr.f32.gmra.mrb[0].mxu0 %v1575
    %v1677 = vpop.f32.mrb[0].mxu0
    %v1678 = vadd.f32 0.0, %v1677
    %v1679 = vpop.f32.mrb[0].mxu0
    %1680 = vmatprep.mubr.f32.mxu0 0.0
    %1681 = vmatmul.mubr.f32.gmra.mrb[0].mxu0 %v1578
    %v1682 = vpop.f32.mrb[0].mxu0
    %v1683 = vadd.f32 0.0, %v1682
    %v1684 = vpop.f32.mrb[0].mxu0
    %1685 = vmatprep.mubr.f32.mxu0 0.0
    %1686 = vmatmul.mubr.f32.gmra.mrb[0].mxu0 %v1581
    %v1687 = vpop.f32.mrb[0].mxu0
    %v1688 = vadd.f32 0.0, %v1687
    %v1689 = vpop.f32.mrb[0].mxu0
    %1690 = vmatprep.mubr.f32.mxu0 0.0
    %1691 = vmatmul.mubr.f32.gmra.mrb[0].mxu0 %v1584
    %v1692 = vpop.f32.mrb[0].mxu0
    %v1693 = vadd.f32 0.0, %v1692
    %v1694 = vpop.f32.mrb[0].mxu0
    %1695 = vdwg.mxu0
    %v1696 = vld [vmem:[%s3 + $0x48] sm:$0xff]
    %v1697 = vld [vmem:[%s3 + $0x50] sm:$0xff]
    %v1698 = vld [vmem:[%s3 + $0x58] sm:$0xff]
    %v1699 = vld [vmem:[%s3 + $0x60] sm:$0xff]
    %v1700 = vld [vmem:[%s3 + $0x68] sm:$0xff]
    %v1701 = vld [vmem:[%s3 + $0x70] sm:$0xff]
    %v1702 = vld [vmem:[%s3 + $0x78] sm:$0xff]
    %v1703 = vld [vmem:[%s3 + $0x80] sm:$0xff]
    %v1704 = vld [vmem:[%s3 + $0x88] sm:$0xff]
    %v1705 = vld [vmem:[%s3 + $0x90] sm:$0xff]
    %v1706 = vld [vmem:[%s3 + $0x98] sm:$0xff]
    %v1707 = vld [vmem:[%s3 + $0xa0] sm:$0xff]
    %v1708 = vld [vmem:[%s3 + $0xa8] sm:$0xff]
    %v1709 = vld [vmem:[%s3 + $0xb0] sm:$0xff]
    %v1710 = vld [vmem:[%s3 + $0xb8] sm:$0xff]
    %v1711 = vld [vmem:[%s3 + $0xc0] sm:$0xff]
    %v1712 = vld [vmem:[%s3 + $0xc8] sm:$0xff]
    %v1713 = vld [vmem:[%s3 + $0xd0] sm:$0xff]
    %v1714 = vld [vmem:[%s3 + $0xd8] sm:$0xff]
    %v1715 = vld [vmem:[%s3 + $0xe0] sm:$0xff]
    %v1716 = vld [vmem:[%s3 + $0xe8] sm:$0xff]
    %v1717 = vld [vmem:[%s3 + $0xf0] sm:$0xff]
    %v1718 = vld [vmem:[%s3 + $0xf8] sm:$0xff]
    %v1719 = vld [vmem:[%s3 + $0x100] sm:$0xff]
    %v1720 = vld [vmem:[%s3 + $0x108] sm:$0xff]
    %v1721 = vld [vmem:[%s3 + $0x110] sm:$0xff]
    %v1722 = vld [vmem:[%s3 + $0x118] sm:$0xff]
    %v1723 = vld [vmem:[%s3 + $0x120] sm:$0xff]
    %v1725 = vsel %vm583, %v1668, 0
    %v1728 = vsel %vm583, %v1673, 0
    %v1731 = vsel %vm583, %v1678, 0
    %1733 = vmatprep.subr.mxu0 0.0
    %1734 = vmatpush1.msra.mxu0 %v1710
    %1735 = vmatprep.subr.mxu0 0.0
    %1736 = vmatpush1.msra.mxu0 %v1711
    %1737 = vmatprep.subr.mxu0 0.0
    %1738 = vmatpush1.msra.mxu0 %v1712
    %1739 = vmatprep.subr.mxu0 0.0
    %1740 = vmatpush1.msra.mxu0 %v1713
    %1741 = vmatprep.subr.mxu0 0.0
    %1742 = vmatpush1.msra.mxu0 %v1714
    %1743 = vmatprep.subr.mxu0 0.0
    %1744 = vmatpush1.msra.mxu0 %v1715
    %1745 = vmatprep.subr.mxu0 0.0
    %1746 = vmatpush1.msra.mxu0 %v1716
    %1747 = vmatprep.subr.mxu0 0.0
    %1748 = vmatpush1.msra.mxu0 %v1717
    %1749 = vmatprep.subr.mxu0 0.0
    %1750 = vmatpush1.msra.mxu0 %v1718
    %1751 = vmatprep.subr.mxu0 0.0
    %1752 = vmatpush1.msra.mxu0 %v1719
    %1753 = vmatprep.subr.mxu0 0.0
    %1754 = vmatpush1.msra.mxu0 %v1720
    %1755 = vmatprep.subr.mxu0 0.0
    %1756 = vmatpush1.msra.mxu0 %v1721
    %1757 = vmatprep.subr.mxu0 0.0
    %1758 = vmatpush1.msra.mxu0 %v1722
    %1759 = vmatprep.subr.mxu0 0.0
    %1760 = vmatpush1.msra.mxu0 %v1723
    %1761 = vmatprep.subr.mxu0 0.0
    %1762 = vmatpush1.msra.mxu0 0.0
    %1763 = vmatprep.subr.mxu0 0.0
    %1764 = vmatpush1.msra.mxu0 0.0
    %1765 = vmatprep.subr.mxu0 0.0
    %1766 = vmatpush1.msra.mxu0 0.0
    %1767 = vmatprep.subr.mxu0 0.0
    %1768 = vmatpush1.msra.mxu0 0.0
    %1769 = vmatprep.subr.mxu0 0.0
    %1770 = vmatpush1.msra.mxu0 0.0
    %1771 = vmatprep.subr.mxu0 0.0
    %1772 = vmatpush1.msra.mxu0 0.0
    %1773 = vmatprep.subr.mxu0 0.0
    %1774 = vmatpush1.msra.mxu0 0.0
    %1775 = vmatprep.subr.mxu0 0.0
    %1776 = vmatpush1.msra.mxu0 0.0
    %1777 = vmatprep.subr.mxu0 0.0
    %1778 = vmatpush1.msra.mxu0 0.0
    %1779 = vmatprep.subr.mxu0 0.0
    %1780 = vmatpush1.msra.mxu0 0.0
    %1781 = vmatprep.subr.mxu0 0.0
    %1782 = vmatpush1.msra.mxu0 0.0
    %1783 = vmatprep.subr.mxu0 0.0
    %1784 = vmatpush1.msra.mxu0 0.0
    %1785 = vmatprep.subr.mxu0 0.0
    %1786 = vmatpush1.msra.mxu0 0.0
    %1787 = vmatprep.subr.mxu0 0.0
    %1788 = vmatpush1.msra.mxu0 0.0
    %1789 = vmatprep.subr.mxu0 0.0
    %1790 = vmatpush1.msra.mxu0 0.0
    %1791 = vmatprep.subr.mxu0 0.0
    %1792 = vmatpush1.msra.mxu0 0.0
    %1793 = vmatprep.subr.mxu0 0.0
    %1794 = vmatpush1.msra.mxu0 0.0
    %1795 = vmatprep.subr.mxu0 0.0
    %1796 = vmatpush1.msra.mxu0 0.0
    %1797 = vmatprep.mubr.f32.mxu0 0.0
    %1798 = vmatmul.mubr.f32.gmra.mrb[0].mxu0 %v1725
    %v1799 = vpop.f32.mrb[0].mxu0
    %v1800 = vadd.f32 0.0, %v1799
    %v1801 = vpop.f32.mrb[0].mxu0
    %1802 = vmatprep.mubr.f32.mxu0 0.0
    %1803 = vmatmul.mubr.f32.gmra.mrb[0].mxu0 %v1728
    %v1804 = vpop.f32.mrb[0].mxu0
    %v1805 = vadd.f32 0.0, %v1804
    %v1806 = vpop.f32.mrb[0].mxu0
    %1807 = vmatprep.mubr.f32.mxu0 0.0
    %1808 = vmatmul.mubr.f32.gmra.mrb[0].mxu0 %v1731
    %v1809 = vpop.f32.mrb[0].mxu0
    %v1810 = vadd.f32 0.0, %v1809
    %v1811 = vpop.f32.mrb[0].mxu0
    %1812 = vdwg.mxu0
    %v1814 = vsel %vm583, %v1653, 0
    %v1817 = vsel %vm583, %v1658, 0
    %v1820 = vsel %vm583, %v1663, 0
    %1822 = vmatprep.subr.mxu0 0.0
    %1823 = vmatpush1.msra.mxu0 %v1696
    %1824 = vmatprep.subr.mxu0 0.0
    %1825 = vmatpush1.msra.mxu0 %v1697
    %1826 = vmatprep.subr.mxu0 0.0
    %1827 = vmatpush1.msra.mxu0 %v1698
    %1828 = vmatprep.subr.mxu0 0.0
    %1829 = vmatpush1.msra.mxu0 %v1699
    %1830 = vmatprep.subr.mxu0 0.0
    %1831 = vmatpush1.msra.mxu0 %v1700
    %1832 = vmatprep.subr.mxu0 0.0
    %1833 = vmatpush1.msra.mxu0 %v1701
    %1834 = vmatprep.subr.mxu0 0.0
    %1835 = vmatpush1.msra.mxu0 %v1702
    %1836 = vmatprep.subr.mxu0 0.0
    %1837 = vmatpush1.msra.mxu0 %v1703
    %1838 = vmatprep.subr.mxu0 0.0
    %1839 = vmatpush1.msra.mxu0 %v1704
    %1840 = vmatprep.subr.mxu0 0.0
    %1841 = vmatpush1.msra.mxu0 %v1705
    %1842 = vmatprep.subr.mxu0 0.0
    %1843 = vmatpush1.msra.mxu0 %v1706
    %1844 = vmatprep.subr.mxu0 0.0
    %1845 = vmatpush1.msra.mxu0 %v1707
    %1846 = vmatprep.subr.mxu0 0.0
    %1847 = vmatpush1.msra.mxu0 %v1708
    %1848 = vmatprep.subr.mxu0 0.0
    %1849 = vmatpush1.msra.mxu0 %v1709
    %1850 = vmatprep.subr.mxu0 0.0
    %1851 = vmatpush1.msra.mxu0 0.0
    %1852 = vmatprep.subr.mxu0 0.0
    %1853 = vmatpush1.msra.mxu0 0.0
    %1854 = vmatprep.subr.mxu0 0.0
    %1855 = vmatpush1.msra.mxu0 0.0
    %1856 = vmatprep.subr.mxu0 0.0
    %1857 = vmatpush1.msra.mxu0 0.0
    %1858 = vmatprep.subr.mxu0 0.0
    %1859 = vmatpush1.msra.mxu0 0.0
    %1860 = vmatprep.subr.mxu0 0.0
    %1861 = vmatpush1.msra.mxu0 0.0
    %1862 = vmatprep.subr.mxu0 0.0
    %1863 = vmatpush1.msra.mxu0 0.0
    %1864 = vmatprep.subr.mxu0 0.0
    %1865 = vmatpush1.msra.mxu0 0.0
    %1866 = vmatprep.subr.mxu0 0.0
    %1867 = vmatpush1.msra.mxu0 0.0
    %1868 = vmatprep.subr.mxu0 0.0
    %1869 = vmatpush1.msra.mxu0 0.0
    %1870 = vmatprep.subr.mxu0 0.0
    %1871 = vmatpush1.msra.mxu0 0.0
    %1872 = vmatprep.subr.mxu0 0.0
    %1873 = vmatpush1.msra.mxu0 0.0
    %1874 = vmatprep.subr.mxu0 0.0
    %1875 = vmatpush1.msra.mxu0 0.0
    %1876 = vmatprep.subr.mxu0 0.0
    %1877 = vmatpush1.msra.mxu0 0.0
    %1878 = vmatprep.subr.mxu0 0.0
    %1879 = vmatpush1.msra.mxu0 0.0
    %1880 = vmatprep.subr.mxu0 0.0
    %1881 = vmatpush1.msra.mxu0 0.0
    %1882 = vmatprep.subr.mxu0 0.0
    %1883 = vmatpush1.msra.mxu0 0.0
    %1884 = vmatprep.subr.mxu0 0.0
    %1885 = vmatpush1.msra.mxu0 0.0
    %1886 = vmatprep.mubr.f32.mxu0 0.0
    %1887 = vmatmul.mubr.f32.gmra.mrb[0].mxu0 %v1814
    %v1888 = vpop.f32.mrb[0].mxu0
    %v1889 = vadd.f32 %v1800, %v1888
    %v1890 = vpop.f32.mrb[0].mxu0
    %1891 = vmatprep.mubr.f32.mxu0 0.0
    %1892 = vmatmul.mubr.f32.gmra.mrb[0].mxu0 %v1817
    %v1893 = vpop.f32.mrb[0].mxu0
    %v1894 = vadd.f32 %v1805, %v1893
    %v1895 = vpop.f32.mrb[0].mxu0
    %1896 = vmatprep.mubr.f32.mxu0 0.0
    %1897 = vmatmul.mubr.f32.gmra.mrb[0].mxu0 %v1820
    %v1898 = vpop.f32.mrb[0].mxu0
    %v1899 = vadd.f32 %v1810, %v1898
    %v1900 = vpop.f32.mrb[0].mxu0
    %1901 = vdwg.mxu0
    %v1902 = vld [vmem:[%s3 + $0x128] sm:$0xff]
    %v1903 = vld [vmem:[%s3 + $0x130] sm:$0xff]
    %v1904 = vld [vmem:[%s3 + $0x138] sm:$0xff]
    %v1905 = vld [vmem:[%s3 + $0x140] sm:$0xff]
    %v1906 = vld [vmem:[%s3 + $0x148] sm:$0xff]
    %v1907 = vld [vmem:[%s3 + $0x150] sm:$0xff]
    %v1908 = vld [vmem:[%s3 + $0x158] sm:$0xff]
    %v1909 = vld [vmem:[%s3 + $0x160] sm:$0xff]
    %v1910 = vld [vmem:[%s3 + $0x168] sm:$0xff]
    %v1911 = vld [vmem:[%s3 + $0x170] sm:$0xff]
    %v1912 = vld [vmem:[%s3 + $0x178] sm:$0xff]
    %v1913 = vld [vmem:[%s3 + $0x180] sm:$0xff]
    %v1914 = vld [vmem:[%s3 + $0x188] sm:$0xff]
    %v1915 = vld [vmem:[%s3 + $0x190] sm:$0xff]
    %v1917 = vsel %vm583, %v1683, 0
    %v1920 = vsel %vm583, %v1688, 0
    %v1923 = vsel %vm583, %v1693, 0
    %1925 = vmatprep.subr.mxu0 0.0
    %1926 = vmatpush1.msra.mxu0 %v1902
    %1927 = vmatprep.subr.mxu0 0.0
    %1928 = vmatpush1.msra.mxu0 %v1903
    %1929 = vmatprep.subr.mxu0 0.0
    %1930 = vmatpush1.msra.mxu0 %v1904
    %1931 = vmatprep.subr.mxu0 0.0
    %1932 = vmatpush1.msra.mxu0 %v1905
    %1933 = vmatprep.subr.mxu0 0.0
    %1934 = vmatpush1.msra.mxu0 %v1906
    %1935 = vmatprep.subr.mxu0 0.0
    %1936 = vmatpush1.msra.mxu0 %v1907
    %1937 = vmatprep.subr.mxu0 0.0
    %1938 = vmatpush1.msra.mxu0 %v1908
    %1939 = vmatprep.subr.mxu0 0.0
    %1940 = vmatpush1.msra.mxu0 %v1909
    %1941 = vmatprep.subr.mxu0 0.0
    %1942 = vmatpush1.msra.mxu0 %v1910
    %1943 = vmatprep.subr.mxu0 0.0
    %1944 = vmatpush1.msra.mxu0 %v1911
    %1945 = vmatprep.subr.mxu0 0.0
    %1946 = vmatpush1.msra.mxu0 %v1912
    %1947 = vmatprep.subr.mxu0 0.0
    %1948 = vmatpush1.msra.mxu0 %v1913
    %1949 = vmatprep.subr.mxu0 0.0
    %1950 = vmatpush1.msra.mxu0 %v1914
    %1951 = vmatprep.subr.mxu0 0.0
    %1952 = vmatpush1.msra.mxu0 %v1915
    %1953 = vmatprep.subr.mxu0 0.0
    %1954 = vmatpush1.msra.mxu0 0.0
    %1955 = vmatprep.subr.mxu0 0.0
    %1956 = vmatpush1.msra.mxu0 0.0
    %1957 = vmatprep.subr.mxu0 0.0
    %1958 = vmatpush1.msra.mxu0 0.0
    %1959 = vmatprep.subr.mxu0 0.0
    %1960 = vmatpush1.msra.mxu0 0.0
    %1961 = vmatprep.subr.mxu0 0.0
    %1962 = vmatpush1.msra.mxu0 0.0
    %1963 = vmatprep.subr.mxu0 0.0
    %1964 = vmatpush1.msra.mxu0 0.0
    %1965 = vmatprep.subr.mxu0 0.0
    %1966 = vmatpush1.msra.mxu0 0.0
    %1967 = vmatprep.subr.mxu0 0.0
    %1968 = vmatpush1.msra.mxu0 0.0
    %1969 = vmatprep.subr.mxu0 0.0
    %1970 = vmatpush1.msra.mxu0 0.0
    %1971 = vmatprep.subr.mxu0 0.0
    %1972 = vmatpush1.msra.mxu0 0.0
    %1973 = vmatprep.subr.mxu0 0.0
    %1974 = vmatpush1.msra.mxu0 0.0
    %1975 = vmatprep.subr.mxu0 0.0
    %1976 = vmatpush1.msra.mxu0 0.0
    %1977 = vmatprep.subr.mxu0 0.0
    %1978 = vmatpush1.msra.mxu0 0.0
    %1979 = vmatprep.subr.mxu0 0.0
    %1980 = vmatpush1.msra.mxu0 0.0
    %1981 = vmatprep.subr.mxu0 0.0
    %1982 = vmatpush1.msra.mxu0 0.0
    %1983 = vmatprep.subr.mxu0 0.0
    %1984 = vmatpush1.msra.mxu0 0.0
    %1985 = vmatprep.subr.mxu0 0.0
    %1986 = vmatpush1.msra.mxu0 0.0
    %1987 = vmatprep.subr.mxu0 0.0
    %1988 = vmatpush1.msra.mxu0 0.0
    %1989 = vmatprep.mubr.f32.mxu0 0.0
    %1990 = vmatmul.mubr.f32.gmra.mrb[0].mxu0 %v1917
    %v1991 = vpop.f32.mrb[0].mxu0
    %v1992 = vadd.f32 0.0, %v1991
    %v1993 = vpop.f32.mrb[0].mxu0
    %1994 = vmatprep.mubr.f32.mxu0 0.0
    %1995 = vmatmul.mubr.f32.gmra.mrb[0].mxu0 %v1920
    %v1996 = vpop.f32.mrb[0].mxu0
    %v1997 = vadd.f32 0.0, %v1996
    %v1998 = vpop.f32.mrb[0].mxu0
    %1999 = vmatprep.mubr.f32.mxu0 0.0
    %2000 = vmatmul.mubr.f32.gmra.mrb[0].mxu0 %v1923
    %v2001 = vpop.f32.mrb[0].mxu0
    %v2002 = vadd.f32 0.0, %v2001
    %v2003 = vpop.f32.mrb[0].mxu0
    %2004 = vdwg.mxu0
    %v2005 = vadd.f32 %v1889, %v1992
    %v2006 = vadd.f32 %v1894, %v1997
    %v2007 = vadd.f32 %v1899, %v2002
    %vm2008 = vcmask 392192
    %v2009 = vsel %vm2008, %v2005, 0.0
    %v2010 = vsel %vm2008, %v2006, 0.0
    %v2011 = vadd.f32 %v2009, %v2010
    %v2012 = vsel %vm2008, %v2007, 0.0
    %v2013 = vadd.f32 %v2011, %v2012
    %v2014 = vrot.slane %v2013, 4
    %v2015 = vadd.f32 %v2013, %v2014
    %v2016 = vrot.slane %v2015, 2
    %v2017 = vadd.f32 %v2015, %v2016
    %v2018 = vrot.slane %v2017, 1
    %v2019 = vadd.f32 %v2017, %v2018
    %v2020 = vmul.f32 %v2005, %v2005
    %v2021 = vmul.f32 %v2006, %v2006
    %v2022 = vmul.f32 %v2007, %v2007
    %v2023 = vsel %vm2008, %v2020, 0.0
    %v2024 = vsel %vm2008, %v2021, 0.0
    %v2025 = vadd.f32 %v2023, %v2024
    %v2026 = vsel %vm2008, %v2022, 0.0
    %v2027 = vadd.f32 %v2025, %v2026
    %v2028 = vrot.slane %v2027, 4
    %v2029 = vadd.f32 %v2027, %v2028
    %v2030 = vrot.slane %v2029, 2
    %v2031 = vadd.f32 %v2029, %v2030
    %v2032 = vrot.slane %v2031, 1
    %v2033 = vadd.f32 %v2031, %v2032
    %v2034 = vsel %vm627, %v2019, %v2033
    %v2035 = vld [vmem:[%s3 + $0x198] sm:$0xff]
    %v2036 = vld [vmem:[%s3 + $0x1a0] sm:$0xff]
    %v2037 = vld [vmem:[%s3 + $0x1a8] sm:$0xff]
    %v2038 = vld [vmem:[%s3 + $0x1b0] sm:$0xff]
    %v2039 = vld [vmem:[%s3 + $0x1b8] sm:$0xff]
    %v2040 = vld [vmem:[%s3 + $0x1c0] sm:$0xff]
    %v2042 = vsel %vm2008, %v2034, 0
    %2044 = vmatprep.subr.mxu0 0.0
    %2045 = vmatpush1.msra.mxu0 %v2035
    %2046 = vmatprep.subr.mxu0 0.0
    %2047 = vmatpush1.msra.mxu0 %v2036
    %2048 = vmatprep.subr.mxu0 0.0
    %2049 = vmatpush1.msra.mxu0 %v2037
    %2050 = vmatprep.subr.mxu0 0.0
    %2051 = vmatpush1.msra.mxu0 %v2038
    %2052 = vmatprep.subr.mxu0 0.0
    %2053 = vmatpush1.msra.mxu0 %v2039
    %2054 = vmatprep.subr.mxu0 0.0
    %2055 = vmatpush1.msra.mxu0 %v2040
    %2056 = vmatprep.subr.mxu0 0.0
    %2057 = vmatpush1.msra.mxu0 0.0
    %2058 = vmatprep.subr.mxu0 0.0
    %2059 = vmatpush1.msra.mxu0 0.0
    %2060 = vmatprep.subr.mxu0 0.0
    %2061 = vmatpush1.msra.mxu0 0.0
    %2062 = vmatprep.subr.mxu0 0.0
    %2063 = vmatpush1.msra.mxu0 0.0
    %2064 = vmatprep.subr.mxu0 0.0
    %2065 = vmatpush1.msra.mxu0 0.0
    %2066 = vmatprep.subr.mxu0 0.0
    %2067 = vmatpush1.msra.mxu0 0.0
    %2068 = vmatprep.subr.mxu0 0.0
    %2069 = vmatpush1.msra.mxu0 0.0
    %2070 = vmatprep.subr.mxu0 0.0
    %2071 = vmatpush1.msra.mxu0 0.0
    %2072 = vmatprep.subr.mxu0 0.0
    %2073 = vmatpush1.msra.mxu0 0.0
    %2074 = vmatprep.subr.mxu0 0.0
    %2075 = vmatpush1.msra.mxu0 0.0
    %2076 = vmatprep.subr.mxu0 0.0
    %2077 = vmatpush1.msra.mxu0 0.0
    %2078 = vmatprep.subr.mxu0 0.0
    %2079 = vmatpush1.msra.mxu0 0.0
    %2080 = vmatprep.subr.mxu0 0.0
    %2081 = vmatpush1.msra.mxu0 0.0
    %2082 = vmatprep.subr.mxu0 0.0
    %2083 = vmatpush1.msra.mxu0 0.0
    %2084 = vmatprep.subr.mxu0 0.0
    %2085 = vmatpush1.msra.mxu0 0.0
    %2086 = vmatprep.subr.mxu0 0.0
    %2087 = vmatpush1.msra.mxu0 0.0
    %2088 = vmatprep.subr.mxu0 0.0
    %2089 = vmatpush1.msra.mxu0 0.0
    %2090 = vmatprep.subr.mxu0 0.0
    %2091 = vmatpush1.msra.mxu0 0.0
    %2092 = vmatprep.subr.mxu0 0.0
    %2093 = vmatpush1.msra.mxu0 0.0
    %2094 = vmatprep.subr.mxu0 0.0
    %2095 = vmatpush1.msra.mxu0 0.0
    %2096 = vmatprep.subr.mxu0 0.0
    %2097 = vmatpush1.msra.mxu0 0.0
    %2098 = vmatprep.subr.mxu0 0.0
    %2099 = vmatpush1.msra.mxu0 0.0
    %2100 = vmatprep.subr.mxu0 0.0
    %2101 = vmatpush1.msra.mxu0 0.0
    %2102 = vmatprep.subr.mxu0 0.0
    %2103 = vmatpush1.msra.mxu0 0.0
    %2104 = vmatprep.subr.mxu0 0.0
    %2105 = vmatpush1.msra.mxu0 0.0
    %2106 = vmatprep.subr.mxu0 0.0
    %2107 = vmatpush1.msra.mxu0 0.0
    %2108 = vmatprep.mubr.f32.mxu0 0.0
    %2109 = vmatmul.mubr.f32.gmra.mrb[0].mxu0 %v2042
    %v2110 = vpop.f32.mrb[0].mxu0
    %v2111 = vadd.f32 0.0, %v2110
    %v2112 = vpop.f32.mrb[0].mxu0
    %2113 = vdwg.mxu0
    %v2114 = vmul.f32 %v2111, 0.055555556
    %v2115 = vmul.f32 %v2114, %v2114
    %v2117 = vrot.slane %v2115, 7
    %v2119 = vsub.f32 %v2114, %v2117
    %v2120 = vmax.f32 %v2119, 0.0
    %v2121 = vld [vmem:[%s3 + $0x1d8] sm:$0x3]
    %v2122 = vadd.f32 %v2120, 1e-05
    %v2123 = vrsqrt.pop %v2122
    %v2125 = vrot.slane %v2123, 1
    %v2127 = vmul.f32 %v2121, %v2125
    %v2128 = vmul.f32 %v2114, %v2127
    %v2130 = vrot.slane %v2128, 7
    %v2132 = vsub.f32 %v2121, %v2130
    %v2133 = vsel %vm627, %v2127, %v2132
    %v2134 = vld [vmem:[%s3 + $0x1c8] sm:$0xff]
    %v2135 = vld [vmem:[%s3 + $0x1d0] sm:$0xff]
    %v2137 = vsel %vm757, %v2133, 0
    %2139 = vmatprep.subr.mxu0 0.0
    %2140 = vmatpush1.msra.mxu0 %v2134
    %2141 = vmatprep.subr.mxu0 0.0
    %2142 = vmatpush1.msra.mxu0 %v2135
    %2143 = vmatprep.subr.mxu0 0.0
    %2144 = vmatpush1.msra.mxu0 0.0
    %2145 = vmatprep.subr.mxu0 0.0
    %2146 = vmatpush1.msra.mxu0 0.0
    %2147 = vmatprep.subr.mxu0 0.0
    %2148 = vmatpush1.msra.mxu0 0.0
    %2149 = vmatprep.subr.mxu0 0.0
    %2150 = vmatpush1.msra.mxu0 0.0
    %2151 = vmatprep.subr.mxu0 0.0
    %2152 = vmatpush1.msra.mxu0 0.0
    %2153 = vmatprep.subr.mxu0 0.0
    %2154 = vmatpush1.msra.mxu0 0.0
    %2155 = vmatprep.subr.mxu0 0.0
    %2156 = vmatpush1.msra.mxu0 0.0
    %2157 = vmatprep.subr.mxu0 0.0
    %2158 = vmatpush1.msra.mxu0 0.0
    %2159 = vmatprep.subr.mxu0 0.0
    %2160 = vmatpush1.msra.mxu0 0.0
    %2161 = vmatprep.subr.mxu0 0.0
    %2162 = vmatpush1.msra.mxu0 0.0
    %2163 = vmatprep.subr.mxu0 0.0
    %2164 = vmatpush1.msra.mxu0 0.0
    %2165 = vmatprep.subr.mxu0 0.0
    %2166 = vmatpush1.msra.mxu0 0.0
    %2167 = vmatprep.subr.mxu0 0.0
    %2168 = vmatpush1.msra.mxu0 0.0
    %2169 = vmatprep.subr.mxu0 0.0
    %2170 = vmatpush1.msra.mxu0 0.0
    %2171 = vmatprep.subr.mxu0 0.0
    %2172 = vmatpush1.msra.mxu0 0.0
    %2173 = vmatprep.subr.mxu0 0.0
    %2174 = vmatpush1.msra.mxu0 0.0
    %2175 = vmatprep.subr.mxu0 0.0
    %2176 = vmatpush1.msra.mxu0 0.0
    %2177 = vmatprep.subr.mxu0 0.0
    %2178 = vmatpush1.msra.mxu0 0.0
    %2179 = vmatprep.subr.mxu0 0.0
    %2180 = vmatpush1.msra.mxu0 0.0
    %2181 = vmatprep.subr.mxu0 0.0
    %2182 = vmatpush1.msra.mxu0 0.0
    %2183 = vmatprep.subr.mxu0 0.0
    %2184 = vmatpush1.msra.mxu0 0.0
    %2185 = vmatprep.subr.mxu0 0.0
    %2186 = vmatpush1.msra.mxu0 0.0
    %2187 = vmatprep.subr.mxu0 0.0
    %2188 = vmatpush1.msra.mxu0 0.0
    %2189 = vmatprep.subr.mxu0 0.0
    %2190 = vmatpush1.msra.mxu0 0.0
    %2191 = vmatprep.subr.mxu0 0.0
    %2192 = vmatpush1.msra.mxu0 0.0
    %2193 = vmatprep.subr.mxu0 0.0
    %2194 = vmatpush1.msra.mxu0 0.0
    %2195 = vmatprep.subr.mxu0 0.0
    %2196 = vmatpush1.msra.mxu0 0.0
    %2197 = vmatprep.subr.mxu0 0.0
    %2198 = vmatpush1.msra.mxu0 0.0
    %2199 = vmatprep.subr.mxu0 0.0
    %2200 = vmatpush1.msra.mxu0 0.0
    %2201 = vmatprep.subr.mxu0 0.0
    %2202 = vmatpush1.msra.mxu0 0.0
    %2203 = vmatprep.mubr.f32.mxu0 0.0
    %2204 = vmatmul.mubr.f32.gmra.mrb[0].mxu0 %v2137
    %v2205 = vpop.f32.mrb[0].mxu0
    %v2206 = vadd.f32 0.0, %v2205
    %v2207 = vpop.f32.mrb[0].mxu0
    %2208 = vdwg.mxu0
    %v2209 = vlaneseq
    %v2210 = vshrl.u32 %v2209, 7
    %v2211 = vsub.s32 0, %v2210
    %v2212 = vrot.slane %v2206, %v2211
    %v2213 = vmul.f32 %v2005, %v2212
    %v2214 = vmul.f32 %v2006, %v2212
    %v2215 = vmul.f32 %v2007, %v2212
    %v2216 = vlaneseq
    %v2217 = vshrl.u32 %v2216, 7
    %v2218 = vsub.s32 1, %v2217
    %v2219 = vrot.slane %v2206, %v2218
    %v2220 = vadd.f32 %v2213, %v2219
    %v2221 = vadd.f32 %v2214, %v2219
    %v2222 = vadd.f32 %v2215, %v2219
    %v2223 = vmax.f32 %v2220, 0.0
    %v2224 = vmax.f32 %v2221, 0.0
    %v2225 = vmax.f32 %v2222, 0.0
    %v2226 = vld [vmem:[%s4] sm:$0xff]
    %v2227 = vld [vmem:[%s4 + $0x8] sm:$0xff]
    %v2228 = vld [vmem:[%s4 + $0x10] sm:$0xff]
    %v2229 = vld [vmem:[%s4 + $0x18] sm:$0xff]
    %v2230 = vld [vmem:[%s4 + $0x20] sm:$0xff]
    %v2231 = vld [vmem:[%s4 + $0x28] sm:$0xff]
    %v2232 = vld [vmem:[%s4 + $0x30] sm:$0xff]
    %v2233 = vld [vmem:[%s4 + $0x38] sm:$0xff]
    %v2234 = vld [vmem:[%s4 + $0x40] sm:$0xff]
    %v2235 = vld [vmem:[%s4 + $0x48] sm:$0xff]
    %v2236 = vld [vmem:[%s4 + $0x50] sm:$0xff]
    %v2237 = vld [vmem:[%s4 + $0x58] sm:$0xff]
    %v2238 = vld [vmem:[%s4 + $0x60] sm:$0xff]
    %v2239 = vld [vmem:[%s4 + $0x68] sm:$0xff]
    %v2240 = vld [vmem:[%s4 + $0x70] sm:$0xff]
    %v2241 = vld [vmem:[%s4 + $0x78] sm:$0xff]
    %v2242 = vld [vmem:[%s4 + $0x80] sm:$0xff]
    %v2243 = vld [vmem:[%s4 + $0x88] sm:$0xff]
    %v2244 = vld [vmem:[%s4 + $0x90] sm:$0xff]
    %v2245 = vld [vmem:[%s4 + $0x98] sm:$0xff]
    %v2246 = vld [vmem:[%s4 + $0xa0] sm:$0xff]
    %v2247 = vld [vmem:[%s4 + $0xa8] sm:$0xff]
    %v2248 = vld [vmem:[%s4 + $0xb0] sm:$0xff]
    %v2249 = vld [vmem:[%s4 + $0xb8] sm:$0xff]
    %v2251 = vsel %vm2008, %v2224, 0
    %2253 = vmatprep.subr.mxu0 %v2239
    %2254 = vmatpush1.msra.mxu0 %v2238
    %2255 = vmatprep.subr.mxu0 %v2241
    %2256 = vmatpush1.msra.mxu0 %v2240
    %2257 = vmatprep.subr.mxu0 %v2243
    %2258 = vmatpush1.msra.mxu0 %v2242
    %2259 = vmatprep.subr.mxu0 %v2245
    %2260 = vmatpush1.msra.mxu0 %v2244
    %2261 = vmatprep.subr.mxu0 %v2247
    %2262 = vmatpush1.msra.mxu0 %v2246
    %2263 = vmatprep.subr.mxu0 %v2249
    %2264 = vmatpush1.msra.mxu0 %v2248
    %2265 = vmatprep.subr.mxu0 0.0
    %2266 = vmatpush1.msra.mxu0 0.0
    %2267 = vmatprep.subr.mxu0 0.0
    %2268 = vmatpush1.msra.mxu0 0.0
    %2269 = vmatprep.subr.mxu0 0.0
    %2270 = vmatpush1.msra.mxu0 0.0
    %2271 = vmatprep.subr.mxu0 0.0
    %2272 = vmatpush1.msra.mxu0 0.0
    %2273 = vmatprep.subr.mxu0 0.0
    %2274 = vmatpush1.msra.mxu0 0.0
    %2275 = vmatprep.subr.mxu0 0.0
    %2276 = vmatpush1.msra.mxu0 0.0
    %2277 = vmatprep.subr.mxu0 0.0
    %2278 = vmatpush1.msra.mxu0 0.0
    %2279 = vmatprep.subr.mxu0 0.0
    %2280 = vmatpush1.msra.mxu0 0.0
    %2281 = vmatprep.subr.mxu0 0.0
    %2282 = vmatpush1.msra.mxu0 0.0
    %2283 = vmatprep.subr.mxu0 0.0
    %2284 = vmatpush1.msra.mxu0 0.0
    %2285 = vmatprep.subr.mxu0 0.0
    %2286 = vmatpush1.msra.mxu0 0.0
    %2287 = vmatprep.subr.mxu0 0.0
    %2288 = vmatpush1.msra.mxu0 0.0
    %2289 = vmatprep.subr.mxu0 0.0
    %2290 = vmatpush1.msra.mxu0 0.0
    %2291 = vmatprep.subr.mxu0 0.0
    %2292 = vmatpush1.msra.mxu0 0.0
    %2293 = vmatprep.subr.mxu0 0.0
    %2294 = vmatpush1.msra.mxu0 0.0
    %2295 = vmatprep.subr.mxu0 0.0
    %2296 = vmatpush1.msra.mxu0 0.0
    %2297 = vmatprep.subr.mxu0 0.0
    %2298 = vmatpush1.msra.mxu0 0.0
    %2299 = vmatprep.subr.mxu0 0.0
    %2300 = vmatpush1.msra.mxu0 0.0
    %2301 = vmatprep.subr.mxu0 0.0
    %2302 = vmatpush1.msra.mxu0 0.0
    %2303 = vmatprep.subr.mxu0 0.0
    %2304 = vmatpush1.msra.mxu0 0.0
    %2305 = vmatprep.subr.mxu0 0.0
    %2306 = vmatpush1.msra.mxu0 0.0
    %2307 = vmatprep.subr.mxu0 0.0
    %2308 = vmatpush1.msra.mxu0 0.0
    %2309 = vmatprep.subr.mxu0 0.0
    %2310 = vmatpush1.msra.mxu0 0.0
    %2311 = vmatprep.subr.mxu0 0.0
    %2312 = vmatpush1.msra.mxu0 0.0
    %2313 = vmatprep.subr.mxu0 0.0
    %2314 = vmatpush1.msra.mxu0 0.0
    %2315 = vmatprep.subr.mxu0 0.0
    %2316 = vmatpush1.msra.mxu0 0.0
    %2317 = vmatprep.mubr.f32.mxu0 0.0
    %2318 = vmatmul.mubr.f32.gmra.mrb[0].mxu0 %v2251
    %v2319 = vpop.f32.mrb[0].mxu0
    %v2320 = vadd.f32 0.0, %v2319
    %v2321 = vpop.f32.mrb[0].mxu0
    %v2322 = vadd.f32 0.0, %v2321
    %2323 = vdwg.mxu0
    %v2325 = vsel %vm2008, %v2223, 0
    %2327 = vmatprep.subr.mxu0 %v2227
    %2328 = vmatpush1.msra.mxu0 %v2226
    %2329 = vmatprep.subr.mxu0 %v2229
    %2330 = vmatpush1.msra.mxu0 %v2228
    %2331 = vmatprep.subr.mxu0 %v2231
    %2332 = vmatpush1.msra.mxu0 %v2230
    %2333 = vmatprep.subr.mxu0 %v2233
    %2334 = vmatpush1.msra.mxu0 %v2232
    %2335 = vmatprep.subr.mxu0 %v2235
    %2336 = vmatpush1.msra.mxu0 %v2234
    %2337 = vmatprep.subr.mxu0 %v2237
    %2338 = vmatpush1.msra.mxu0 %v2236
    %2339 = vmatprep.subr.mxu0 0.0
    %2340 = vmatpush1.msra.mxu0 0.0
    %2341 = vmatprep.subr.mxu0 0.0
    %2342 = vmatpush1.msra.mxu0 0.0
    %2343 = vmatprep.subr.mxu0 0.0
    %2344 = vmatpush1.msra.mxu0 0.0
    %2345 = vmatprep.subr.mxu0 0.0
    %2346 = vmatpush1.msra.mxu0 0.0
    %2347 = vmatprep.subr.mxu0 0.0
    %2348 = vmatpush1.msra.mxu0 0.0
    %2349 = vmatprep.subr.mxu0 0.0
    %2350 = vmatpush1.msra.mxu0 0.0
    %2351 = vmatprep.subr.mxu0 0.0
    %2352 = vmatpush1.msra.mxu0 0.0
    %2353 = vmatprep.subr.mxu0 0.0
    %2354 = vmatpush1.msra.mxu0 0.0
    %2355 = vmatprep.subr.mxu0 0.0
    %2356 = vmatpush1.msra.mxu0 0.0
    %2357 = vmatprep.subr.mxu0 0.0
    %2358 = vmatpush1.msra.mxu0 0.0
    %2359 = vmatprep.subr.mxu0 0.0
    %2360 = vmatpush1.msra.mxu0 0.0
    %2361 = vmatprep.subr.mxu0 0.0
    %2362 = vmatpush1.msra.mxu0 0.0
    %2363 = vmatprep.subr.mxu0 0.0
    %2364 = vmatpush1.msra.mxu0 0.0
    %2365 = vmatprep.subr.mxu0 0.0
    %2366 = vmatpush1.msra.mxu0 0.0
    %2367 = vmatprep.subr.mxu0 0.0
    %2368 = vmatpush1.msra.mxu0 0.0
    %2369 = vmatprep.subr.mxu0 0.0
    %2370 = vmatpush1.msra.mxu0 0.0
    %2371 = vmatprep.subr.mxu0 0.0
    %2372 = vmatpush1.msra.mxu0 0.0
    %2373 = vmatprep.subr.mxu0 0.0
    %2374 = vmatpush1.msra.mxu0 0.0
    %2375 = vmatprep.subr.mxu0 0.0
    %2376 = vmatpush1.msra.mxu0 0.0
    %2377 = vmatprep.subr.mxu0 0.0
    %2378 = vmatpush1.msra.mxu0 0.0
    %2379 = vmatprep.subr.mxu0 0.0
    %2380 = vmatpush1.msra.mxu0 0.0
    %2381 = vmatprep.subr.mxu0 0.0
    %2382 = vmatpush1.msra.mxu0 0.0
    %2383 = vmatprep.subr.mxu0 0.0
    %2384 = vmatpush1.msra.mxu0 0.0
    %2385 = vmatprep.subr.mxu0 0.0
    %2386 = vmatpush1.msra.mxu0 0.0
    %2387 = vmatprep.subr.mxu0 0.0
    %2388 = vmatpush1.msra.mxu0 0.0
    %2389 = vmatprep.subr.mxu0 0.0
    %2390 = vmatpush1.msra.mxu0 0.0
    %2391 = vmatprep.mubr.f32.mxu0 0.0
    %2392 = vmatmul.mubr.f32.gmra.mrb[0].mxu0 %v2325
    %v2393 = vpop.f32.mrb[0].mxu0
    %v2394 = vadd.f32 %v2320, %v2393
    %v2395 = vpop.f32.mrb[0].mxu0
    %v2396 = vadd.f32 %v2322, %v2395
    %2397 = vdwg.mxu0
    %v2398 = vld [vmem:[%s4 + $0xc0] sm:$0xff]
    %v2399 = vld [vmem:[%s4 + $0xc8] sm:$0xff]
    %v2400 = vld [vmem:[%s4 + $0xd0] sm:$0xff]
    %v2401 = vld [vmem:[%s4 + $0xd8] sm:$0xff]
    %v2402 = vld [vmem:[%s4 + $0xe0] sm:$0xff]
    %v2403 = vld [vmem:[%s4 + $0xe8] sm:$0xff]
    %v2404 = vld [vmem:[%s4 + $0xf0] sm:$0xff]
    %v2405 = vld [vmem:[%s4 + $0xf8] sm:$0xff]
    %v2406 = vld [vmem:[%s4 + $0x100] sm:$0xff]
    %v2407 = vld [vmem:[%s4 + $0x108] sm:$0xff]
    %v2408 = vld [vmem:[%s4 + $0x110] sm:$0xff]
    %v2409 = vld [vmem:[%s4 + $0x118] sm:$0xff]
    %v2411 = vsel %vm2008, %v2225, 0
    %2413 = vmatprep.subr.mxu0 %v2399
    %2414 = vmatpush1.msra.mxu0 %v2398
    %2415 = vmatprep.subr.mxu0 %v2401
    %2416 = vmatpush1.msra.mxu0 %v2400
    %2417 = vmatprep.subr.mxu0 %v2403
    %2418 = vmatpush1.msra.mxu0 %v2402
    %2419 = vmatprep.subr.mxu0 %v2405
    %2420 = vmatpush1.msra.mxu0 %v2404
    %2421 = vmatprep.subr.mxu0 %v2407
    %2422 = vmatpush1.msra.mxu0 %v2406
    %2423 = vmatprep.subr.mxu0 %v2409
    %2424 = vmatpush1.msra.mxu0 %v2408
    %2425 = vmatprep.subr.mxu0 0.0
    %2426 = vmatpush1.msra.mxu0 0.0
    %2427 = vmatprep.subr.mxu0 0.0
    %2428 = vmatpush1.msra.mxu0 0.0
    %2429 = vmatprep.subr.mxu0 0.0
    %2430 = vmatpush1.msra.mxu0 0.0
    %2431 = vmatprep.subr.mxu0 0.0
    %2432 = vmatpush1.msra.mxu0 0.0
    %2433 = vmatprep.subr.mxu0 0.0
    %2434 = vmatpush1.msra.mxu0 0.0
    %2435 = vmatprep.subr.mxu0 0.0
    %2436 = vmatpush1.msra.mxu0 0.0
    %2437 = vmatprep.subr.mxu0 0.0
    %2438 = vmatpush1.msra.mxu0 0.0
    %2439 = vmatprep.subr.mxu0 0.0
    %2440 = vmatpush1.msra.mxu0 0.0
    %2441 = vmatprep.subr.mxu0 0.0
    %2442 = vmatpush1.msra.mxu0 0.0
    %2443 = vmatprep.subr.mxu0 0.0
    %2444 = vmatpush1.msra.mxu0 0.0
    %2445 = vmatprep.subr.mxu0 0.0
    %2446 = vmatpush1.msra.mxu0 0.0
    %2447 = vmatprep.subr.mxu0 0.0
    %2448 = vmatpush1.msra.mxu0 0.0
    %2449 = vmatprep.subr.mxu0 0.0
    %2450 = vmatpush1.msra.mxu0 0.0
    %2451 = vmatprep.subr.mxu0 0.0
    %2452 = vmatpush1.msra.mxu0 0.0
    %2453 = vmatprep.subr.mxu0 0.0
    %2454 = vmatpush1.msra.mxu0 0.0
    %2455 = vmatprep.subr.mxu0 0.0
    %2456 = vmatpush1.msra.mxu0 0.0
    %2457 = vmatprep.subr.mxu0 0.0
    %2458 = vmatpush1.msra.mxu0 0.0
    %2459 = vmatprep.subr.mxu0 0.0
    %2460 = vmatpush1.msra.mxu0 0.0
    %2461 = vmatprep.subr.mxu0 0.0
    %2462 = vmatpush1.msra.mxu0 0.0
    %2463 = vmatprep.subr.mxu0 0.0
    %2464 = vmatpush1.msra.mxu0 0.0
    %2465 = vmatprep.subr.mxu0 0.0
    %2466 = vmatpush1.msra.mxu0 0.0
    %2467 = vmatprep.subr.mxu0 0.0
    %2468 = vmatpush1.msra.mxu0 0.0
    %2469 = vmatprep.subr.mxu0 0.0
    %2470 = vmatpush1.msra.mxu0 0.0
    %2471 = vmatprep.subr.mxu0 0.0
    %2472 = vmatpush1.msra.mxu0 0.0
    %2473 = vmatprep.subr.mxu0 0.0
    %2474 = vmatpush1.msra.mxu0 0.0
    %2475 = vmatprep.subr.mxu0 0.0
    %2476 = vmatpush1.msra.mxu0 0.0
    %2477 = vmatprep.mubr.f32.mxu0 0.0
    %2478 = vmatmul.mubr.f32.gmra.mrb[0].mxu0 %v2411
    %v2479 = vpop.f32.mrb[0].mxu0
    %v2480 = vadd.f32 0.0, %v2479
    %v2481 = vpop.f32.mrb[0].mxu0
    %v2482 = vadd.f32 0.0, %v2481
    %2483 = vdwg.mxu0
    %v2484 = vadd.f32 %v2394, %v2480
    %v2485 = vadd.f32 %v2396, %v2482
    %s2486 = scalar_lea.vmem %s4, 288
    %v2487 = vld [vmem:[%s2486] ss:$8 sm:$0x3]
    %v2489 = vlaneseq
    %v2490 = vshrl.u32 %v2489, 7
    %v2491 = vsub.s32 0, %v2490
    %v2492 = vrot.slane %v2487, %v2491
    %v2493 = vlaneseq
    %v2494 = vshrl.u32 %v2493, 7
    %v2495 = vsub.s32 1, %v2494
    %v2496 = vrot.slane %v2487, %v2495
    %v2499 = vadd.f32 %v2484, %v2492
    %v2500 = vadd.f32 %v2485, %v2496
    %v2501 = vmax.f32 %v2499, 0.0
    %v2502 = vmax.f32 %v2500, 0.0
    %v2503 = vld [vmem:[%s4 + $0x130] sm:$0xff]
    %v2504 = vld [vmem:[%s4 + $0x138] sm:$0xff]
    %v2505 = vld [vmem:[%s4 + $0x140] sm:$0xff]
    %v2506 = vld [vmem:[%s4 + $0x148] sm:$0xff]
    %v2507 = vld [vmem:[%s4 + $0x150] sm:$0xff]
    %v2508 = vld [vmem:[%s4 + $0x158] sm:$0xff]
    %v2509 = vld [vmem:[%s4 + $0x160] sm:$0xff]
    %v2510 = vld [vmem:[%s4 + $0x168] sm:$0xff]
    %v2511 = vld [vmem:[%s4 + $0x170] sm:$0xff]
    %v2512 = vld [vmem:[%s4 + $0x178] sm:$0xff]
    %v2513 = vld [vmem:[%s4 + $0x180] sm:$0xff]
    %v2514 = vld [vmem:[%s4 + $0x188] sm:$0xff]
    %v2515 = vld [vmem:[%s4 + $0x190] sm:$0xff]
    %v2516 = vld [vmem:[%s4 + $0x198] sm:$0xff]
    %v2517 = vld [vmem:[%s4 + $0x1a0] sm:$0xff]
    %v2518 = vld [vmem:[%s4 + $0x1a8] sm:$0xff]
    %v2519 = vld [vmem:[%s4 + $0x1b0] sm:$0xff]
    %v2520 = vld [vmem:[%s4 + $0x1b8] sm:$0xff]
    %v2521 = vld [vmem:[%s4 + $0x1c0] sm:$0xff]
    %v2522 = vld [vmem:[%s4 + $0x1c8] sm:$0xff]
    %v2523 = vld [vmem:[%s4 + $0x1d0] sm:$0xff]
    %v2524 = vld [vmem:[%s4 + $0x1d8] sm:$0xff]
    %v2525 = vld [vmem:[%s4 + $0x1e0] sm:$0xff]
    %v2526 = vld [vmem:[%s4 + $0x1e8] sm:$0xff]
    %v2527 = vld [vmem:[%s4 + $0x1f0] sm:$0xff]
    %v2528 = vld [vmem:[%s4 + $0x1f8] sm:$0xff]
    %v2529 = vld [vmem:[%s4 + $0x200] sm:$0xff]
    %v2530 = vld [vmem:[%s4 + $0x208] sm:$0xff]
    %v2531 = vld [vmem:[%s4 + $0x210] sm:$0xff]
    %v2532 = vld [vmem:[%s4 + $0x218] sm:$0xff]
    %v2533 = vld [vmem:[%s4 + $0x220] sm:$0xff]
    %v2534 = vld [vmem:[%s4 + $0x228] sm:$0xff]
    %v2535 = vld [vmem:[%s4 + $0x230] sm:$0xff]
    %v2536 = vld [vmem:[%s4 + $0x238] sm:$0xff]
    %v2537 = vld [vmem:[%s4 + $0x240] sm:$0xff]
    %v2538 = vld [vmem:[%s4 + $0x248] sm:$0xff]
    %v2539 = vld [vmem:[%s4 + $0x250] sm:$0xff]
    %v2540 = vld [vmem:[%s4 + $0x258] sm:$0xff]
    %v2541 = vld [vmem:[%s4 + $0x260] sm:$0xff]
    %v2542 = vld [vmem:[%s4 + $0x268] sm:$0xff]
    %v2543 = vld [vmem:[%s4 + $0x270] sm:$0xff]
    %v2544 = vld [vmem:[%s4 + $0x278] sm:$0xff]
    %v2545 = vld [vmem:[%s4 + $0x280] sm:$0xff]
    %v2546 = vld [vmem:[%s4 + $0x288] sm:$0xff]
    %v2547 = vld [vmem:[%s4 + $0x290] sm:$0xff]
    %v2548 = vld [vmem:[%s4 + $0x298] sm:$0xff]
    %v2549 = vld [vmem:[%s4 + $0x2a0] sm:$0xff]
    %v2550 = vld [vmem:[%s4 + $0x2a8] sm:$0xff]
    %v2551 = vld [vmem:[%s4 + $0x2b0] sm:$0xff]
    %v2552 = vld [vmem:[%s4 + $0x2b8] sm:$0xff]
    %v2553 = vld [vmem:[%s4 + $0x2c0] sm:$0xff]
    %v2554 = vld [vmem:[%s4 + $0x2c8] sm:$0xff]
    %v2555 = vld [vmem:[%s4 + $0x2d0] sm:$0xff]
    %v2556 = vld [vmem:[%s4 + $0x2d8] sm:$0xff]
    %v2557 = vld [vmem:[%s4 + $0x2e0] sm:$0xff]
    %v2558 = vld [vmem:[%s4 + $0x2e8] sm:$0xff]
    %v2559 = vld [vmem:[%s4 + $0x2f0] sm:$0xff]
    %v2560 = vld [vmem:[%s4 + $0x2f8] sm:$0xff]
    %v2561 = vld [vmem:[%s4 + $0x300] sm:$0xff]
    %v2562 = vld [vmem:[%s4 + $0x308] sm:$0xff]
    %v2563 = vld [vmem:[%s4 + $0x310] sm:$0xff]
    %v2564 = vld [vmem:[%s4 + $0x318] sm:$0xff]
    %v2565 = vld [vmem:[%s4 + $0x320] sm:$0xff]
    %v2566 = vld [vmem:[%s4 + $0x328] sm:$0xff]
    %s2567 = scalar_lea.vmem %s4, 816
    %v2568 = vld [vmem:[%s2567] ss:$8 sm:$0x3]
    %v2570 = vlaneseq
    %v2571 = vshrl.u32 %v2570, 7
    %v2572 = vsub.s32 0, %v2571
    %v2573 = vrot.slane %v2568, %v2572
    %v2574 = vlaneseq
    %v2575 = vshrl.u32 %v2574, 7
    %v2576 = vsub.s32 1, %v2575
    %v2577 = vrot.slane %v2568, %v2576
    %2580 = vmatprep.subr.mxu0 %v2504
    %2581 = vmatpush1.msra.mxu0 %v2503
    %2582 = vmatprep.subr.mxu0 %v2506
    %2583 = vmatpush1.msra.mxu0 %v2505
    %2584 = vmatprep.subr.mxu0 %v2508
    %2585 = vmatpush1.msra.mxu0 %v2507
    %2586 = vmatprep.subr.mxu0 %v2510
    %2587 = vmatpush1.msra.mxu0 %v2509
    %2588 = vmatprep.subr.mxu0 %v2512
    %2589 = vmatpush1.msra.mxu0 %v2511
    %2590 = vmatprep.subr.mxu0 %v2514
    %2591 = vmatpush1.msra.mxu0 %v2513
    %2592 = vmatprep.subr.mxu0 %v2516
    %2593 = vmatpush1.msra.mxu0 %v2515
    %2594 = vmatprep.subr.mxu0 %v2518
    %2595 = vmatpush1.msra.mxu0 %v2517
    %2596 = vmatprep.subr.mxu0 %v2520
    %2597 = vmatpush1.msra.mxu0 %v2519
    %2598 = vmatprep.subr.mxu0 %v2522
    %2599 = vmatpush1.msra.mxu0 %v2521
    %2600 = vmatprep.subr.mxu0 %v2524
    %2601 = vmatpush1.msra.mxu0 %v2523
    %2602 = vmatprep.subr.mxu0 %v2526
    %2603 = vmatpush1.msra.mxu0 %v2525
    %2604 = vmatprep.subr.mxu0 %v2528
    %2605 = vmatpush1.msra.mxu0 %v2527
    %2606 = vmatprep.subr.mxu0 %v2530
    %2607 = vmatpush1.msra.mxu0 %v2529
    %2608 = vmatprep.subr.mxu0 %v2532
    %2609 = vmatpush1.msra.mxu0 %v2531
    %2610 = vmatprep.subr.mxu0 %v2534
    %2611 = vmatpush1.msra.mxu0 %v2533
    %2612 = vmatprep.subr.mxu0 %v2536
    %2613 = vmatpush1.msra.mxu0 %v2535
    %2614 = vmatprep.subr.mxu0 %v2538
    %2615 = vmatpush1.msra.mxu0 %v2537
    %2616 = vmatprep.subr.mxu0 %v2540
    %2617 = vmatpush1.msra.mxu0 %v2539
    %2618 = vmatprep.subr.mxu0 %v2542
    %2619 = vmatpush1.msra.mxu0 %v2541
    %2620 = vmatprep.subr.mxu0 %v2544
    %2621 = vmatpush1.msra.mxu0 %v2543
    %2622 = vmatprep.subr.mxu0 %v2546
    %2623 = vmatpush1.msra.mxu0 %v2545
    %2624 = vmatprep.subr.mxu0 %v2548
    %2625 = vmatpush1.msra.mxu0 %v2547
    %2626 = vmatprep.subr.mxu0 %v2550
    %2627 = vmatpush1.msra.mxu0 %v2549
    %2628 = vmatprep.subr.mxu0 %v2552
    %2629 = vmatpush1.msra.mxu0 %v2551
    %2630 = vmatprep.subr.mxu0 %v2554
    %2631 = vmatpush1.msra.mxu0 %v2553
    %2632 = vmatprep.subr.mxu0 %v2556
    %2633 = vmatpush1.msra.mxu0 %v2555
    %2634 = vmatprep.subr.mxu0 %v2558
    %2635 = vmatpush1.msra.mxu0 %v2557
    %2636 = vmatprep.subr.mxu0 %v2560
    %2637 = vmatpush1.msra.mxu0 %v2559
    %2638 = vmatprep.subr.mxu0 %v2562
    %2639 = vmatpush1.msra.mxu0 %v2561
    %2640 = vmatprep.subr.mxu0 %v2564
    %2641 = vmatpush1.msra.mxu0 %v2563
    %2642 = vmatprep.subr.mxu0 %v2566
    %2643 = vmatpush1.msra.mxu0 %v2565
    %2644 = vmatprep.mubr.f32.mxu0 %v2502
    %2645 = vmatmul.mubr.f32.gmra.mrb[0].mxu0 %v2501
    %v2646 = vpop.f32.mrb[0].mxu0
    %v2647 = vadd.f32 %v2573, %v2646
    %v2648 = vpop.f32.mrb[0].mxu0
    %v2649 = vadd.f32 %v2577, %v2648
    %2650 = vdwg.mxu0
    %v2651 = vmax.f32 %v2647, 0.0
    %v2652 = vmax.f32 %v2649, 0.0
    %v2653 = vld [vmem:[%s4 + $0x340] sm:$0xff]
    %v2654 = vld [vmem:[%s4 + $0x350] sm:$0xff]
    %v2655 = vld [vmem:[%s4 + $0x360] sm:$0xff]
    %v2656 = vld [vmem:[%s4 + $0x370] sm:$0xff]
    %v2657 = vld [vmem:[%s4 + $0x380] sm:$0xff]
    %v2658 = vld [vmem:[%s4 + $0x390] sm:$0xff]
    %v2659 = vld [vmem:[%s4 + $0x3a0] sm:$0xff]
    %v2660 = vld [vmem:[%s4 + $0x3b0] sm:$0xff]
    %v2661 = vld [vmem:[%s4 + $0x3c0] sm:$0xff]
    %v2662 = vld [vmem:[%s4 + $0x3d0] sm:$0xff]
    %v2663 = vld [vmem:[%s4 + $0x3e0] sm:$0xff]
    %v2664 = vld [vmem:[%s4 + $0x3f0] sm:$0xff]
    %v2665 = vld [vmem:[%s4 + $0x400] sm:$0xff]
    %v2666 = vld [vmem:[%s4 + $0x410] sm:$0xff]
    %v2667 = vld [vmem:[%s4 + $0x420] sm:$0xff]
    %v2668 = vld [vmem:[%s4 + $0x430] sm:$0xff]
    %v2669 = vld [vmem:[%s4 + $0x440] sm:$0xff]
    %v2670 = vld [vmem:[%s4 + $0x450] sm:$0xff]
    %v2671 = vld [vmem:[%s4 + $0x460] sm:$0xff]
    %v2672 = vld [vmem:[%s4 + $0x470] sm:$0xff]
    %v2673 = vld [vmem:[%s4 + $0x480] sm:$0xff]
    %v2674 = vld [vmem:[%s4 + $0x490] sm:$0xff]
    %v2675 = vld [vmem:[%s4 + $0x4a0] sm:$0xff]
    %v2676 = vld [vmem:[%s4 + $0x4b0] sm:$0xff]
    %v2677 = vld [vmem:[%s4 + $0x4c0] sm:$0xff]
    %v2678 = vld [vmem:[%s4 + $0x4d0] sm:$0xff]
    %v2679 = vld [vmem:[%s4 + $0x4e0] sm:$0xff]
    %v2680 = vld [vmem:[%s4 + $0x4f0] sm:$0xff]
    %v2681 = vld [vmem:[%s4 + $0x500] sm:$0xff]
    %v2682 = vld [vmem:[%s4 + $0x510] sm:$0xff]
    %v2683 = vld [vmem:[%s4 + $0x520] sm:$0xff]
    %v2684 = vld [vmem:[%s4 + $0x530] sm:$0xff]
    %v2685 = vld [vmem:[%s4 + $0x540] ss:$0 sm:$0xff]
    %2686 = vmatprep.subr.mxu0 0.0
    %2687 = vmatpush1.msra.mxu0 %v2653
    %2688 = vmatprep.subr.mxu0 0.0
    %2689 = vmatpush1.msra.mxu0 %v2654
    %2690 = vmatprep.subr.mxu0 0.0
    %2691 = vmatpush1.msra.mxu0 %v2655
    %2692 = vmatprep.subr.mxu0 0.0
    %2693 = vmatpush1.msra.mxu0 %v2656
    %2694 = vmatprep.subr.mxu0 0.0
    %2695 = vmatpush1.msra.mxu0 %v2657
    %2696 = vmatprep.subr.mxu0 0.0
    %2697 = vmatpush1.msra.mxu0 %v2658
    %2698 = vmatprep.subr.mxu0 0.0
    %2699 = vmatpush1.msra.mxu0 %v2659
    %2700 = vmatprep.subr.mxu0 0.0
    %2701 = vmatpush1.msra.mxu0 %v2660
    %2702 = vmatprep.subr.mxu0 0.0
    %2703 = vmatpush1.msra.mxu0 %v2661
    %2704 = vmatprep.subr.mxu0 0.0
    %2705 = vmatpush1.msra.mxu0 %v2662
    %2706 = vmatprep.subr.mxu0 0.0
    %2707 = vmatpush1.msra.mxu0 %v2663
    %2708 = vmatprep.subr.mxu0 0.0
    %2709 = vmatpush1.msra.mxu0 %v2664
    %2710 = vmatprep.subr.mxu0 0.0
    %2711 = vmatpush1.msra.mxu0 %v2665
    %2712 = vmatprep.subr.mxu0 0.0
    %2713 = vmatpush1.msra.mxu0 %v2666
    %2714 = vmatprep.subr.mxu0 0.0
    %2715 = vmatpush1.msra.mxu0 %v2667
    %2716 = vmatprep.subr.mxu0 0.0
    %2717 = vmatpush1.msra.mxu0 %v2668
    %2718 = vmatprep.subr.mxu0 0.0
    %2719 = vmatpush1.msra.mxu0 %v2669
    %2720 = vmatprep.subr.mxu0 0.0
    %2721 = vmatpush1.msra.mxu0 %v2670
    %2722 = vmatprep.subr.mxu0 0.0
    %2723 = vmatpush1.msra.mxu0 %v2671
    %2724 = vmatprep.subr.mxu0 0.0
    %2725 = vmatpush1.msra.mxu0 %v2672
    %2726 = vmatprep.subr.mxu0 0.0
    %2727 = vmatpush1.msra.mxu0 %v2673
    %2728 = vmatprep.subr.mxu0 0.0
    %2729 = vmatpush1.msra.mxu0 %v2674
    %2730 = vmatprep.subr.mxu0 0.0
    %2731 = vmatpush1.msra.mxu0 %v2675
    %2732 = vmatprep.subr.mxu0 0.0
    %2733 = vmatpush1.msra.mxu0 %v2676
    %2734 = vmatprep.subr.mxu0 0.0
    %2735 = vmatpush1.msra.mxu0 %v2677
    %2736 = vmatprep.subr.mxu0 0.0
    %2737 = vmatpush1.msra.mxu0 %v2678
    %2738 = vmatprep.subr.mxu0 0.0
    %2739 = vmatpush1.msra.mxu0 %v2679
    %2740 = vmatprep.subr.mxu0 0.0
    %2741 = vmatpush1.msra.mxu0 %v2680
    %2742 = vmatprep.subr.mxu0 0.0
    %2743 = vmatpush1.msra.mxu0 %v2681
    %2744 = vmatprep.subr.mxu0 0.0
    %2745 = vmatpush1.msra.mxu0 %v2682
    %2746 = vmatprep.subr.mxu0 0.0
    %2747 = vmatpush1.msra.mxu0 %v2683
    %2748 = vmatprep.subr.mxu0 0.0
    %2749 = vmatpush1.msra.mxu0 %v2684
    %2750 = vmatprep.mubr.f32.mxu0 %v2652
    %2751 = vmatmul.mubr.f32.gmra.mrb[0].mxu0 %v2651
    %v2752 = vpop.f32.mrb[0].mxu0
    %v2753 = vadd.f32 %v2685, %v2752
    %v2754 = vpop.f32.mrb[0].mxu0
    %2755 = vdwg.mxu0
    %v2756 = vtanh.pop %v2753
    %vm2757 = vcmask 25600
    %2758 = vst.msk [vmem:[#allocation2] sm:$0x3] %vm2757, %v2756
    // Predicated region
    $region22: #{actor_cnn_forward.1} parent=1 // pred_check
      _
    $region23: #{actor_cnn_forward.1} parent=1 // pred_check_branch
      %2760 = sbr.rel (0) target = $region25
    $region24: #{actor_cnn_forward.1} parent=1 // pred_region
      %s2762 = ssub.s32 32, 32
      %2763 = vsyncadd [#allocation3], %s2762
      %s2765 = sshll.u32 [#allocation2], 4
      %s2766 = int_to_ptr.vmem [resolvable:$true] %s2765
      %2768 = dma.vmem_to_hbm [thread:$0]  %s2766, 32, %s5, [#allocation3]
    $region25: #{actor_cnn_forward.1} parent=1 // pred_fallthru
      _
    // Predicated region
    $region26: #{actor_cnn_forward.1} parent=1 // pred_check
      _
    $region27: #{actor_cnn_forward.1} parent=1 // pred_check_branch
      %2770 = sbr.rel (0) target = $region29
    $region28: #{actor_cnn_forward.1} parent=1 // pred_region
      %2771 = dma.done [#allocation3], 32
    $region29: #{actor_cnn_forward.1} parent=1 // pred_fallthru
      _
    %2772 = vsyncpa [#allocation3], 1

</llo_original>
